<compile_context>
chip_gen: v6e
topology: v6e:2x2x1
jax: 0.10.0
libtpu: 0.0.40
codegen_flags: <defaults>
</compile_context>

<pallas_src>
import math

import jax
import jax.numpy as jnp
from jax.experimental import pallas as pl
from jax.experimental.pallas import tpu as pltpu  # noqa: F401  (TPU backend)

# ----------------------------- model dims (small, consistent with forward) ---
B = 2            # batch
S = 8            # sequence length
H = 32           # hidden size
NUM_HEADS = 4
HEAD_DIM = H // NUM_HEADS
FFN = 64         # intermediate size
NUM_LAYERS = 2
VOCAB = 64
OUT_DIM = 2      # nn.Linear(hidden_size, 2)
LN_EPS = 1e-12
INIT_RANGE = 0.02
BS = B * S


def _layernorm(x, gamma, beta):
    mu = jnp.mean(x, axis=-1, keepdims=True)
    xc = x - mu
    var = jnp.mean(xc * xc, axis=-1, keepdims=True)
    inv = jax.lax.rsqrt(var + LN_EPS)
    return xc * inv * gamma + beta


def _bf16_dot(a, w, bias=None):
    """MXU matmul with bf16 operands and f32 accumulation."""
    y = jnp.dot(a.astype(jnp.bfloat16), w.astype(jnp.bfloat16),
                preferred_element_type=jnp.float32)
    if bias is not None:
        y = y + bias
    return y


# --------------------------- single fused forward kernel ---------------------
def fused_forward_kernel(x_ref, mask_ref,
                         emb_g_ref, emb_b_ref,
                         wqkv_ref, bqkv_ref, wo_ref, bo_ref,
                         g1_ref, be1_ref, w1_ref, b1_ref, w2_ref, b2_ref,
                         g2_ref, be2_ref,
                         wfc_ref, bfc_ref, o_ref):
    x = x_ref[...].astype(jnp.float32)                 # (B*S, H), flat batch
    mask = mask_ref[...].astype(jnp.float32)           # (B, S)
    bias_add = (1.0 - mask) * -1e9                     # additive key mask

    # Embedding LayerNorm (BERT-style embeddings epilogue).
    x = _layernorm(x, emb_g_ref[...], emb_b_ref[...])

    scale = 1.0 / math.sqrt(HEAD_DIM)

    for layer in range(NUM_LAYERS):                    # static unrolled loop
        wqkv, bqkv = wqkv_ref[layer], bqkv_ref[layer]
        wo, bo = wo_ref[layer], bo_ref[layer]
        g1, be1 = g1_ref[layer], be1_ref[layer]
        w1, b1 = w1_ref[layer], b1_ref[layer]
        w2, b2 = w2_ref[layer], b2_ref[layer]
        g2, be2 = g2_ref[layer], be2_ref[layer]

        # QKV projection for the whole (B*S, H) block at once.
        qkv = _bf16_dot(x, wqkv, bqkv)                 # (B*S, 3H)
        q = qkv[:, 0 * H:1 * H]
        k = qkv[:, 1 * H:2 * H]
        v = qkv[:, 2 * H:3 * H]

        # Multi-head attention; each head's context feeds the output
        # projection directly (no lane-axis concatenate).
        attn_rows = []
        for b in range(B):
            r0, r1 = b * S, (b + 1) * S
            qb, kb, vb = q[r0:r1, :], k[r0:r1, :], v[r0:r1, :]
            bb = bias_add[b:b + 1, :]                  # (1, S) over keys
            acc = jnp.zeros((S, H), jnp.float32)
            for h in range(NUM_HEADS):
                c0, c1 = h * HEAD_DIM, (h + 1) * HEAD_DIM
                qh, kh, vh = qb[:, c0:c1], kb[:, c0:c1], vb[:, c0:c1]
                sc = jnp.dot(qh, kh.T, preferred_element_type=jnp.float32) * scale + bb
                sc = sc - jnp.max(sc, axis=-1, keepdims=True)
                p = jnp.exp(sc)
                p = p * pl.reciprocal(jnp.sum(p, axis=-1, keepdims=True), approx=True)
                ctx = jnp.dot(p, vh, preferred_element_type=jnp.float32)
                acc = acc + _bf16_dot(ctx, wo[c0:c1, :])
            attn_rows.append(acc)
        attn_out = jnp.concatenate(attn_rows, axis=0) + bo   # (B*S, H), sublane concat

        x1 = _layernorm(x + attn_out, g1, be1)
        # TODO(synk): HF BERT default is exact erf GELU; tanh approximation used here.
        h1 = jax.nn.gelu(_bf16_dot(x1, w1, b1), approximate=True)
        ffn_out = _bf16_dot(h1, w2, b2)
        x = _layernorm(x1 + ffn_out, g2, be2)

    # Masked mean pooling: mask_row @ x_block is an MXU dot (no transpose).
    emb_rows = []
    for b in range(B):
        mb = mask[b:b + 1, :]                          # (1, S)
        xb = x[b * S:(b + 1) * S, :]                   # (S, H)
        summed = jnp.dot(mb, xb, preferred_element_type=jnp.float32)   # (1, H)
        cnt = jnp.maximum(jnp.sum(mb, axis=-1, keepdims=True), 1e-9)   # (1, 1)
        emb_rows.append(summed * pl.reciprocal(cnt, approx=True))
    emb = jnp.concatenate(emb_rows, axis=0)            # (B, H)

    logit = _bf16_dot(emb, wfc_ref[...], bfc_ref[...])  # (B, OUT_DIM)
    o_ref[...] = logit.astype(o_ref.dtype)


def _full_spec(shape):
    return pl.BlockSpec(shape, lambda: tuple(0 for _ in shape))


def fused_forward(x2d, mask, params):
    args = (
        x2d, mask,
        params["emb_ln_g"], params["emb_ln_b"],
        params["wqkv"], params["bqkv"], params["wo"], params["bo"],
        params["ln1_g"], params["ln1_b"], params["w1"], params["b1"],
        params["w2"], params["b2"], params["ln2_g"], params["ln2_b"],
        params["w_fc"], params["b_fc"],
    )
    return pl.pallas_call(
        fused_forward_kernel,
        out_shape=jax.ShapeDtypeStruct((B, OUT_DIM), jnp.float32),
        in_specs=[_full_spec(a.shape) for a in args],
        out_specs=_full_spec((B, OUT_DIM)),
    )(*args)


# --------------------------------- parameters --------------------------------
def init_params(key):
    def nrm(k, shape):
        return jax.random.normal(k, shape, jnp.float32) * INIT_RANGE

    keys = jax.random.split(key, 8 * NUM_LAYERS + 4)
    ki = iter(keys)
    params = {
        "word_emb": nrm(next(ki), (VOCAB, H)),
        "pos_emb": nrm(next(ki), (S, H)),
        "emb_ln_g": jnp.ones((1, H), jnp.float32),
        "emb_ln_b": jnp.zeros((1, H), jnp.float32),
        # fc head: _init_weights -> normal(0, initializer_range), bias zero
        "w_fc": nrm(next(ki), (H, OUT_DIM)),
        "b_fc": jnp.zeros((1, OUT_DIM), jnp.float32),
    }
    layers = []
    for _ in range(NUM_LAYERS):
        layers.append({
            "wqkv": nrm(next(ki), (H, 3 * H)),
            "bqkv": jnp.zeros((1, 3 * H), jnp.float32),
            "wo": nrm(next(ki), (H, H)),
            "bo": jnp.zeros((1, H), jnp.float32),
            "ln1_g": jnp.ones((1, H), jnp.float32),
            "ln1_b": jnp.zeros((1, H), jnp.float32),
            "w1": nrm(next(ki), (H, FFN)),
            "b1": jnp.zeros((1, FFN), jnp.float32),
            "w2": nrm(next(ki), (FFN, H)),
            "b2": jnp.zeros((1, H), jnp.float32),
            "ln2_g": jnp.ones((1, H), jnp.float32),
            "ln2_b": jnp.zeros((1, H), jnp.float32),
        })
    # Stack per-layer params into (NUM_LAYERS, ...) arrays for the fused kernel.
    for name in layers[0]:
        params[name] = jnp.stack([lyr[name] for lyr in layers], axis=0)
    return params


# ----------------------------------- forward ---------------------------------
@jax.jit
def one_to_one_forward(params, input_ids, attention_mask):
    # Embedding lookup (gather) stays in plain JAX; everything after it is one
    # fused Pallas kernel.
    x = params["word_emb"][input_ids] + params["pos_emb"][None, :, :]   # (B, S, H)
    x2d = x.reshape(BS, H).astype(jnp.float32)
    mask = attention_mask.astype(jnp.float32)                           # (B, S)
    return fused_forward(x2d, mask, params)                             # (B, 2)

# TODO(synk): checkpoint loading / reinit_topk / freeze / gradient checkpointing
# are training-time configuration with no forward-pass compute; not translated.


if __name__ == "__main__":
    key = jax.random.PRNGKey(0)
    pkey, ikey = jax.random.split(key)
    params = init_params(pkey)

    input_ids = jax.random.randint(ikey, (B, S), 0, VOCAB, dtype=jnp.int32)
    attention_mask = jnp.array([[1, 1, 1, 1, 1, 1, 0, 0],
                                [1, 1, 1, 1, 0, 0, 0, 0]], dtype=jnp.int32)

    logits = one_to_one_forward(params, input_ids, attention_mask)
    jax.block_until_ready(logits)
    assert logits.shape == (B, OUT_DIM)
    print("KERNEL_OK")
</pallas_src>

<mosaic_0001>
module attributes {stable_mosaic.version = 11 : i64} {
  func.func @fused_forward_kernel(%arg0: memref<16x32xf32, #tpu.memory_space<vmem>>, %arg1: memref<2x8xf32, #tpu.memory_space<vmem>>, %arg2: memref<1x32xf32, #tpu.memory_space<vmem>>, %arg3: memref<1x32xf32, #tpu.memory_space<vmem>>, %arg4: memref<2x32x96xf32, #tpu.memory_space<vmem>>, %arg5: memref<2x1x96xf32, #tpu.memory_space<vmem>>, %arg6: memref<2x32x32xf32, #tpu.memory_space<vmem>>, %arg7: memref<2x1x32xf32, #tpu.memory_space<vmem>>, %arg8: memref<2x1x32xf32, #tpu.memory_space<vmem>>, %arg9: memref<2x1x32xf32, #tpu.memory_space<vmem>>, %arg10: memref<2x32x64xf32, #tpu.memory_space<vmem>>, %arg11: memref<2x1x64xf32, #tpu.memory_space<vmem>>, %arg12: memref<2x64x32xf32, #tpu.memory_space<vmem>>, %arg13: memref<2x1x32xf32, #tpu.memory_space<vmem>>, %arg14: memref<2x1x32xf32, #tpu.memory_space<vmem>>, %arg15: memref<2x1x32xf32, #tpu.memory_space<vmem>>, %arg16: memref<32x2xf32, #tpu.memory_space<vmem>>, %arg17: memref<1x2xf32, #tpu.memory_space<vmem>>, %arg18: memref<2x2xf32, #tpu.memory_space<vmem>>) attributes {dimension_semantics = [], scalar_prefetch = 0 : i64, scratch_operands = 0 : i64, tpu.core_type = #tpu.core_type<tc>} {
    %c0 = arith.constant 0 : index
    %c0_0 = arith.constant 0 : index
    %0 = vector.load %arg0[%c0, %c0_0] : memref<16x32xf32, #tpu.memory_space<vmem>>, vector<16x32xf32>
    %c0_1 = arith.constant 0 : index
    %c0_2 = arith.constant 0 : index
    %1 = vector.load %arg1[%c0_1, %c0_2] : memref<2x8xf32, #tpu.memory_space<vmem>>, vector<2x8xf32>
    %cst = arith.constant 1.000000e+00 : f32
    %2 = vector.broadcast %cst : f32 to vector<2x8xf32>
    %3 = arith.subf %2, %1 : vector<2x8xf32>
    %cst_3 = arith.constant -1.000000e+09 : f32
    %4 = vector.broadcast %cst_3 : f32 to vector<2x8xf32>
    %5 = arith.mulf %3, %4 : vector<2x8xf32>
    %c0_4 = arith.constant 0 : index
    %c0_5 = arith.constant 0 : index
    %6 = vector.load %arg2[%c0_4, %c0_5] : memref<1x32xf32, #tpu.memory_space<vmem>>, vector<1x32xf32>
    %c0_6 = arith.constant 0 : index
    %c0_7 = arith.constant 0 : index
    %7 = vector.load %arg3[%c0_6, %c0_7] : memref<1x32xf32, #tpu.memory_space<vmem>>, vector<1x32xf32>
    %cst_8 = arith.constant dense<0.000000e+00> : vector<16xf32>
    %8 = vector.multi_reduction <add>, %0, %cst_8 [1] : vector<16x32xf32> to vector<16xf32>
    %9 = vector.shape_cast %8 : vector<16xf32> to vector<16x1xf32>
    %cst_9 = arith.constant 3.200000e+01 : f32
    %10 = vector.broadcast %cst_9 : f32 to vector<16x1xf32>
    %11 = arith.divf %9, %10 : vector<16x1xf32>
    %12 = vector.broadcast %11 : vector<16x1xf32> to vector<16x32xf32>
    %13 = arith.subf %0, %12 : vector<16x32xf32>
    %14 = arith.mulf %13, %13 : vector<16x32xf32>
    %cst_10 = arith.constant dense<0.000000e+00> : vector<16xf32>
    %15 = vector.multi_reduction <add>, %14, %cst_10 [1] : vector<16x32xf32> to vector<16xf32>
    %16 = vector.shape_cast %15 : vector<16xf32> to vector<16x1xf32>
    %cst_11 = arith.constant 3.200000e+01 : f32
    %17 = vector.broadcast %cst_11 : f32 to vector<16x1xf32>
    %18 = arith.divf %16, %17 : vector<16x1xf32>
    %cst_12 = arith.constant 9.99999996E-13 : f32
    %19 = vector.broadcast %cst_12 : f32 to vector<16x1xf32>
    %20 = arith.addf %18, %19 : vector<16x1xf32>
    %21 = math.rsqrt %20 : vector<16x1xf32>
    %22 = vector.broadcast %21 : vector<16x1xf32> to vector<16x32xf32>
    %23 = arith.mulf %13, %22 : vector<16x32xf32>
    %24 = vector.broadcast %6 : vector<1x32xf32> to vector<16x32xf32>
    %25 = arith.mulf %23, %24 : vector<16x32xf32>
    %26 = vector.broadcast %7 : vector<1x32xf32> to vector<16x32xf32>
    %27 = arith.addf %25, %26 : vector<16x32xf32>
    %c0_13 = arith.constant 0 : index
    %c0_14 = arith.constant 0 : index
    %c0_15 = arith.constant 0 : index
    %28 = vector.load %arg4[%c0_13, %c0_14, %c0_15] : memref<2x32x96xf32, #tpu.memory_space<vmem>>, vector<1x32x96xf32>
    %29 = vector.shape_cast %28 : vector<1x32x96xf32> to vector<32x96xf32>
    %c0_16 = arith.constant 0 : index
    %c0_17 = arith.constant 0 : index
    %c0_18 = arith.constant 0 : index
    %30 = vector.load %arg5[%c0_16, %c0_17, %c0_18] : memref<2x1x96xf32, #tpu.memory_space<vmem>>, vector<1x1x96xf32>
    %31 = vector.shape_cast %30 : vector<1x1x96xf32> to vector<1x96xf32>
    %c0_19 = arith.constant 0 : index
    %c0_20 = arith.constant 0 : index
    %c0_21 = arith.constant 0 : index
    %32 = vector.load %arg6[%c0_19, %c0_20, %c0_21] : memref<2x32x32xf32, #tpu.memory_space<vmem>>, vector<1x32x32xf32>
    %33 = vector.shape_cast %32 : vector<1x32x32xf32> to vector<32x32xf32>
    %c0_22 = arith.constant 0 : index
    %c0_23 = arith.constant 0 : index
    %c0_24 = arith.constant 0 : index
    %34 = vector.load %arg7[%c0_22, %c0_23, %c0_24] : memref<2x1x32xf32, #tpu.memory_space<vmem>>, vector<1x1x32xf32>
    %35 = vector.shape_cast %34 : vector<1x1x32xf32> to vector<1x32xf32>
    %c0_25 = arith.constant 0 : index
    %c0_26 = arith.constant 0 : index
    %c0_27 = arith.constant 0 : index
    %36 = vector.load %arg8[%c0_25, %c0_26, %c0_27] : memref<2x1x32xf32, #tpu.memory_space<vmem>>, vector<1x1x32xf32>
    %37 = vector.shape_cast %36 : vector<1x1x32xf32> to vector<1x32xf32>
    %c0_28 = arith.constant 0 : index
    %c0_29 = arith.constant 0 : index
    %c0_30 = arith.constant 0 : index
    %38 = vector.load %arg9[%c0_28, %c0_29, %c0_30] : memref<2x1x32xf32, #tpu.memory_space<vmem>>, vector<1x1x32xf32>
    %39 = vector.shape_cast %38 : vector<1x1x32xf32> to vector<1x32xf32>
    %c0_31 = arith.constant 0 : index
    %c0_32 = arith.constant 0 : index
    %c0_33 = arith.constant 0 : index
    %40 = vector.load %arg10[%c0_31, %c0_32, %c0_33] : memref<2x32x64xf32, #tpu.memory_space<vmem>>, vector<1x32x64xf32>
    %41 = vector.shape_cast %40 : vector<1x32x64xf32> to vector<32x64xf32>
    %c0_34 = arith.constant 0 : index
    %c0_35 = arith.constant 0 : index
    %c0_36 = arith.constant 0 : index
    %42 = vector.load %arg11[%c0_34, %c0_35, %c0_36] : memref<2x1x64xf32, #tpu.memory_space<vmem>>, vector<1x1x64xf32>
    %43 = vector.shape_cast %42 : vector<1x1x64xf32> to vector<1x64xf32>
    %c0_37 = arith.constant 0 : index
    %c0_38 = arith.constant 0 : index
    %c0_39 = arith.constant 0 : index
    %44 = vector.load %arg12[%c0_37, %c0_38, %c0_39] : memref<2x64x32xf32, #tpu.memory_space<vmem>>, vector<1x64x32xf32>
    %45 = vector.shape_cast %44 : vector<1x64x32xf32> to vector<64x32xf32>
    %c0_40 = arith.constant 0 : index
    %c0_41 = arith.constant 0 : index
    %c0_42 = arith.constant 0 : index
    %46 = vector.load %arg13[%c0_40, %c0_41, %c0_42] : memref<2x1x32xf32, #tpu.memory_space<vmem>>, vector<1x1x32xf32>
    %47 = vector.shape_cast %46 : vector<1x1x32xf32> to vector<1x32xf32>
    %c0_43 = arith.constant 0 : index
    %c0_44 = arith.constant 0 : index
    %c0_45 = arith.constant 0 : index
    %48 = vector.load %arg14[%c0_43, %c0_44, %c0_45] : memref<2x1x32xf32, #tpu.memory_space<vmem>>, vector<1x1x32xf32>
    %49 = vector.shape_cast %48 : vector<1x1x32xf32> to vector<1x32xf32>
    %c0_46 = arith.constant 0 : index
    %c0_47 = arith.constant 0 : index
    %c0_48 = arith.constant 0 : index
    %50 = vector.load %arg15[%c0_46, %c0_47, %c0_48] : memref<2x1x32xf32, #tpu.memory_space<vmem>>, vector<1x1x32xf32>
    %51 = vector.shape_cast %50 : vector<1x1x32xf32> to vector<1x32xf32>
    %52 = arith.truncf %27 : vector<16x32xf32> to vector<16x32xbf16>
    %53 = arith.truncf %29 : vector<32x96xf32> to vector<32x96xbf16>
    %cst_49 = arith.constant dense<0.000000e+00> : vector<16x96xf32>
    %54 = tpu.matmul %52, %53, %cst_49 {dimension_numbers = #tpu.dot_dimension_numbers<[1], [0], [0], [1], [0, 0, 1, 1], [], []>} : vector<16x32xbf16>, vector<32x96xbf16>, vector<16x96xf32> -> vector<16x96xf32>
    %55 = vector.broadcast %31 : vector<1x96xf32> to vector<16x96xf32>
    %56 = arith.addf %54, %55 : vector<16x96xf32>
    %57 = vector.extract_strided_slice %56 {offsets = [0, 0], sizes = [16, 32], strides = [1, 1]} : vector<16x96xf32> to vector<16x32xf32>
    %58 = vector.extract_strided_slice %56 {offsets = [0, 32], sizes = [16, 32], strides = [1, 1]} : vector<16x96xf32> to vector<16x32xf32>
    %59 = vector.extract_strided_slice %56 {offsets = [0, 64], sizes = [16, 32], strides = [1, 1]} : vector<16x96xf32> to vector<16x32xf32>
    %60 = vector.extract_strided_slice %57 {offsets = [0, 0], sizes = [8, 32], strides = [1, 1]} : vector<16x32xf32> to vector<8x32xf32>
    %61 = vector.extract_strided_slice %58 {offsets = [0, 0], sizes = [8, 32], strides = [1, 1]} : vector<16x32xf32> to vector<8x32xf32>
    %62 = vector.extract_strided_slice %59 {offsets = [0, 0], sizes = [8, 32], strides = [1, 1]} : vector<16x32xf32> to vector<8x32xf32>
    %63 = vector.extract_strided_slice %5 {offsets = [0, 0], sizes = [1, 8], strides = [1, 1]} : vector<2x8xf32> to vector<1x8xf32>
    %cst_50 = arith.constant 0.000000e+00 : f32
    %64 = vector.broadcast %cst_50 : f32 to vector<8x32xf32>
    %65 = vector.extract_strided_slice %60 {offsets = [0, 0], sizes = [8, 8], strides = [1, 1]} : vector<8x32xf32> to vector<8x8xf32>
    %66 = vector.extract_strided_slice %61 {offsets = [0, 0], sizes = [8, 8], strides = [1, 1]} : vector<8x32xf32> to vector<8x8xf32>
    %67 = vector.extract_strided_slice %62 {offsets = [0, 0], sizes = [8, 8], strides = [1, 1]} : vector<8x32xf32> to vector<8x8xf32>
    %68 = tpu.transpose %66, [1, 0] : vector<8x8xf32> -> vector<8x8xf32>
    %cst_51 = arith.constant dense<0.000000e+00> : vector<8x8xf32>
    %69 = tpu.matmul %65, %68, %cst_51 {dimension_numbers = #tpu.dot_dimension_numbers<[1], [0], [0], [1], [0, 0, 1, 1], [], []>} : vector<8x8xf32>, vector<8x8xf32>, vector<8x8xf32> -> vector<8x8xf32>
    %cst_52 = arith.constant 0.353553385 : f32
    %70 = vector.broadcast %cst_52 : f32 to vector<8x8xf32>
    %71 = arith.mulf %69, %70 : vector<8x8xf32>
    %72 = vector.broadcast %63 : vector<1x8xf32> to vector<8x8xf32>
    %73 = arith.addf %71, %72 : vector<8x8xf32>
    %cst_53 = arith.constant dense<0xFF800000> : vector<8xf32>
    %74 = vector.multi_reduction <maximumf>, %73, %cst_53 [1] : vector<8x8xf32> to vector<8xf32>
    %75 = vector.shape_cast %74 : vector<8xf32> to vector<8x1xf32>
    %76 = vector.broadcast %75 : vector<8x1xf32> to vector<8x8xf32>
    %77 = arith.subf %73, %76 : vector<8x8xf32>
    %78 = math.exp %77 : vector<8x8xf32>
    %cst_54 = arith.constant dense<0.000000e+00> : vector<8xf32>
    %79 = vector.multi_reduction <add>, %78, %cst_54 [1] : vector<8x8xf32> to vector<8xf32>
    %80 = vector.shape_cast %79 : vector<8xf32> to vector<8x1xf32>
    %81 = tpu.reciprocal %80 {approx = true} : vector<8x1xf32> -> vector<8x1xf32>
    %82 = vector.broadcast %81 : vector<8x1xf32> to vector<8x8xf32>
    %83 = arith.mulf %78, %82 : vector<8x8xf32>
    %cst_55 = arith.constant dense<0.000000e+00> : vector<8x8xf32>
    %84 = tpu.matmul %83, %67, %cst_55 {dimension_numbers = #tpu.dot_dimension_numbers<[1], [0], [0], [1], [0, 0, 1, 1], [], []>} : vector<8x8xf32>, vector<8x8xf32>, vector<8x8xf32> -> vector<8x8xf32>
    %85 = vector.extract_strided_slice %33 {offsets = [0, 0], sizes = [8, 32], strides = [1, 1]} : vector<32x32xf32> to vector<8x32xf32>
    %86 = arith.truncf %84 : vector<8x8xf32> to vector<8x8xbf16>
    %87 = arith.truncf %85 : vector<8x32xf32> to vector<8x32xbf16>
    %cst_56 = arith.constant dense<0.000000e+00> : vector<8x32xf32>
    %88 = tpu.matmul %86, %87, %cst_56 {dimension_numbers = #tpu.dot_dimension_numbers<[1], [0], [0], [1], [0, 0, 1, 1], [], []>} : vector<8x8xbf16>, vector<8x32xbf16>, vector<8x32xf32> -> vector<8x32xf32>
    %89 = arith.addf %64, %88 : vector<8x32xf32>
    %90 = vector.extract_strided_slice %60 {offsets = [0, 8], sizes = [8, 8], strides = [1, 1]} : vector<8x32xf32> to vector<8x8xf32>
    %91 = vector.extract_strided_slice %61 {offsets = [0, 8], sizes = [8, 8], strides = [1, 1]} : vector<8x32xf32> to vector<8x8xf32>
    %92 = vector.extract_strided_slice %62 {offsets = [0, 8], sizes = [8, 8], strides = [1, 1]} : vector<8x32xf32> to vector<8x8xf32>
    %93 = tpu.transpose %91, [1, 0] : vector<8x8xf32> -> vector<8x8xf32>
    %cst_57 = arith.constant dense<0.000000e+00> : vector<8x8xf32>
    %94 = tpu.matmul %90, %93, %cst_57 {dimension_numbers = #tpu.dot_dimension_numbers<[1], [0], [0], [1], [0, 0, 1, 1], [], []>} : vector<8x8xf32>, vector<8x8xf32>, vector<8x8xf32> -> vector<8x8xf32>
    %cst_58 = arith.constant 0.353553385 : f32
    %95 = vector.broadcast %cst_58 : f32 to vector<8x8xf32>
    %96 = arith.mulf %94, %95 : vector<8x8xf32>
    %97 = vector.broadcast %63 : vector<1x8xf32> to vector<8x8xf32>
    %98 = arith.addf %96, %97 : vector<8x8xf32>
    %cst_59 = arith.constant dense<0xFF800000> : vector<8xf32>
    %99 = vector.multi_reduction <maximumf>, %98, %cst_59 [1] : vector<8x8xf32> to vector<8xf32>
    %100 = vector.shape_cast %99 : vector<8xf32> to vector<8x1xf32>
    %101 = vector.broadcast %100 : vector<8x1xf32> to vector<8x8xf32>
    %102 = arith.subf %98, %101 : vector<8x8xf32>
    %103 = math.exp %102 : vector<8x8xf32>
    %cst_60 = arith.constant dense<0.000000e+00> : vector<8xf32>
    %104 = vector.multi_reduction <add>, %103, %cst_60 [1] : vector<8x8xf32> to vector<8xf32>
    %105 = vector.shape_cast %104 : vector<8xf32> to vector<8x1xf32>
    %106 = tpu.reciprocal %105 {approx = true} : vector<8x1xf32> -> vector<8x1xf32>
    %107 = vector.broadcast %106 : vector<8x1xf32> to vector<8x8xf32>
    %108 = arith.mulf %103, %107 : vector<8x8xf32>
    %cst_61 = arith.constant dense<0.000000e+00> : vector<8x8xf32>
    %109 = tpu.matmul %108, %92, %cst_61 {dimension_numbers = #tpu.dot_dimension_numbers<[1], [0], [0], [1], [0, 0, 1, 1], [], []>} : vector<8x8xf32>, vector<8x8xf32>, vector<8x8xf32> -> vector<8x8xf32>
    %110 = vector.extract_strided_slice %33 {offsets = [8, 0], sizes = [8, 32], strides = [1, 1]} : vector<32x32xf32> to vector<8x32xf32>
    %111 = arith.truncf %109 : vector<8x8xf32> to vector<8x8xbf16>
    %112 = arith.truncf %110 : vector<8x32xf32> to vector<8x32xbf16>
    %cst_62 = arith.constant dense<0.000000e+00> : vector<8x32xf32>
    %113 = tpu.matmul %111, %112, %cst_62 {dimension_numbers = #tpu.dot_dimension_numbers<[1], [0], [0], [1], [0, 0, 1, 1], [], []>} : vector<8x8xbf16>, vector<8x32xbf16>, vector<8x32xf32> -> vector<8x32xf32>
    %114 = arith.addf %89, %113 : vector<8x32xf32>
    %115 = vector.extract_strided_slice %60 {offsets = [0, 16], sizes = [8, 8], strides = [1, 1]} : vector<8x32xf32> to vector<8x8xf32>
    %116 = vector.extract_strided_slice %61 {offsets = [0, 16], sizes = [8, 8], strides = [1, 1]} : vector<8x32xf32> to vector<8x8xf32>
    %117 = vector.extract_strided_slice %62 {offsets = [0, 16], sizes = [8, 8], strides = [1, 1]} : vector<8x32xf32> to vector<8x8xf32>
    %118 = tpu.transpose %116, [1, 0] : vector<8x8xf32> -> vector<8x8xf32>
    %cst_63 = arith.constant dense<0.000000e+00> : vector<8x8xf32>
    %119 = tpu.matmul %115, %118, %cst_63 {dimension_numbers = #tpu.dot_dimension_numbers<[1], [0], [0], [1], [0, 0, 1, 1], [], []>} : vector<8x8xf32>, vector<8x8xf32>, vector<8x8xf32> -> vector<8x8xf32>
    %cst_64 = arith.constant 0.353553385 : f32
    %120 = vector.broadcast %cst_64 : f32 to vector<8x8xf32>
    %121 = arith.mulf %119, %120 : vector<8x8xf32>
    %122 = vector.broadcast %63 : vector<1x8xf32> to vector<8x8xf32>
    %123 = arith.addf %121, %122 : vector<8x8xf32>
    %cst_65 = arith.constant dense<0xFF800000> : vector<8xf32>
    %124 = vector.multi_reduction <maximumf>, %123, %cst_65 [1] : vector<8x8xf32> to vector<8xf32>
    %125 = vector.shape_cast %124 : vector<8xf32> to vector<8x1xf32>
    %126 = vector.broadcast %125 : vector<8x1xf32> to vector<8x8xf32>
    %127 = arith.subf %123, %126 : vector<8x8xf32>
    %128 = math.exp %127 : vector<8x8xf32>
    %cst_66 = arith.constant dense<0.000000e+00> : vector<8xf32>
    %129 = vector.multi_reduction <add>, %128, %cst_66 [1] : vector<8x8xf32> to vector<8xf32>
    %130 = vector.shape_cast %129 : vector<8xf32> to vector<8x1xf32>
    %131 = tpu.reciprocal %130 {approx = true} : vector<8x1xf32> -> vector<8x1xf32>
    %132 = vector.broadcast %131 : vector<8x1xf32> to vector<8x8xf32>
    %133 = arith.mulf %128, %132 : vector<8x8xf32>
    %cst_67 = arith.constant dense<0.000000e+00> : vector<8x8xf32>
    %134 = tpu.matmul %133, %117, %cst_67 {dimension_numbers = #tpu.dot_dimension_numbers<[1], [0], [0], [1], [0, 0, 1, 1], [], []>} : vector<8x8xf32>, vector<8x8xf32>, vector<8x8xf32> -> vector<8x8xf32>
    %135 = vector.extract_strided_slice %33 {offsets = [16, 0], sizes = [8, 32], strides = [1, 1]} : vector<32x32xf32> to vector<8x32xf32>
    %136 = arith.truncf %134 : vector<8x8xf32> to vector<8x8xbf16>
    %137 = arith.truncf %135 : vector<8x32xf32> to vector<8x32xbf16>
    %cst_68 = arith.constant dense<0.000000e+00> : vector<8x32xf32>
    %138 = tpu.matmul %136, %137, %cst_68 {dimension_numbers = #tpu.dot_dimension_numbers<[1], [0], [0], [1], [0, 0, 1, 1], [], []>} : vector<8x8xbf16>, vector<8x32xbf16>, vector<8x32xf32> -> vector<8x32xf32>
    %139 = arith.addf %114, %138 : vector<8x32xf32>
    %140 = vector.extract_strided_slice %60 {offsets = [0, 24], sizes = [8, 8], strides = [1, 1]} : vector<8x32xf32> to vector<8x8xf32>
    %141 = vector.extract_strided_slice %61 {offsets = [0, 24], sizes = [8, 8], strides = [1, 1]} : vector<8x32xf32> to vector<8x8xf32>
    %142 = vector.extract_strided_slice %62 {offsets = [0, 24], sizes = [8, 8], strides = [1, 1]} : vector<8x32xf32> to vector<8x8xf32>
    %143 = tpu.transpose %141, [1, 0] : vector<8x8xf32> -> vector<8x8xf32>
    %cst_69 = arith.constant dense<0.000000e+00> : vector<8x8xf32>
    %144 = tpu.matmul %140, %143, %cst_69 {dimension_numbers = #tpu.dot_dimension_numbers<[1], [0], [0], [1], [0, 0, 1, 1], [], []>} : vector<8x8xf32>, vector<8x8xf32>, vector<8x8xf32> -> vector<8x8xf32>
    %cst_70 = arith.constant 0.353553385 : f32
    %145 = vector.broadcast %cst_70 : f32 to vector<8x8xf32>
    %146 = arith.mulf %144, %145 : vector<8x8xf32>
    %147 = vector.broadcast %63 : vector<1x8xf32> to vector<8x8xf32>
    %148 = arith.addf %146, %147 : vector<8x8xf32>
    %cst_71 = arith.constant dense<0xFF800000> : vector<8xf32>
    %149 = vector.multi_reduction <maximumf>, %148, %cst_71 [1] : vector<8x8xf32> to vector<8xf32>
    %150 = vector.shape_cast %149 : vector<8xf32> to vector<8x1xf32>
    %151 = vector.broadcast %150 : vector<8x1xf32> to vector<8x8xf32>
    %152 = arith.subf %148, %151 : vector<8x8xf32>
    %153 = math.exp %152 : vector<8x8xf32>
    %cst_72 = arith.constant dense<0.000000e+00> : vector<8xf32>
    %154 = vector.multi_reduction <add>, %153, %cst_72 [1] : vector<8x8xf32> to vector<8xf32>
    %155 = vector.shape_cast %154 : vector<8xf32> to vector<8x1xf32>
    %156 = tpu.reciprocal %155 {approx = true} : vector<8x1xf32> -> vector<8x1xf32>
    %157 = vector.broadcast %156 : vector<8x1xf32> to vector<8x8xf32>
    %158 = arith.mulf %153, %157 : vector<8x8xf32>
    %cst_73 = arith.constant dense<0.000000e+00> : vector<8x8xf32>
    %159 = tpu.matmul %158, %142, %cst_73 {dimension_numbers = #tpu.dot_dimension_numbers<[1], [0], [0], [1], [0, 0, 1, 1], [], []>} : vector<8x8xf32>, vector<8x8xf32>, vector<8x8xf32> -> vector<8x8xf32>
    %160 = vector.extract_strided_slice %33 {offsets = [24, 0], sizes = [8, 32], strides = [1, 1]} : vector<32x32xf32> to vector<8x32xf32>
    %161 = arith.truncf %159 : vector<8x8xf32> to vector<8x8xbf16>
    %162 = arith.truncf %160 : vector<8x32xf32> to vector<8x32xbf16>
    %cst_74 = arith.constant dense<0.000000e+00> : vector<8x32xf32>
    %163 = tpu.matmul %161, %162, %cst_74 {dimension_numbers = #tpu.dot_dimension_numbers<[1], [0], [0], [1], [0, 0, 1, 1], [], []>} : vector<8x8xbf16>, vector<8x32xbf16>, vector<8x32xf32> -> vector<8x32xf32>
    %164 = arith.addf %139, %163 : vector<8x32xf32>
    %165 = vector.extract_strided_slice %57 {offsets = [8, 0], sizes = [8, 32], strides = [1, 1]} : vector<16x32xf32> to vector<8x32xf32>
    %166 = vector.extract_strided_slice %58 {offsets = [8, 0], sizes = [8, 32], strides = [1, 1]} : vector<16x32xf32> to vector<8x32xf32>
    %167 = vector.extract_strided_slice %59 {offsets = [8, 0], sizes = [8, 32], strides = [1, 1]} : vector<16x32xf32> to vector<8x32xf32>
    %168 = vector.extract_strided_slice %5 {offsets = [1, 0], sizes = [1, 8], strides = [1, 1]} : vector<2x8xf32> to vector<1x8xf32>
    %cst_75 = arith.constant 0.000000e+00 : f32
    %169 = vector.broadcast %cst_75 : f32 to vector<8x32xf32>
    %170 = vector.extract_strided_slice %165 {offsets = [0, 0], sizes = [8, 8], strides = [1, 1]} : vector<8x32xf32> to vector<8x8xf32>
    %171 = vector.extract_strided_slice %166 {offsets = [0, 0], sizes = [8, 8], strides = [1, 1]} : vector<8x32xf32> to vector<8x8xf32>
    %172 = vector.extract_strided_slice %167 {offsets = [0, 0], sizes = [8, 8], strides = [1, 1]} : vector<8x32xf32> to vector<8x8xf32>
    %173 = tpu.transpose %171, [1, 0] : vector<8x8xf32> -> vector<8x8xf32>
    %cst_76 = arith.constant dense<0.000000e+00> : vector<8x8xf32>
    %174 = tpu.matmul %170, %173, %cst_76 {dimension_numbers = #tpu.dot_dimension_numbers<[1], [0], [0], [1], [0, 0, 1, 1], [], []>} : vector<8x8xf32>, vector<8x8xf32>, vector<8x8xf32> -> vector<8x8xf32>
    %cst_77 = arith.constant 0.353553385 : f32
    %175 = vector.broadcast %cst_77 : f32 to vector<8x8xf32>
    %176 = arith.mulf %174, %175 : vector<8x8xf32>
    %177 = vector.broadcast %168 : vector<1x8xf32> to vector<8x8xf32>
    %178 = arith.addf %176, %177 : vector<8x8xf32>
    %cst_78 = arith.constant dense<0xFF800000> : vector<8xf32>
    %179 = vector.multi_reduction <maximumf>, %178, %cst_78 [1] : vector<8x8xf32> to vector<8xf32>
    %180 = vector.shape_cast %179 : vector<8xf32> to vector<8x1xf32>
    %181 = vector.broadcast %180 : vector<8x1xf32> to vector<8x8xf32>
    %182 = arith.subf %178, %181 : vector<8x8xf32>
    %183 = math.exp %182 : vector<8x8xf32>
    %cst_79 = arith.constant dense<0.000000e+00> : vector<8xf32>
    %184 = vector.multi_reduction <add>, %183, %cst_79 [1] : vector<8x8xf32> to vector<8xf32>
    %185 = vector.shape_cast %184 : vector<8xf32> to vector<8x1xf32>
    %186 = tpu.reciprocal %185 {approx = true} : vector<8x1xf32> -> vector<8x1xf32>
    %187 = vector.broadcast %186 : vector<8x1xf32> to vector<8x8xf32>
    %188 = arith.mulf %183, %187 : vector<8x8xf32>
    %cst_80 = arith.constant dense<0.000000e+00> : vector<8x8xf32>
    %189 = tpu.matmul %188, %172, %cst_80 {dimension_numbers = #tpu.dot_dimension_numbers<[1], [0], [0], [1], [0, 0, 1, 1], [], []>} : vector<8x8xf32>, vector<8x8xf32>, vector<8x8xf32> -> vector<8x8xf32>
    %190 = vector.extract_strided_slice %33 {offsets = [0, 0], sizes = [8, 32], strides = [1, 1]} : vector<32x32xf32> to vector<8x32xf32>
    %191 = arith.truncf %189 : vector<8x8xf32> to vector<8x8xbf16>
    %192 = arith.truncf %190 : vector<8x32xf32> to vector<8x32xbf16>
    %cst_81 = arith.constant dense<0.000000e+00> : vector<8x32xf32>
    %193 = tpu.matmul %191, %192, %cst_81 {dimension_numbers = #tpu.dot_dimension_numbers<[1], [0], [0], [1], [0, 0, 1, 1], [], []>} : vector<8x8xbf16>, vector<8x32xbf16>, vector<8x32xf32> -> vector<8x32xf32>
    %194 = arith.addf %169, %193 : vector<8x32xf32>
    %195 = vector.extract_strided_slice %165 {offsets = [0, 8], sizes = [8, 8], strides = [1, 1]} : vector<8x32xf32> to vector<8x8xf32>
    %196 = vector.extract_strided_slice %166 {offsets = [0, 8], sizes = [8, 8], strides = [1, 1]} : vector<8x32xf32> to vector<8x8xf32>
    %197 = vector.extract_strided_slice %167 {offsets = [0, 8], sizes = [8, 8], strides = [1, 1]} : vector<8x32xf32> to vector<8x8xf32>
    %198 = tpu.transpose %196, [1, 0] : vector<8x8xf32> -> vector<8x8xf32>
    %cst_82 = arith.constant dense<0.000000e+00> : vector<8x8xf32>
    %199 = tpu.matmul %195, %198, %cst_82 {dimension_numbers = #tpu.dot_dimension_numbers<[1], [0], [0], [1], [0, 0, 1, 1], [], []>} : vector<8x8xf32>, vector<8x8xf32>, vector<8x8xf32> -> vector<8x8xf32>
    %cst_83 = arith.constant 0.353553385 : f32
    %200 = vector.broadcast %cst_83 : f32 to vector<8x8xf32>
    %201 = arith.mulf %199, %200 : vector<8x8xf32>
    %202 = vector.broadcast %168 : vector<1x8xf32> to vector<8x8xf32>
    %203 = arith.addf %201, %202 : vector<8x8xf32>
    %cst_84 = arith.constant dense<0xFF800000> : vector<8xf32>
    %204 = vector.multi_reduction <maximumf>, %203, %cst_84 [1] : vector<8x8xf32> to vector<8xf32>
    %205 = vector.shape_cast %204 : vector<8xf32> to vector<8x1xf32>
    %206 = vector.broadcast %205 : vector<8x1xf32> to vector<8x8xf32>
    %207 = arith.subf %203, %206 : vector<8x8xf32>
    %208 = math.exp %207 : vector<8x8xf32>
    %cst_85 = arith.constant dense<0.000000e+00> : vector<8xf32>
    %209 = vector.multi_reduction <add>, %208, %cst_85 [1] : vector<8x8xf32> to vector<8xf32>
    %210 = vector.shape_cast %209 : vector<8xf32> to vector<8x1xf32>
    %211 = tpu.reciprocal %210 {approx = true} : vector<8x1xf32> -> vector<8x1xf32>
    %212 = vector.broadcast %211 : vector<8x1xf32> to vector<8x8xf32>
    %213 = arith.mulf %208, %212 : vector<8x8xf32>
    %cst_86 = arith.constant dense<0.000000e+00> : vector<8x8xf32>
    %214 = tpu.matmul %213, %197, %cst_86 {dimension_numbers = #tpu.dot_dimension_numbers<[1], [0], [0], [1], [0, 0, 1, 1], [], []>} : vector<8x8xf32>, vector<8x8xf32>, vector<8x8xf32> -> vector<8x8xf32>
    %215 = vector.extract_strided_slice %33 {offsets = [8, 0], sizes = [8, 32], strides = [1, 1]} : vector<32x32xf32> to vector<8x32xf32>
    %216 = arith.truncf %214 : vector<8x8xf32> to vector<8x8xbf16>
    %217 = arith.truncf %215 : vector<8x32xf32> to vector<8x32xbf16>
    %cst_87 = arith.constant dense<0.000000e+00> : vector<8x32xf32>
    %218 = tpu.matmul %216, %217, %cst_87 {dimension_numbers = #tpu.dot_dimension_numbers<[1], [0], [0], [1], [0, 0, 1, 1], [], []>} : vector<8x8xbf16>, vector<8x32xbf16>, vector<8x32xf32> -> vector<8x32xf32>
    %219 = arith.addf %194, %218 : vector<8x32xf32>
    %220 = vector.extract_strided_slice %165 {offsets = [0, 16], sizes = [8, 8], strides = [1, 1]} : vector<8x32xf32> to vector<8x8xf32>
    %221 = vector.extract_strided_slice %166 {offsets = [0, 16], sizes = [8, 8], strides = [1, 1]} : vector<8x32xf32> to vector<8x8xf32>
    %222 = vector.extract_strided_slice %167 {offsets = [0, 16], sizes = [8, 8], strides = [1, 1]} : vector<8x32xf32> to vector<8x8xf32>
    %223 = tpu.transpose %221, [1, 0] : vector<8x8xf32> -> vector<8x8xf32>
    %cst_88 = arith.constant dense<0.000000e+00> : vector<8x8xf32>
    %224 = tpu.matmul %220, %223, %cst_88 {dimension_numbers = #tpu.dot_dimension_numbers<[1], [0], [0], [1], [0, 0, 1, 1], [], []>} : vector<8x8xf32>, vector<8x8xf32>, vector<8x8xf32> -> vector<8x8xf32>
    %cst_89 = arith.constant 0.353553385 : f32
    %225 = vector.broadcast %cst_89 : f32 to vector<8x8xf32>
    %226 = arith.mulf %224, %225 : vector<8x8xf32>
    %227 = vector.broadcast %168 : vector<1x8xf32> to vector<8x8xf32>
    %228 = arith.addf %226, %227 : vector<8x8xf32>
    %cst_90 = arith.constant dense<0xFF800000> : vector<8xf32>
    %229 = vector.multi_reduction <maximumf>, %228, %cst_90 [1] : vector<8x8xf32> to vector<8xf32>
    %230 = vector.shape_cast %229 : vector<8xf32> to vector<8x1xf32>
    %231 = vector.broadcast %230 : vector<8x1xf32> to vector<8x8xf32>
    %232 = arith.subf %228, %231 : vector<8x8xf32>
    %233 = math.exp %232 : vector<8x8xf32>
    %cst_91 = arith.constant dense<0.000000e+00> : vector<8xf32>
    %234 = vector.multi_reduction <add>, %233, %cst_91 [1] : vector<8x8xf32> to vector<8xf32>
    %235 = vector.shape_cast %234 : vector<8xf32> to vector<8x1xf32>
    %236 = tpu.reciprocal %235 {approx = true} : vector<8x1xf32> -> vector<8x1xf32>
    %237 = vector.broadcast %236 : vector<8x1xf32> to vector<8x8xf32>
    %238 = arith.mulf %233, %237 : vector<8x8xf32>
    %cst_92 = arith.constant dense<0.000000e+00> : vector<8x8xf32>
    %239 = tpu.matmul %238, %222, %cst_92 {dimension_numbers = #tpu.dot_dimension_numbers<[1], [0], [0], [1], [0, 0, 1, 1], [], []>} : vector<8x8xf32>, vector<8x8xf32>, vector<8x8xf32> -> vector<8x8xf32>
    %240 = vector.extract_strided_slice %33 {offsets = [16, 0], sizes = [8, 32], strides = [1, 1]} : vector<32x32xf32> to vector<8x32xf32>
    %241 = arith.truncf %239 : vector<8x8xf32> to vector<8x8xbf16>
    %242 = arith.truncf %240 : vector<8x32xf32> to vector<8x32xbf16>
    %cst_93 = arith.constant dense<0.000000e+00> : vector<8x32xf32>
    %243 = tpu.matmul %241, %242, %cst_93 {dimension_numbers = #tpu.dot_dimension_numbers<[1], [0], [0], [1], [0, 0, 1, 1], [], []>} : vector<8x8xbf16>, vector<8x32xbf16>, vector<8x32xf32> -> vector<8x32xf32>
    %244 = arith.addf %219, %243 : vector<8x32xf32>
    %245 = vector.extract_strided_slice %165 {offsets = [0, 24], sizes = [8, 8], strides = [1, 1]} : vector<8x32xf32> to vector<8x8xf32>
    %246 = vector.extract_strided_slice %166 {offsets = [0, 24], sizes = [8, 8], strides = [1, 1]} : vector<8x32xf32> to vector<8x8xf32>
    %247 = vector.extract_strided_slice %167 {offsets = [0, 24], sizes = [8, 8], strides = [1, 1]} : vector<8x32xf32> to vector<8x8xf32>
    %248 = tpu.transpose %246, [1, 0] : vector<8x8xf32> -> vector<8x8xf32>
    %cst_94 = arith.constant dense<0.000000e+00> : vector<8x8xf32>
    %249 = tpu.matmul %245, %248, %cst_94 {dimension_numbers = #tpu.dot_dimension_numbers<[1], [0], [0], [1], [0, 0, 1, 1], [], []>} : vector<8x8xf32>, vector<8x8xf32>, vector<8x8xf32> -> vector<8x8xf32>
    %cst_95 = arith.constant 0.353553385 : f32
    %250 = vector.broadcast %cst_95 : f32 to vector<8x8xf32>
    %251 = arith.mulf %249, %250 : vector<8x8xf32>
    %252 = vector.broadcast %168 : vector<1x8xf32> to vector<8x8xf32>
    %253 = arith.addf %251, %252 : vector<8x8xf32>
    %cst_96 = arith.constant dense<0xFF800000> : vector<8xf32>
    %254 = vector.multi_reduction <maximumf>, %253, %cst_96 [1] : vector<8x8xf32> to vector<8xf32>
    %255 = vector.shape_cast %254 : vector<8xf32> to vector<8x1xf32>
    %256 = vector.broadcast %255 : vector<8x1xf32> to vector<8x8xf32>
    %257 = arith.subf %253, %256 : vector<8x8xf32>
    %258 = math.exp %257 : vector<8x8xf32>
    %cst_97 = arith.constant dense<0.000000e+00> : vector<8xf32>
    %259 = vector.multi_reduction <add>, %258, %cst_97 [1] : vector<8x8xf32> to vector<8xf32>
    %260 = vector.shape_cast %259 : vector<8xf32> to vector<8x1xf32>
    %261 = tpu.reciprocal %260 {approx = true} : vector<8x1xf32> -> vector<8x1xf32>
    %262 = vector.broadcast %261 : vector<8x1xf32> to vector<8x8xf32>
    %263 = arith.mulf %258, %262 : vector<8x8xf32>
    %cst_98 = arith.constant dense<0.000000e+00> : vector<8x8xf32>
    %264 = tpu.matmul %263, %247, %cst_98 {dimension_numbers = #tpu.dot_dimension_numbers<[1], [0], [0], [1], [0, 0, 1, 1], [], []>} : vector<8x8xf32>, vector<8x8xf32>, vector<8x8xf32> -> vector<8x8xf32>
    %265 = vector.extract_strided_slice %33 {offsets = [24, 0], sizes = [8, 32], strides = [1, 1]} : vector<32x32xf32> to vector<8x32xf32>
    %266 = arith.truncf %264 : vector<8x8xf32> to vector<8x8xbf16>
    %267 = arith.truncf %265 : vector<8x32xf32> to vector<8x32xbf16>
    %cst_99 = arith.constant dense<0.000000e+00> : vector<8x32xf32>
    %268 = tpu.matmul %266, %267, %cst_99 {dimension_numbers = #tpu.dot_dimension_numbers<[1], [0], [0], [1], [0, 0, 1, 1], [], []>} : vector<8x8xbf16>, vector<8x32xbf16>, vector<8x32xf32> -> vector<8x32xf32>
    %269 = arith.addf %244, %268 : vector<8x32xf32>
    %270 = tpu.concatenate %164, %269 in 0 : vector<8x32xf32>, vector<8x32xf32> -> vector<16x32xf32>
    %271 = vector.broadcast %35 : vector<1x32xf32> to vector<16x32xf32>
    %272 = arith.addf %270, %271 : vector<16x32xf32>
    %273 = arith.addf %27, %272 : vector<16x32xf32>
    %cst_100 = arith.constant dense<0.000000e+00> : vector<16xf32>
    %274 = vector.multi_reduction <add>, %273, %cst_100 [1] : vector<16x32xf32> to vector<16xf32>
    %275 = vector.shape_cast %274 : vector<16xf32> to vector<16x1xf32>
    %cst_101 = arith.constant 3.200000e+01 : f32
    %276 = vector.broadcast %cst_101 : f32 to vector<16x1xf32>
    %277 = arith.divf %275, %276 : vector<16x1xf32>
    %278 = vector.broadcast %277 : vector<16x1xf32> to vector<16x32xf32>
    %279 = arith.subf %273, %278 : vector<16x32xf32>
    %280 = arith.mulf %279, %279 : vector<16x32xf32>
    %cst_102 = arith.constant dense<0.000000e+00> : vector<16xf32>
    %281 = vector.multi_reduction <add>, %280, %cst_102 [1] : vector<16x32xf32> to vector<16xf32>
    %282 = vector.shape_cast %281 : vector<16xf32> to vector<16x1xf32>
    %cst_103 = arith.constant 3.200000e+01 : f32
    %283 = vector.broadcast %cst_103 : f32 to vector<16x1xf32>
    %284 = arith.divf %282, %283 : vector<16x1xf32>
    %cst_104 = arith.constant 9.99999996E-13 : f32
    %285 = vector.broadcast %cst_104 : f32 to vector<16x1xf32>
    %286 = arith.addf %284, %285 : vector<16x1xf32>
    %287 = math.rsqrt %286 : vector<16x1xf32>
    %288 = vector.broadcast %287 : vector<16x1xf32> to vector<16x32xf32>
    %289 = arith.mulf %279, %288 : vector<16x32xf32>
    %290 = vector.broadcast %37 : vector<1x32xf32> to vector<16x32xf32>
    %291 = arith.mulf %289, %290 : vector<16x32xf32>
    %292 = vector.broadcast %39 : vector<1x32xf32> to vector<16x32xf32>
    %293 = arith.addf %291, %292 : vector<16x32xf32>
    %294 = arith.truncf %293 : vector<16x32xf32> to vector<16x32xbf16>
    %295 = arith.truncf %41 : vector<32x64xf32> to vector<32x64xbf16>
    %cst_105 = arith.constant dense<0.000000e+00> : vector<16x64xf32>
    %296 = tpu.matmul %294, %295, %cst_105 {dimension_numbers = #tpu.dot_dimension_numbers<[1], [0], [0], [1], [0, 0, 1, 1], [], []>} : vector<16x32xbf16>, vector<32x64xbf16>, vector<16x64xf32> -> vector<16x64xf32>
    %297 = vector.broadcast %43 : vector<1x64xf32> to vector<16x64xf32>
    %298 = arith.addf %296, %297 : vector<16x64xf32>
    %299 = arith.mulf %298, %298 : vector<16x64xf32>
    %300 = arith.mulf %298, %299 : vector<16x64xf32>
    %cst_106 = arith.constant 4.471500e-02 : f32
    %301 = vector.broadcast %cst_106 : f32 to vector<16x64xf32>
    %302 = arith.mulf %301, %300 : vector<16x64xf32>
    %303 = arith.addf %298, %302 : vector<16x64xf32>
    %cst_107 = arith.constant 0.797884583 : f32
    %304 = vector.broadcast %cst_107 : f32 to vector<16x64xf32>
    %305 = arith.mulf %304, %303 : vector<16x64xf32>
    %306 = math.tanh %305 : vector<16x64xf32>
    %cst_108 = arith.constant 1.000000e+00 : f32
    %307 = vector.broadcast %cst_108 : f32 to vector<16x64xf32>
    %308 = arith.addf %307, %306 : vector<16x64xf32>
    %cst_109 = arith.constant 5.000000e-01 : f32
    %309 = vector.broadcast %cst_109 : f32 to vector<16x64xf32>
    %310 = arith.mulf %309, %308 : vector<16x64xf32>
    %311 = arith.mulf %298, %310 : vector<16x64xf32>
    %312 = arith.truncf %311 : vector<16x64xf32> to vector<16x64xbf16>
    %313 = arith.truncf %45 : vector<64x32xf32> to vector<64x32xbf16>
    %cst_110 = arith.constant dense<0.000000e+00> : vector<16x32xf32>
    %314 = tpu.matmul %312, %313, %cst_110 {dimension_numbers = #tpu.dot_dimension_numbers<[1], [0], [0], [1], [0, 0, 1, 1], [], []>} : vector<16x64xbf16>, vector<64x32xbf16>, vector<16x32xf32> -> vector<16x32xf32>
    %315 = vector.broadcast %47 : vector<1x32xf32> to vector<16x32xf32>
    %316 = arith.addf %314, %315 : vector<16x32xf32>
    %317 = arith.addf %293, %316 : vector<16x32xf32>
    %cst_111 = arith.constant dense<0.000000e+00> : vector<16xf32>
    %318 = vector.multi_reduction <add>, %317, %cst_111 [1] : vector<16x32xf32> to vector<16xf32>
    %319 = vector.shape_cast %318 : vector<16xf32> to vector<16x1xf32>
    %cst_112 = arith.constant 3.200000e+01 : f32
    %320 = vector.broadcast %cst_112 : f32 to vector<16x1xf32>
    %321 = arith.divf %319, %320 : vector<16x1xf32>
    %322 = vector.broadcast %321 : vector<16x1xf32> to vector<16x32xf32>
    %323 = arith.subf %317, %322 : vector<16x32xf32>
    %324 = arith.mulf %323, %323 : vector<16x32xf32>
    %cst_113 = arith.constant dense<0.000000e+00> : vector<16xf32>
    %325 = vector.multi_reduction <add>, %324, %cst_113 [1] : vector<16x32xf32> to vector<16xf32>
    %326 = vector.shape_cast %325 : vector<16xf32> to vector<16x1xf32>
    %cst_114 = arith.constant 3.200000e+01 : f32
    %327 = vector.broadcast %cst_114 : f32 to vector<16x1xf32>
    %328 = arith.divf %326, %327 : vector<16x1xf32>
    %cst_115 = arith.constant 9.99999996E-13 : f32
    %329 = vector.broadcast %cst_115 : f32 to vector<16x1xf32>
    %330 = arith.addf %328, %329 : vector<16x1xf32>
    %331 = math.rsqrt %330 : vector<16x1xf32>
    %332 = vector.broadcast %331 : vector<16x1xf32> to vector<16x32xf32>
    %333 = arith.mulf %323, %332 : vector<16x32xf32>
    %334 = vector.broadcast %49 : vector<1x32xf32> to vector<16x32xf32>
    %335 = arith.mulf %333, %334 : vector<16x32xf32>
    %336 = vector.broadcast %51 : vector<1x32xf32> to vector<16x32xf32>
    %337 = arith.addf %335, %336 : vector<16x32xf32>
    %c1 = arith.constant 1 : index
    %c0_116 = arith.constant 0 : index
    %c0_117 = arith.constant 0 : index
    %338 = vector.load %arg4[%c1, %c0_116, %c0_117] : memref<2x32x96xf32, #tpu.memory_space<vmem>>, vector<1x32x96xf32>
    %339 = vector.shape_cast %338 : vector<1x32x96xf32> to vector<32x96xf32>
    %c1_118 = arith.constant 1 : index
    %c0_119 = arith.constant 0 : index
    %c0_120 = arith.constant 0 : index
    %340 = vector.load %arg5[%c1_118, %c0_119, %c0_120] : memref<2x1x96xf32, #tpu.memory_space<vmem>>, vector<1x1x96xf32>
    %341 = vector.shape_cast %340 : vector<1x1x96xf32> to vector<1x96xf32>
    %c1_121 = arith.constant 1 : index
    %c0_122 = arith.constant 0 : index
    %c0_123 = arith.constant 0 : index
    %342 = vector.load %arg6[%c1_121, %c0_122, %c0_123] : memref<2x32x32xf32, #tpu.memory_space<vmem>>, vector<1x32x32xf32>
    %343 = vector.shape_cast %342 : vector<1x32x32xf32> to vector<32x32xf32>
    %c1_124 = arith.constant 1 : index
    %c0_125 = arith.constant 0 : index
    %c0_126 = arith.constant 0 : index
    %344 = vector.load %arg7[%c1_124, %c0_125, %c0_126] : memref<2x1x32xf32, #tpu.memory_space<vmem>>, vector<1x1x32xf32>
    %345 = vector.shape_cast %344 : vector<1x1x32xf32> to vector<1x32xf32>
    %c1_127 = arith.constant 1 : index
    %c0_128 = arith.constant 0 : index
    %c0_129 = arith.constant 0 : index
    %346 = vector.load %arg8[%c1_127, %c0_128, %c0_129] : memref<2x1x32xf32, #tpu.memory_space<vmem>>, vector<1x1x32xf32>
    %347 = vector.shape_cast %346 : vector<1x1x32xf32> to vector<1x32xf32>
    %c1_130 = arith.constant 1 : index
    %c0_131 = arith.constant 0 : index
    %c0_132 = arith.constant 0 : index
    %348 = vector.load %arg9[%c1_130, %c0_131, %c0_132] : memref<2x1x32xf32, #tpu.memory_space<vmem>>, vector<1x1x32xf32>
    %349 = vector.shape_cast %348 : vector<1x1x32xf32> to vector<1x32xf32>
    %c1_133 = arith.constant 1 : index
    %c0_134 = arith.constant 0 : index
    %c0_135 = arith.constant 0 : index
    %350 = vector.load %arg10[%c1_133, %c0_134, %c0_135] : memref<2x32x64xf32, #tpu.memory_space<vmem>>, vector<1x32x64xf32>
    %351 = vector.shape_cast %350 : vector<1x32x64xf32> to vector<32x64xf32>
    %c1_136 = arith.constant 1 : index
    %c0_137 = arith.constant 0 : index
    %c0_138 = arith.constant 0 : index
    %352 = vector.load %arg11[%c1_136, %c0_137, %c0_138] : memref<2x1x64xf32, #tpu.memory_space<vmem>>, vector<1x1x64xf32>
    %353 = vector.shape_cast %352 : vector<1x1x64xf32> to vector<1x64xf32>
    %c1_139 = arith.constant 1 : index
    %c0_140 = arith.constant 0 : index
    %c0_141 = arith.constant 0 : index
    %354 = vector.load %arg12[%c1_139, %c0_140, %c0_141] : memref<2x64x32xf32, #tpu.memory_space<vmem>>, vector<1x64x32xf32>
    %355 = vector.shape_cast %354 : vector<1x64x32xf32> to vector<64x32xf32>
    %c1_142 = arith.constant 1 : index
    %c0_143 = arith.constant 0 : index
    %c0_144 = arith.constant 0 : index
    %356 = vector.load %arg13[%c1_142, %c0_143, %c0_144] : memref<2x1x32xf32, #tpu.memory_space<vmem>>, vector<1x1x32xf32>
    %357 = vector.shape_cast %356 : vector<1x1x32xf32> to vector<1x32xf32>
    %c1_145 = arith.constant 1 : index
    %c0_146 = arith.constant 0 : index
    %c0_147 = arith.constant 0 : index
    %358 = vector.load %arg14[%c1_145, %c0_146, %c0_147] : memref<2x1x32xf32, #tpu.memory_space<vmem>>, vector<1x1x32xf32>
    %359 = vector.shape_cast %358 : vector<1x1x32xf32> to vector<1x32xf32>
    %c1_148 = arith.constant 1 : index
    %c0_149 = arith.constant 0 : index
    %c0_150 = arith.constant 0 : index
    %360 = vector.load %arg15[%c1_148, %c0_149, %c0_150] : memref<2x1x32xf32, #tpu.memory_space<vmem>>, vector<1x1x32xf32>
    %361 = vector.shape_cast %360 : vector<1x1x32xf32> to vector<1x32xf32>
    %362 = arith.truncf %337 : vector<16x32xf32> to vector<16x32xbf16>
    %363 = arith.truncf %339 : vector<32x96xf32> to vector<32x96xbf16>
    %cst_151 = arith.constant dense<0.000000e+00> : vector<16x96xf32>
    %364 = tpu.matmul %362, %363, %cst_151 {dimension_numbers = #tpu.dot_dimension_numbers<[1], [0], [0], [1], [0, 0, 1, 1], [], []>} : vector<16x32xbf16>, vector<32x96xbf16>, vector<16x96xf32> -> vector<16x96xf32>
    %365 = vector.broadcast %341 : vector<1x96xf32> to vector<16x96xf32>
    %366 = arith.addf %364, %365 : vector<16x96xf32>
    %367 = vector.extract_strided_slice %366 {offsets = [0, 0], sizes = [16, 32], strides = [1, 1]} : vector<16x96xf32> to vector<16x32xf32>
    %368 = vector.extract_strided_slice %366 {offsets = [0, 32], sizes = [16, 32], strides = [1, 1]} : vector<16x96xf32> to vector<16x32xf32>
    %369 = vector.extract_strided_slice %366 {offsets = [0, 64], sizes = [16, 32], strides = [1, 1]} : vector<16x96xf32> to vector<16x32xf32>
    %370 = vector.extract_strided_slice %367 {offsets = [0, 0], sizes = [8, 32], strides = [1, 1]} : vector<16x32xf32> to vector<8x32xf32>
    %371 = vector.extract_strided_slice %368 {offsets = [0, 0], sizes = [8, 32], strides = [1, 1]} : vector<16x32xf32> to vector<8x32xf32>
    %372 = vector.extract_strided_slice %369 {offsets = [0, 0], sizes = [8, 32], strides = [1, 1]} : vector<16x32xf32> to vector<8x32xf32>
    %373 = vector.extract_strided_slice %5 {offsets = [0, 0], sizes = [1, 8], strides = [1, 1]} : vector<2x8xf32> to vector<1x8xf32>
    %cst_152 = arith.constant 0.000000e+00 : f32
    %374 = vector.broadcast %cst_152 : f32 to vector<8x32xf32>
    %375 = vector.extract_strided_slice %370 {offsets = [0, 0], sizes = [8, 8], strides = [1, 1]} : vector<8x32xf32> to vector<8x8xf32>
    %376 = vector.extract_strided_slice %371 {offsets = [0, 0], sizes = [8, 8], strides = [1, 1]} : vector<8x32xf32> to vector<8x8xf32>
    %377 = vector.extract_strided_slice %372 {offsets = [0, 0], sizes = [8, 8], strides = [1, 1]} : vector<8x32xf32> to vector<8x8xf32>
    %378 = tpu.transpose %376, [1, 0] : vector<8x8xf32> -> vector<8x8xf32>
    %cst_153 = arith.constant dense<0.000000e+00> : vector<8x8xf32>
    %379 = tpu.matmul %375, %378, %cst_153 {dimension_numbers = #tpu.dot_dimension_numbers<[1], [0], [0], [1], [0, 0, 1, 1], [], []>} : vector<8x8xf32>, vector<8x8xf32>, vector<8x8xf32> -> vector<8x8xf32>
    %cst_154 = arith.constant 0.353553385 : f32
    %380 = vector.broadcast %cst_154 : f32 to vector<8x8xf32>
    %381 = arith.mulf %379, %380 : vector<8x8xf32>
    %382 = vector.broadcast %373 : vector<1x8xf32> to vector<8x8xf32>
    %383 = arith.addf %381, %382 : vector<8x8xf32>
    %cst_155 = arith.constant dense<0xFF800000> : vector<8xf32>
    %384 = vector.multi_reduction <maximumf>, %383, %cst_155 [1] : vector<8x8xf32> to vector<8xf32>
    %385 = vector.shape_cast %384 : vector<8xf32> to vector<8x1xf32>
    %386 = vector.broadcast %385 : vector<8x1xf32> to vector<8x8xf32>
    %387 = arith.subf %383, %386 : vector<8x8xf32>
    %388 = math.exp %387 : vector<8x8xf32>
    %cst_156 = arith.constant dense<0.000000e+00> : vector<8xf32>
    %389 = vector.multi_reduction <add>, %388, %cst_156 [1] : vector<8x8xf32> to vector<8xf32>
    %390 = vector.shape_cast %389 : vector<8xf32> to vector<8x1xf32>
    %391 = tpu.reciprocal %390 {approx = true} : vector<8x1xf32> -> vector<8x1xf32>
    %392 = vector.broadcast %391 : vector<8x1xf32> to vector<8x8xf32>
    %393 = arith.mulf %388, %392 : vector<8x8xf32>
    %cst_157 = arith.constant dense<0.000000e+00> : vector<8x8xf32>
    %394 = tpu.matmul %393, %377, %cst_157 {dimension_numbers = #tpu.dot_dimension_numbers<[1], [0], [0], [1], [0, 0, 1, 1], [], []>} : vector<8x8xf32>, vector<8x8xf32>, vector<8x8xf32> -> vector<8x8xf32>
    %395 = vector.extract_strided_slice %343 {offsets = [0, 0], sizes = [8, 32], strides = [1, 1]} : vector<32x32xf32> to vector<8x32xf32>
    %396 = arith.truncf %394 : vector<8x8xf32> to vector<8x8xbf16>
    %397 = arith.truncf %395 : vector<8x32xf32> to vector<8x32xbf16>
    %cst_158 = arith.constant dense<0.000000e+00> : vector<8x32xf32>
    %398 = tpu.matmul %396, %397, %cst_158 {dimension_numbers = #tpu.dot_dimension_numbers<[1], [0], [0], [1], [0, 0, 1, 1], [], []>} : vector<8x8xbf16>, vector<8x32xbf16>, vector<8x32xf32> -> vector<8x32xf32>
    %399 = arith.addf %374, %398 : vector<8x32xf32>
    %400 = vector.extract_strided_slice %370 {offsets = [0, 8], sizes = [8, 8], strides = [1, 1]} : vector<8x32xf32> to vector<8x8xf32>
    %401 = vector.extract_strided_slice %371 {offsets = [0, 8], sizes = [8, 8], strides = [1, 1]} : vector<8x32xf32> to vector<8x8xf32>
    %402 = vector.extract_strided_slice %372 {offsets = [0, 8], sizes = [8, 8], strides = [1, 1]} : vector<8x32xf32> to vector<8x8xf32>
    %403 = tpu.transpose %401, [1, 0] : vector<8x8xf32> -> vector<8x8xf32>
    %cst_159 = arith.constant dense<0.000000e+00> : vector<8x8xf32>
    %404 = tpu.matmul %400, %403, %cst_159 {dimension_numbers = #tpu.dot_dimension_numbers<[1], [0], [0], [1], [0, 0, 1, 1], [], []>} : vector<8x8xf32>, vector<8x8xf32>, vector<8x8xf32> -> vector<8x8xf32>
    %cst_160 = arith.constant 0.353553385 : f32
    %405 = vector.broadcast %cst_160 : f32 to vector<8x8xf32>
    %406 = arith.mulf %404, %405 : vector<8x8xf32>
    %407 = vector.broadcast %373 : vector<1x8xf32> to vector<8x8xf32>
    %408 = arith.addf %406, %407 : vector<8x8xf32>
    %cst_161 = arith.constant dense<0xFF800000> : vector<8xf32>
    %409 = vector.multi_reduction <maximumf>, %408, %cst_161 [1] : vector<8x8xf32> to vector<8xf32>
    %410 = vector.shape_cast %409 : vector<8xf32> to vector<8x1xf32>
    %411 = vector.broadcast %410 : vector<8x1xf32> to vector<8x8xf32>
    %412 = arith.subf %408, %411 : vector<8x8xf32>
    %413 = math.exp %412 : vector<8x8xf32>
    %cst_162 = arith.constant dense<0.000000e+00> : vector<8xf32>
    %414 = vector.multi_reduction <add>, %413, %cst_162 [1] : vector<8x8xf32> to vector<8xf32>
    %415 = vector.shape_cast %414 : vector<8xf32> to vector<8x1xf32>
    %416 = tpu.reciprocal %415 {approx = true} : vector<8x1xf32> -> vector<8x1xf32>
    %417 = vector.broadcast %416 : vector<8x1xf32> to vector<8x8xf32>
    %418 = arith.mulf %413, %417 : vector<8x8xf32>
    %cst_163 = arith.constant dense<0.000000e+00> : vector<8x8xf32>
    %419 = tpu.matmul %418, %402, %cst_163 {dimension_numbers = #tpu.dot_dimension_numbers<[1], [0], [0], [1], [0, 0, 1, 1], [], []>} : vector<8x8xf32>, vector<8x8xf32>, vector<8x8xf32> -> vector<8x8xf32>
    %420 = vector.extract_strided_slice %343 {offsets = [8, 0], sizes = [8, 32], strides = [1, 1]} : vector<32x32xf32> to vector<8x32xf32>
    %421 = arith.truncf %419 : vector<8x8xf32> to vector<8x8xbf16>
    %422 = arith.truncf %420 : vector<8x32xf32> to vector<8x32xbf16>
    %cst_164 = arith.constant dense<0.000000e+00> : vector<8x32xf32>
    %423 = tpu.matmul %421, %422, %cst_164 {dimension_numbers = #tpu.dot_dimension_numbers<[1], [0], [0], [1], [0, 0, 1, 1], [], []>} : vector<8x8xbf16>, vector<8x32xbf16>, vector<8x32xf32> -> vector<8x32xf32>
    %424 = arith.addf %399, %423 : vector<8x32xf32>
    %425 = vector.extract_strided_slice %370 {offsets = [0, 16], sizes = [8, 8], strides = [1, 1]} : vector<8x32xf32> to vector<8x8xf32>
    %426 = vector.extract_strided_slice %371 {offsets = [0, 16], sizes = [8, 8], strides = [1, 1]} : vector<8x32xf32> to vector<8x8xf32>
    %427 = vector.extract_strided_slice %372 {offsets = [0, 16], sizes = [8, 8], strides = [1, 1]} : vector<8x32xf32> to vector<8x8xf32>
    %428 = tpu.transpose %426, [1, 0] : vector<8x8xf32> -> vector<8x8xf32>
    %cst_165 = arith.constant dense<0.000000e+00> : vector<8x8xf32>
    %429 = tpu.matmul %425, %428, %cst_165 {dimension_numbers = #tpu.dot_dimension_numbers<[1], [0], [0], [1], [0, 0, 1, 1], [], []>} : vector<8x8xf32>, vector<8x8xf32>, vector<8x8xf32> -> vector<8x8xf32>
    %cst_166 = arith.constant 0.353553385 : f32
    %430 = vector.broadcast %cst_166 : f32 to vector<8x8xf32>
    %431 = arith.mulf %429, %430 : vector<8x8xf32>
    %432 = vector.broadcast %373 : vector<1x8xf32> to vector<8x8xf32>
    %433 = arith.addf %431, %432 : vector<8x8xf32>
    %cst_167 = arith.constant dense<0xFF800000> : vector<8xf32>
    %434 = vector.multi_reduction <maximumf>, %433, %cst_167 [1] : vector<8x8xf32> to vector<8xf32>
    %435 = vector.shape_cast %434 : vector<8xf32> to vector<8x1xf32>
    %436 = vector.broadcast %435 : vector<8x1xf32> to vector<8x8xf32>
    %437 = arith.subf %433, %436 : vector<8x8xf32>
    %438 = math.exp %437 : vector<8x8xf32>
    %cst_168 = arith.constant dense<0.000000e+00> : vector<8xf32>
    %439 = vector.multi_reduction <add>, %438, %cst_168 [1] : vector<8x8xf32> to vector<8xf32>
    %440 = vector.shape_cast %439 : vector<8xf32> to vector<8x1xf32>
    %441 = tpu.reciprocal %440 {approx = true} : vector<8x1xf32> -> vector<8x1xf32>
    %442 = vector.broadcast %441 : vector<8x1xf32> to vector<8x8xf32>
    %443 = arith.mulf %438, %442 : vector<8x8xf32>
    %cst_169 = arith.constant dense<0.000000e+00> : vector<8x8xf32>
    %444 = tpu.matmul %443, %427, %cst_169 {dimension_numbers = #tpu.dot_dimension_numbers<[1], [0], [0], [1], [0, 0, 1, 1], [], []>} : vector<8x8xf32>, vector<8x8xf32>, vector<8x8xf32> -> vector<8x8xf32>
    %445 = vector.extract_strided_slice %343 {offsets = [16, 0], sizes = [8, 32], strides = [1, 1]} : vector<32x32xf32> to vector<8x32xf32>
    %446 = arith.truncf %444 : vector<8x8xf32> to vector<8x8xbf16>
    %447 = arith.truncf %445 : vector<8x32xf32> to vector<8x32xbf16>
    %cst_170 = arith.constant dense<0.000000e+00> : vector<8x32xf32>
    %448 = tpu.matmul %446, %447, %cst_170 {dimension_numbers = #tpu.dot_dimension_numbers<[1], [0], [0], [1], [0, 0, 1, 1], [], []>} : vector<8x8xbf16>, vector<8x32xbf16>, vector<8x32xf32> -> vector<8x32xf32>
    %449 = arith.addf %424, %448 : vector<8x32xf32>
    %450 = vector.extract_strided_slice %370 {offsets = [0, 24], sizes = [8, 8], strides = [1, 1]} : vector<8x32xf32> to vector<8x8xf32>
    %451 = vector.extract_strided_slice %371 {offsets = [0, 24], sizes = [8, 8], strides = [1, 1]} : vector<8x32xf32> to vector<8x8xf32>
    %452 = vector.extract_strided_slice %372 {offsets = [0, 24], sizes = [8, 8], strides = [1, 1]} : vector<8x32xf32> to vector<8x8xf32>
    %453 = tpu.transpose %451, [1, 0] : vector<8x8xf32> -> vector<8x8xf32>
    %cst_171 = arith.constant dense<0.000000e+00> : vector<8x8xf32>
    %454 = tpu.matmul %450, %453, %cst_171 {dimension_numbers = #tpu.dot_dimension_numbers<[1], [0], [0], [1], [0, 0, 1, 1], [], []>} : vector<8x8xf32>, vector<8x8xf32>, vector<8x8xf32> -> vector<8x8xf32>
    %cst_172 = arith.constant 0.353553385 : f32
    %455 = vector.broadcast %cst_172 : f32 to vector<8x8xf32>
    %456 = arith.mulf %454, %455 : vector<8x8xf32>
    %457 = vector.broadcast %373 : vector<1x8xf32> to vector<8x8xf32>
    %458 = arith.addf %456, %457 : vector<8x8xf32>
    %cst_173 = arith.constant dense<0xFF800000> : vector<8xf32>
    %459 = vector.multi_reduction <maximumf>, %458, %cst_173 [1] : vector<8x8xf32> to vector<8xf32>
    %460 = vector.shape_cast %459 : vector<8xf32> to vector<8x1xf32>
    %461 = vector.broadcast %460 : vector<8x1xf32> to vector<8x8xf32>
    %462 = arith.subf %458, %461 : vector<8x8xf32>
    %463 = math.exp %462 : vector<8x8xf32>
    %cst_174 = arith.constant dense<0.000000e+00> : vector<8xf32>
    %464 = vector.multi_reduction <add>, %463, %cst_174 [1] : vector<8x8xf32> to vector<8xf32>
    %465 = vector.shape_cast %464 : vector<8xf32> to vector<8x1xf32>
    %466 = tpu.reciprocal %465 {approx = true} : vector<8x1xf32> -> vector<8x1xf32>
    %467 = vector.broadcast %466 : vector<8x1xf32> to vector<8x8xf32>
    %468 = arith.mulf %463, %467 : vector<8x8xf32>
    %cst_175 = arith.constant dense<0.000000e+00> : vector<8x8xf32>
    %469 = tpu.matmul %468, %452, %cst_175 {dimension_numbers = #tpu.dot_dimension_numbers<[1], [0], [0], [1], [0, 0, 1, 1], [], []>} : vector<8x8xf32>, vector<8x8xf32>, vector<8x8xf32> -> vector<8x8xf32>
    %470 = vector.extract_strided_slice %343 {offsets = [24, 0], sizes = [8, 32], strides = [1, 1]} : vector<32x32xf32> to vector<8x32xf32>
    %471 = arith.truncf %469 : vector<8x8xf32> to vector<8x8xbf16>
    %472 = arith.truncf %470 : vector<8x32xf32> to vector<8x32xbf16>
    %cst_176 = arith.constant dense<0.000000e+00> : vector<8x32xf32>
    %473 = tpu.matmul %471, %472, %cst_176 {dimension_numbers = #tpu.dot_dimension_numbers<[1], [0], [0], [1], [0, 0, 1, 1], [], []>} : vector<8x8xbf16>, vector<8x32xbf16>, vector<8x32xf32> -> vector<8x32xf32>
    %474 = arith.addf %449, %473 : vector<8x32xf32>
    %475 = vector.extract_strided_slice %367 {offsets = [8, 0], sizes = [8, 32], strides = [1, 1]} : vector<16x32xf32> to vector<8x32xf32>
    %476 = vector.extract_strided_slice %368 {offsets = [8, 0], sizes = [8, 32], strides = [1, 1]} : vector<16x32xf32> to vector<8x32xf32>
    %477 = vector.extract_strided_slice %369 {offsets = [8, 0], sizes = [8, 32], strides = [1, 1]} : vector<16x32xf32> to vector<8x32xf32>
    %478 = vector.extract_strided_slice %5 {offsets = [1, 0], sizes = [1, 8], strides = [1, 1]} : vector<2x8xf32> to vector<1x8xf32>
    %cst_177 = arith.constant 0.000000e+00 : f32
    %479 = vector.broadcast %cst_177 : f32 to vector<8x32xf32>
    %480 = vector.extract_strided_slice %475 {offsets = [0, 0], sizes = [8, 8], strides = [1, 1]} : vector<8x32xf32> to vector<8x8xf32>
    %481 = vector.extract_strided_slice %476 {offsets = [0, 0], sizes = [8, 8], strides = [1, 1]} : vector<8x32xf32> to vector<8x8xf32>
    %482 = vector.extract_strided_slice %477 {offsets = [0, 0], sizes = [8, 8], strides = [1, 1]} : vector<8x32xf32> to vector<8x8xf32>
    %483 = tpu.transpose %481, [1, 0] : vector<8x8xf32> -> vector<8x8xf32>
    %cst_178 = arith.constant dense<0.000000e+00> : vector<8x8xf32>
    %484 = tpu.matmul %480, %483, %cst_178 {dimension_numbers = #tpu.dot_dimension_numbers<[1], [0], [0], [1], [0, 0, 1, 1], [], []>} : vector<8x8xf32>, vector<8x8xf32>, vector<8x8xf32> -> vector<8x8xf32>
    %cst_179 = arith.constant 0.353553385 : f32
    %485 = vector.broadcast %cst_179 : f32 to vector<8x8xf32>
    %486 = arith.mulf %484, %485 : vector<8x8xf32>
    %487 = vector.broadcast %478 : vector<1x8xf32> to vector<8x8xf32>
    %488 = arith.addf %486, %487 : vector<8x8xf32>
    %cst_180 = arith.constant dense<0xFF800000> : vector<8xf32>
    %489 = vector.multi_reduction <maximumf>, %488, %cst_180 [1] : vector<8x8xf32> to vector<8xf32>
    %490 = vector.shape_cast %489 : vector<8xf32> to vector<8x1xf32>
    %491 = vector.broadcast %490 : vector<8x1xf32> to vector<8x8xf32>
    %492 = arith.subf %488, %491 : vector<8x8xf32>
    %493 = math.exp %492 : vector<8x8xf32>
    %cst_181 = arith.constant dense<0.000000e+00> : vector<8xf32>
    %494 = vector.multi_reduction <add>, %493, %cst_181 [1] : vector<8x8xf32> to vector<8xf32>
    %495 = vector.shape_cast %494 : vector<8xf32> to vector<8x1xf32>
    %496 = tpu.reciprocal %495 {approx = true} : vector<8x1xf32> -> vector<8x1xf32>
    %497 = vector.broadcast %496 : vector<8x1xf32> to vector<8x8xf32>
    %498 = arith.mulf %493, %497 : vector<8x8xf32>
    %cst_182 = arith.constant dense<0.000000e+00> : vector<8x8xf32>
    %499 = tpu.matmul %498, %482, %cst_182 {dimension_numbers = #tpu.dot_dimension_numbers<[1], [0], [0], [1], [0, 0, 1, 1], [], []>} : vector<8x8xf32>, vector<8x8xf32>, vector<8x8xf32> -> vector<8x8xf32>
    %500 = vector.extract_strided_slice %343 {offsets = [0, 0], sizes = [8, 32], strides = [1, 1]} : vector<32x32xf32> to vector<8x32xf32>
    %501 = arith.truncf %499 : vector<8x8xf32> to vector<8x8xbf16>
    %502 = arith.truncf %500 : vector<8x32xf32> to vector<8x32xbf16>
    %cst_183 = arith.constant dense<0.000000e+00> : vector<8x32xf32>
    %503 = tpu.matmul %501, %502, %cst_183 {dimension_numbers = #tpu.dot_dimension_numbers<[1], [0], [0], [1], [0, 0, 1, 1], [], []>} : vector<8x8xbf16>, vector<8x32xbf16>, vector<8x32xf32> -> vector<8x32xf32>
    %504 = arith.addf %479, %503 : vector<8x32xf32>
    %505 = vector.extract_strided_slice %475 {offsets = [0, 8], sizes = [8, 8], strides = [1, 1]} : vector<8x32xf32> to vector<8x8xf32>
    %506 = vector.extract_strided_slice %476 {offsets = [0, 8], sizes = [8, 8], strides = [1, 1]} : vector<8x32xf32> to vector<8x8xf32>
    %507 = vector.extract_strided_slice %477 {offsets = [0, 8], sizes = [8, 8], strides = [1, 1]} : vector<8x32xf32> to vector<8x8xf32>
    %508 = tpu.transpose %506, [1, 0] : vector<8x8xf32> -> vector<8x8xf32>
    %cst_184 = arith.constant dense<0.000000e+00> : vector<8x8xf32>
    %509 = tpu.matmul %505, %508, %cst_184 {dimension_numbers = #tpu.dot_dimension_numbers<[1], [0], [0], [1], [0, 0, 1, 1], [], []>} : vector<8x8xf32>, vector<8x8xf32>, vector<8x8xf32> -> vector<8x8xf32>
    %cst_185 = arith.constant 0.353553385 : f32
    %510 = vector.broadcast %cst_185 : f32 to vector<8x8xf32>
    %511 = arith.mulf %509, %510 : vector<8x8xf32>
    %512 = vector.broadcast %478 : vector<1x8xf32> to vector<8x8xf32>
    %513 = arith.addf %511, %512 : vector<8x8xf32>
    %cst_186 = arith.constant dense<0xFF800000> : vector<8xf32>
    %514 = vector.multi_reduction <maximumf>, %513, %cst_186 [1] : vector<8x8xf32> to vector<8xf32>
    %515 = vector.shape_cast %514 : vector<8xf32> to vector<8x1xf32>
    %516 = vector.broadcast %515 : vector<8x1xf32> to vector<8x8xf32>
    %517 = arith.subf %513, %516 : vector<8x8xf32>
    %518 = math.exp %517 : vector<8x8xf32>
    %cst_187 = arith.constant dense<0.000000e+00> : vector<8xf32>
    %519 = vector.multi_reduction <add>, %518, %cst_187 [1] : vector<8x8xf32> to vector<8xf32>
    %520 = vector.shape_cast %519 : vector<8xf32> to vector<8x1xf32>
    %521 = tpu.reciprocal %520 {approx = true} : vector<8x1xf32> -> vector<8x1xf32>
    %522 = vector.broadcast %521 : vector<8x1xf32> to vector<8x8xf32>
    %523 = arith.mulf %518, %522 : vector<8x8xf32>
    %cst_188 = arith.constant dense<0.000000e+00> : vector<8x8xf32>
    %524 = tpu.matmul %523, %507, %cst_188 {dimension_numbers = #tpu.dot_dimension_numbers<[1], [0], [0], [1], [0, 0, 1, 1], [], []>} : vector<8x8xf32>, vector<8x8xf32>, vector<8x8xf32> -> vector<8x8xf32>
    %525 = vector.extract_strided_slice %343 {offsets = [8, 0], sizes = [8, 32], strides = [1, 1]} : vector<32x32xf32> to vector<8x32xf32>
    %526 = arith.truncf %524 : vector<8x8xf32> to vector<8x8xbf16>
    %527 = arith.truncf %525 : vector<8x32xf32> to vector<8x32xbf16>
    %cst_189 = arith.constant dense<0.000000e+00> : vector<8x32xf32>
    %528 = tpu.matmul %526, %527, %cst_189 {dimension_numbers = #tpu.dot_dimension_numbers<[1], [0], [0], [1], [0, 0, 1, 1], [], []>} : vector<8x8xbf16>, vector<8x32xbf16>, vector<8x32xf32> -> vector<8x32xf32>
    %529 = arith.addf %504, %528 : vector<8x32xf32>
    %530 = vector.extract_strided_slice %475 {offsets = [0, 16], sizes = [8, 8], strides = [1, 1]} : vector<8x32xf32> to vector<8x8xf32>
    %531 = vector.extract_strided_slice %476 {offsets = [0, 16], sizes = [8, 8], strides = [1, 1]} : vector<8x32xf32> to vector<8x8xf32>
    %532 = vector.extract_strided_slice %477 {offsets = [0, 16], sizes = [8, 8], strides = [1, 1]} : vector<8x32xf32> to vector<8x8xf32>
    %533 = tpu.transpose %531, [1, 0] : vector<8x8xf32> -> vector<8x8xf32>
    %cst_190 = arith.constant dense<0.000000e+00> : vector<8x8xf32>
    %534 = tpu.matmul %530, %533, %cst_190 {dimension_numbers = #tpu.dot_dimension_numbers<[1], [0], [0], [1], [0, 0, 1, 1], [], []>} : vector<8x8xf32>, vector<8x8xf32>, vector<8x8xf32> -> vector<8x8xf32>
    %cst_191 = arith.constant 0.353553385 : f32
    %535 = vector.broadcast %cst_191 : f32 to vector<8x8xf32>
    %536 = arith.mulf %534, %535 : vector<8x8xf32>
    %537 = vector.broadcast %478 : vector<1x8xf32> to vector<8x8xf32>
    %538 = arith.addf %536, %537 : vector<8x8xf32>
    %cst_192 = arith.constant dense<0xFF800000> : vector<8xf32>
    %539 = vector.multi_reduction <maximumf>, %538, %cst_192 [1] : vector<8x8xf32> to vector<8xf32>
    %540 = vector.shape_cast %539 : vector<8xf32> to vector<8x1xf32>
    %541 = vector.broadcast %540 : vector<8x1xf32> to vector<8x8xf32>
    %542 = arith.subf %538, %541 : vector<8x8xf32>
    %543 = math.exp %542 : vector<8x8xf32>
    %cst_193 = arith.constant dense<0.000000e+00> : vector<8xf32>
    %544 = vector.multi_reduction <add>, %543, %cst_193 [1] : vector<8x8xf32> to vector<8xf32>
    %545 = vector.shape_cast %544 : vector<8xf32> to vector<8x1xf32>
    %546 = tpu.reciprocal %545 {approx = true} : vector<8x1xf32> -> vector<8x1xf32>
    %547 = vector.broadcast %546 : vector<8x1xf32> to vector<8x8xf32>
    %548 = arith.mulf %543, %547 : vector<8x8xf32>
    %cst_194 = arith.constant dense<0.000000e+00> : vector<8x8xf32>
    %549 = tpu.matmul %548, %532, %cst_194 {dimension_numbers = #tpu.dot_dimension_numbers<[1], [0], [0], [1], [0, 0, 1, 1], [], []>} : vector<8x8xf32>, vector<8x8xf32>, vector<8x8xf32> -> vector<8x8xf32>
    %550 = vector.extract_strided_slice %343 {offsets = [16, 0], sizes = [8, 32], strides = [1, 1]} : vector<32x32xf32> to vector<8x32xf32>
    %551 = arith.truncf %549 : vector<8x8xf32> to vector<8x8xbf16>
    %552 = arith.truncf %550 : vector<8x32xf32> to vector<8x32xbf16>
    %cst_195 = arith.constant dense<0.000000e+00> : vector<8x32xf32>
    %553 = tpu.matmul %551, %552, %cst_195 {dimension_numbers = #tpu.dot_dimension_numbers<[1], [0], [0], [1], [0, 0, 1, 1], [], []>} : vector<8x8xbf16>, vector<8x32xbf16>, vector<8x32xf32> -> vector<8x32xf32>
    %554 = arith.addf %529, %553 : vector<8x32xf32>
    %555 = vector.extract_strided_slice %475 {offsets = [0, 24], sizes = [8, 8], strides = [1, 1]} : vector<8x32xf32> to vector<8x8xf32>
    %556 = vector.extract_strided_slice %476 {offsets = [0, 24], sizes = [8, 8], strides = [1, 1]} : vector<8x32xf32> to vector<8x8xf32>
    %557 = vector.extract_strided_slice %477 {offsets = [0, 24], sizes = [8, 8], strides = [1, 1]} : vector<8x32xf32> to vector<8x8xf32>
    %558 = tpu.transpose %556, [1, 0] : vector<8x8xf32> -> vector<8x8xf32>
    %cst_196 = arith.constant dense<0.000000e+00> : vector<8x8xf32>
    %559 = tpu.matmul %555, %558, %cst_196 {dimension_numbers = #tpu.dot_dimension_numbers<[1], [0], [0], [1], [0, 0, 1, 1], [], []>} : vector<8x8xf32>, vector<8x8xf32>, vector<8x8xf32> -> vector<8x8xf32>
    %cst_197 = arith.constant 0.353553385 : f32
    %560 = vector.broadcast %cst_197 : f32 to vector<8x8xf32>
    %561 = arith.mulf %559, %560 : vector<8x8xf32>
    %562 = vector.broadcast %478 : vector<1x8xf32> to vector<8x8xf32>
    %563 = arith.addf %561, %562 : vector<8x8xf32>
    %cst_198 = arith.constant dense<0xFF800000> : vector<8xf32>
    %564 = vector.multi_reduction <maximumf>, %563, %cst_198 [1] : vector<8x8xf32> to vector<8xf32>
    %565 = vector.shape_cast %564 : vector<8xf32> to vector<8x1xf32>
    %566 = vector.broadcast %565 : vector<8x1xf32> to vector<8x8xf32>
    %567 = arith.subf %563, %566 : vector<8x8xf32>
    %568 = math.exp %567 : vector<8x8xf32>
    %cst_199 = arith.constant dense<0.000000e+00> : vector<8xf32>
    %569 = vector.multi_reduction <add>, %568, %cst_199 [1] : vector<8x8xf32> to vector<8xf32>
    %570 = vector.shape_cast %569 : vector<8xf32> to vector<8x1xf32>
    %571 = tpu.reciprocal %570 {approx = true} : vector<8x1xf32> -> vector<8x1xf32>
    %572 = vector.broadcast %571 : vector<8x1xf32> to vector<8x8xf32>
    %573 = arith.mulf %568, %572 : vector<8x8xf32>
    %cst_200 = arith.constant dense<0.000000e+00> : vector<8x8xf32>
    %574 = tpu.matmul %573, %557, %cst_200 {dimension_numbers = #tpu.dot_dimension_numbers<[1], [0], [0], [1], [0, 0, 1, 1], [], []>} : vector<8x8xf32>, vector<8x8xf32>, vector<8x8xf32> -> vector<8x8xf32>
    %575 = vector.extract_strided_slice %343 {offsets = [24, 0], sizes = [8, 32], strides = [1, 1]} : vector<32x32xf32> to vector<8x32xf32>
    %576 = arith.truncf %574 : vector<8x8xf32> to vector<8x8xbf16>
    %577 = arith.truncf %575 : vector<8x32xf32> to vector<8x32xbf16>
    %cst_201 = arith.constant dense<0.000000e+00> : vector<8x32xf32>
    %578 = tpu.matmul %576, %577, %cst_201 {dimension_numbers = #tpu.dot_dimension_numbers<[1], [0], [0], [1], [0, 0, 1, 1], [], []>} : vector<8x8xbf16>, vector<8x32xbf16>, vector<8x32xf32> -> vector<8x32xf32>
    %579 = arith.addf %554, %578 : vector<8x32xf32>
    %580 = tpu.concatenate %474, %579 in 0 : vector<8x32xf32>, vector<8x32xf32> -> vector<16x32xf32>
    %581 = vector.broadcast %345 : vector<1x32xf32> to vector<16x32xf32>
    %582 = arith.addf %580, %581 : vector<16x32xf32>
    %583 = arith.addf %337, %582 : vector<16x32xf32>
    %cst_202 = arith.constant dense<0.000000e+00> : vector<16xf32>
    %584 = vector.multi_reduction <add>, %583, %cst_202 [1] : vector<16x32xf32> to vector<16xf32>
    %585 = vector.shape_cast %584 : vector<16xf32> to vector<16x1xf32>
    %cst_203 = arith.constant 3.200000e+01 : f32
    %586 = vector.broadcast %cst_203 : f32 to vector<16x1xf32>
    %587 = arith.divf %585, %586 : vector<16x1xf32>
    %588 = vector.broadcast %587 : vector<16x1xf32> to vector<16x32xf32>
    %589 = arith.subf %583, %588 : vector<16x32xf32>
    %590 = arith.mulf %589, %589 : vector<16x32xf32>
    %cst_204 = arith.constant dense<0.000000e+00> : vector<16xf32>
    %591 = vector.multi_reduction <add>, %590, %cst_204 [1] : vector<16x32xf32> to vector<16xf32>
    %592 = vector.shape_cast %591 : vector<16xf32> to vector<16x1xf32>
    %cst_205 = arith.constant 3.200000e+01 : f32
    %593 = vector.broadcast %cst_205 : f32 to vector<16x1xf32>
    %594 = arith.divf %592, %593 : vector<16x1xf32>
    %cst_206 = arith.constant 9.99999996E-13 : f32
    %595 = vector.broadcast %cst_206 : f32 to vector<16x1xf32>
    %596 = arith.addf %594, %595 : vector<16x1xf32>
    %597 = math.rsqrt %596 : vector<16x1xf32>
    %598 = vector.broadcast %597 : vector<16x1xf32> to vector<16x32xf32>
    %599 = arith.mulf %589, %598 : vector<16x32xf32>
    %600 = vector.broadcast %347 : vector<1x32xf32> to vector<16x32xf32>
    %601 = arith.mulf %599, %600 : vector<16x32xf32>
    %602 = vector.broadcast %349 : vector<1x32xf32> to vector<16x32xf32>
    %603 = arith.addf %601, %602 : vector<16x32xf32>
    %604 = arith.truncf %603 : vector<16x32xf32> to vector<16x32xbf16>
    %605 = arith.truncf %351 : vector<32x64xf32> to vector<32x64xbf16>
    %cst_207 = arith.constant dense<0.000000e+00> : vector<16x64xf32>
    %606 = tpu.matmul %604, %605, %cst_207 {dimension_numbers = #tpu.dot_dimension_numbers<[1], [0], [0], [1], [0, 0, 1, 1], [], []>} : vector<16x32xbf16>, vector<32x64xbf16>, vector<16x64xf32> -> vector<16x64xf32>
    %607 = vector.broadcast %353 : vector<1x64xf32> to vector<16x64xf32>
    %608 = arith.addf %606, %607 : vector<16x64xf32>
    %609 = arith.mulf %608, %608 : vector<16x64xf32>
    %610 = arith.mulf %608, %609 : vector<16x64xf32>
    %cst_208 = arith.constant 4.471500e-02 : f32
    %611 = vector.broadcast %cst_208 : f32 to vector<16x64xf32>
    %612 = arith.mulf %611, %610 : vector<16x64xf32>
    %613 = arith.addf %608, %612 : vector<16x64xf32>
    %cst_209 = arith.constant 0.797884583 : f32
    %614 = vector.broadcast %cst_209 : f32 to vector<16x64xf32>
    %615 = arith.mulf %614, %613 : vector<16x64xf32>
    %616 = math.tanh %615 : vector<16x64xf32>
    %cst_210 = arith.constant 1.000000e+00 : f32
    %617 = vector.broadcast %cst_210 : f32 to vector<16x64xf32>
    %618 = arith.addf %617, %616 : vector<16x64xf32>
    %cst_211 = arith.constant 5.000000e-01 : f32
    %619 = vector.broadcast %cst_211 : f32 to vector<16x64xf32>
    %620 = arith.mulf %619, %618 : vector<16x64xf32>
    %621 = arith.mulf %608, %620 : vector<16x64xf32>
    %622 = arith.truncf %621 : vector<16x64xf32> to vector<16x64xbf16>
    %623 = arith.truncf %355 : vector<64x32xf32> to vector<64x32xbf16>
    %cst_212 = arith.constant dense<0.000000e+00> : vector<16x32xf32>
    %624 = tpu.matmul %622, %623, %cst_212 {dimension_numbers = #tpu.dot_dimension_numbers<[1], [0], [0], [1], [0, 0, 1, 1], [], []>} : vector<16x64xbf16>, vector<64x32xbf16>, vector<16x32xf32> -> vector<16x32xf32>
    %625 = vector.broadcast %357 : vector<1x32xf32> to vector<16x32xf32>
    %626 = arith.addf %624, %625 : vector<16x32xf32>
    %627 = arith.addf %603, %626 : vector<16x32xf32>
    %cst_213 = arith.constant dense<0.000000e+00> : vector<16xf32>
    %628 = vector.multi_reduction <add>, %627, %cst_213 [1] : vector<16x32xf32> to vector<16xf32>
    %629 = vector.shape_cast %628 : vector<16xf32> to vector<16x1xf32>
    %cst_214 = arith.constant 3.200000e+01 : f32
    %630 = vector.broadcast %cst_214 : f32 to vector<16x1xf32>
    %631 = arith.divf %629, %630 : vector<16x1xf32>
    %632 = vector.broadcast %631 : vector<16x1xf32> to vector<16x32xf32>
    %633 = arith.subf %627, %632 : vector<16x32xf32>
    %634 = arith.mulf %633, %633 : vector<16x32xf32>
    %cst_215 = arith.constant dense<0.000000e+00> : vector<16xf32>
    %635 = vector.multi_reduction <add>, %634, %cst_215 [1] : vector<16x32xf32> to vector<16xf32>
    %636 = vector.shape_cast %635 : vector<16xf32> to vector<16x1xf32>
    %cst_216 = arith.constant 3.200000e+01 : f32
    %637 = vector.broadcast %cst_216 : f32 to vector<16x1xf32>
    %638 = arith.divf %636, %637 : vector<16x1xf32>
    %cst_217 = arith.constant 9.99999996E-13 : f32
    %639 = vector.broadcast %cst_217 : f32 to vector<16x1xf32>
    %640 = arith.addf %638, %639 : vector<16x1xf32>
    %641 = math.rsqrt %640 : vector<16x1xf32>
    %642 = vector.broadcast %641 : vector<16x1xf32> to vector<16x32xf32>
    %643 = arith.mulf %633, %642 : vector<16x32xf32>
    %644 = vector.broadcast %359 : vector<1x32xf32> to vector<16x32xf32>
    %645 = arith.mulf %643, %644 : vector<16x32xf32>
    %646 = vector.broadcast %361 : vector<1x32xf32> to vector<16x32xf32>
    %647 = arith.addf %645, %646 : vector<16x32xf32>
    %648 = vector.extract_strided_slice %1 {offsets = [0, 0], sizes = [1, 8], strides = [1, 1]} : vector<2x8xf32> to vector<1x8xf32>
    %649 = vector.extract_strided_slice %647 {offsets = [0, 0], sizes = [8, 32], strides = [1, 1]} : vector<16x32xf32> to vector<8x32xf32>
    %cst_218 = arith.constant dense<0.000000e+00> : vector<1x32xf32>
    %650 = tpu.matmul %648, %649, %cst_218 {dimension_numbers = #tpu.dot_dimension_numbers<[1], [0], [0], [1], [0, 0, 1, 1], [], []>} : vector<1x8xf32>, vector<8x32xf32>, vector<1x32xf32> -> vector<1x32xf32>
    %cst_219 = arith.constant dense<0.000000e+00> : vector<1xf32>
    %651 = vector.multi_reduction <add>, %648, %cst_219 [1] : vector<1x8xf32> to vector<1xf32>
    %652 = vector.shape_cast %651 : vector<1xf32> to vector<1x1xf32>
    %cst_220 = arith.constant 9.99999971E-10 : f32
    %653 = vector.broadcast %cst_220 : f32 to vector<1x1xf32>
    %654 = arith.maximumf %652, %653 : vector<1x1xf32>
    %655 = tpu.reciprocal %654 {approx = true} : vector<1x1xf32> -> vector<1x1xf32>
    %656 = vector.broadcast %655 : vector<1x1xf32> to vector<1x32xf32>
    %657 = arith.mulf %650, %656 : vector<1x32xf32>
    %658 = vector.extract_strided_slice %1 {offsets = [1, 0], sizes = [1, 8], strides = [1, 1]} : vector<2x8xf32> to vector<1x8xf32>
    %659 = vector.extract_strided_slice %647 {offsets = [8, 0], sizes = [8, 32], strides = [1, 1]} : vector<16x32xf32> to vector<8x32xf32>
    %cst_221 = arith.constant dense<0.000000e+00> : vector<1x32xf32>
    %660 = tpu.matmul %658, %659, %cst_221 {dimension_numbers = #tpu.dot_dimension_numbers<[1], [0], [0], [1], [0, 0, 1, 1], [], []>} : vector<1x8xf32>, vector<8x32xf32>, vector<1x32xf32> -> vector<1x32xf32>
    %cst_222 = arith.constant dense<0.000000e+00> : vector<1xf32>
    %661 = vector.multi_reduction <add>, %658, %cst_222 [1] : vector<1x8xf32> to vector<1xf32>
    %662 = vector.shape_cast %661 : vector<1xf32> to vector<1x1xf32>
    %cst_223 = arith.constant 9.99999971E-10 : f32
    %663 = vector.broadcast %cst_223 : f32 to vector<1x1xf32>
    %664 = arith.maximumf %662, %663 : vector<1x1xf32>
    %665 = tpu.reciprocal %664 {approx = true} : vector<1x1xf32> -> vector<1x1xf32>
    %666 = vector.broadcast %665 : vector<1x1xf32> to vector<1x32xf32>
    %667 = arith.mulf %660, %666 : vector<1x32xf32>
    %668 = tpu.concatenate %657, %667 in 0 : vector<1x32xf32>, vector<1x32xf32> -> vector<2x32xf32>
    %c0_224 = arith.constant 0 : index
    %c0_225 = arith.constant 0 : index
    %669 = vector.load %arg16[%c0_224, %c0_225] : memref<32x2xf32, #tpu.memory_space<vmem>>, vector<32x2xf32>
    %c0_226 = arith.constant 0 : index
    %c0_227 = arith.constant 0 : index
    %670 = vector.load %arg17[%c0_226, %c0_227] : memref<1x2xf32, #tpu.memory_space<vmem>>, vector<1x2xf32>
    %671 = arith.truncf %668 : vector<2x32xf32> to vector<2x32xbf16>
    %672 = arith.truncf %669 : vector<32x2xf32> to vector<32x2xbf16>
    %cst_228 = arith.constant dense<0.000000e+00> : vector<2x2xf32>
    %673 = tpu.matmul %671, %672, %cst_228 {dimension_numbers = #tpu.dot_dimension_numbers<[1], [0], [0], [1], [0, 0, 1, 1], [], []>} : vector<2x32xbf16>, vector<32x2xbf16>, vector<2x2xf32> -> vector<2x2xf32>
    %674 = vector.broadcast %670 : vector<1x2xf32> to vector<2x2xf32>
    %675 = arith.addf %673, %674 : vector<2x2xf32>
    %c0_229 = arith.constant 0 : index
    %c0_230 = arith.constant 0 : index
    %676 = vector.load %arg18[%c0_229, %c0_230] : memref<2x2xf32, #tpu.memory_space<vmem>>, vector<2x2xf32>
    tpu.vector_store %arg18[%c0_229, %c0_230], %675 {strides = array<i32>} : memref<2x2xf32, #tpu.memory_space<vmem>>, vector<2x2xf32>,
    return
  }
}

</mosaic_0001>

<llo_original>
// kernel: one_to_one_forward.1
$region0: #{one_to_one_forward.1}
  #allocation0 [shape = 'u32[]', space=smem, size = 0x4, offset = 0x4, fixed_abs, tag = 'smem constant byte address 0x4 - core index']
  #allocation1 [shape = 'u32[144,128]{1,0:T(1,128)}', space=vmem, size = 0x12000, scoped, tag = 'internal scratch']
  %s0 = inlined_call_operand.vmem [shape: f32[16,32], index: 0, kind: input, shape index: {}]
  %s1 = inlined_call_operand.vmem [shape: f32[2,8], index: 1, kind: input, shape index: {}]
  %s2 = inlined_call_operand.vmem [shape: f32[1,32], index: 2, kind: input, shape index: {}]
  %s3 = inlined_call_operand.vmem [shape: f32[1,32], index: 3, kind: input, shape index: {}]
  %s4 = inlined_call_operand.vmem [shape: f32[2,32,96], index: 4, kind: input, shape index: {}]
  %s5 = inlined_call_operand.vmem [shape: f32[2,1,96], index: 5, kind: input, shape index: {}]
  %s6 = inlined_call_operand.vmem [shape: f32[2,32,32], index: 6, kind: input, shape index: {}]
  %s7 = inlined_call_operand.vmem [shape: f32[2,1,32], index: 7, kind: input, shape index: {}]
  %s8 = inlined_call_operand.vmem [shape: f32[2,1,32], index: 8, kind: input, shape index: {}]
  %s9 = inlined_call_operand.vmem [shape: f32[2,1,32], index: 9, kind: input, shape index: {}]
  %s10 = inlined_call_operand.vmem [shape: f32[2,32,64], index: 10, kind: input, shape index: {}]
  %s11 = inlined_call_operand.vmem [shape: f32[2,1,64], index: 11, kind: input, shape index: {}]
  %s12 = inlined_call_operand.vmem [shape: f32[2,64,32], index: 12, kind: input, shape index: {}]
  %s13 = inlined_call_operand.vmem [shape: f32[2,1,32], index: 13, kind: input, shape index: {}]
  %s14 = inlined_call_operand.vmem [shape: f32[2,1,32], index: 14, kind: input, shape index: {}]
  %s15 = inlined_call_operand.vmem [shape: f32[2,1,32], index: 15, kind: input, shape index: {}]
  %s16 = inlined_call_operand.vmem [shape: f32[32,2], index: 16, kind: input, shape index: {}]
  %s17 = inlined_call_operand.vmem [shape: f32[1,2], index: 17, kind: input, shape index: {}]
  %s18 = inlined_call_operand.hbm [shape: f32[2,2], index: 18, kind: output, shape index: {}]
  %s19 = sld [smem:[#allocation0]]
  $region82: #{one_to_one_forward.1} parent=0
    _
  %s21 = ssub.s32 1, %s19
  %s22 = scalar_select 0, %s21, %s19
  $region1: #{one_to_one_forward.1} parent=0
    #allocation2 [shape = 'u8[1024]{0}', space=vmem, size = 0x400, scoped, tag = 'output window, operand 0, single buffered']
    #allocation3 [shape = 's32[1]{0}', space=sflag, size = 0x4, scoped, tag = 'scoped memory for one_to_one_forward.1']
    %23 = vsyncpa [#allocation3], 0
    // Predicated region
    $region2: #{one_to_one_forward.1} parent=1 // pred_check
      _
    $region3: #{one_to_one_forward.1} parent=1 // pred_check_branch
      %25 = sbr.rel (0) target = $region5
    $region4: #{one_to_one_forward.1} parent=1 // pred_region
      _
    $region5: #{one_to_one_forward.1} parent=1 // pred_fallthru
      _
    // Predicated region
    $region6: #{one_to_one_forward.1} parent=1 // pred_check
      _
    $region7: #{one_to_one_forward.1} parent=1 // pred_check_branch
      %27 = sbr.rel (0) target = $region9
    $region8: #{one_to_one_forward.1} parent=1 // pred_region
      _
    $region9: #{one_to_one_forward.1} parent=1 // pred_fallthru
      _
    // Predicated region
    $region10: #{one_to_one_forward.1} parent=1 // pred_check
      _
    $region11: #{one_to_one_forward.1} parent=1 // pred_check_branch
      %29 = sbr.rel (0) target = $region13
    $region12: #{one_to_one_forward.1} parent=1 // pred_region
      _
    $region13: #{one_to_one_forward.1} parent=1 // pred_fallthru
      _
    // Predicated region
    $region14: #{one_to_one_forward.1} parent=1 // pred_check
      _
    $region15: #{one_to_one_forward.1} parent=1 // pred_check_branch
      %31 = sbr.rel (0) target = $region17
    $region16: #{one_to_one_forward.1} parent=1 // pred_region
      _
    $region17: #{one_to_one_forward.1} parent=1 // pred_fallthru
      _
    // Predicated region
    $region18: #{one_to_one_forward.1} parent=1 // pred_check
      _
    $region19: #{one_to_one_forward.1} parent=1 // pred_check_branch
      %33 = sbr.rel (0) target = $region21
    $region20: #{one_to_one_forward.1} parent=1 // pred_region
      _
    $region21: #{one_to_one_forward.1} parent=1 // pred_fallthru
      _
    // Predicated region
    $region22: #{one_to_one_forward.1} parent=1 // pred_check
      _
    $region23: #{one_to_one_forward.1} parent=1 // pred_check_branch
      %35 = sbr.rel (0) target = $region25
    $region24: #{one_to_one_forward.1} parent=1 // pred_region
      _
    $region25: #{one_to_one_forward.1} parent=1 // pred_fallthru
      _
    // Predicated region
    $region26: #{one_to_one_forward.1} parent=1 // pred_check
      _
    $region27: #{one_to_one_forward.1} parent=1 // pred_check_branch
      %37 = sbr.rel (0) target = $region29
    $region28: #{one_to_one_forward.1} parent=1 // pred_region
      _
    $region29: #{one_to_one_forward.1} parent=1 // pred_fallthru
      _
    // Predicated region
    $region30: #{one_to_one_forward.1} parent=1 // pred_check
      _
    $region31: #{one_to_one_forward.1} parent=1 // pred_check_branch
      %39 = sbr.rel (0) target = $region33
    $region32: #{one_to_one_forward.1} parent=1 // pred_region
      _
    $region33: #{one_to_one_forward.1} parent=1 // pred_fallthru
      _
    // Predicated region
    $region34: #{one_to_one_forward.1} parent=1 // pred_check
      _
    $region35: #{one_to_one_forward.1} parent=1 // pred_check_branch
      %41 = sbr.rel (0) target = $region37
    $region36: #{one_to_one_forward.1} parent=1 // pred_region
      _
    $region37: #{one_to_one_forward.1} parent=1 // pred_fallthru
      _
    // Predicated region
    $region38: #{one_to_one_forward.1} parent=1 // pred_check
      _
    $region39: #{one_to_one_forward.1} parent=1 // pred_check_branch
      %43 = sbr.rel (0) target = $region41
    $region40: #{one_to_one_forward.1} parent=1 // pred_region
      _
    $region41: #{one_to_one_forward.1} parent=1 // pred_fallthru
      _
    // Predicated region
    $region42: #{one_to_one_forward.1} parent=1 // pred_check
      _
    $region43: #{one_to_one_forward.1} parent=1 // pred_check_branch
      %45 = sbr.rel (0) target = $region45
    $region44: #{one_to_one_forward.1} parent=1 // pred_region
      _
    $region45: #{one_to_one_forward.1} parent=1 // pred_fallthru
      _
    // Predicated region
    $region46: #{one_to_one_forward.1} parent=1 // pred_check
      _
    $region47: #{one_to_one_forward.1} parent=1 // pred_check_branch
      %47 = sbr.rel (0) target = $region49
    $region48: #{one_to_one_forward.1} parent=1 // pred_region
      _
    $region49: #{one_to_one_forward.1} parent=1 // pred_fallthru
      _
    // Predicated region
    $region50: #{one_to_one_forward.1} parent=1 // pred_check
      _
    $region51: #{one_to_one_forward.1} parent=1 // pred_check_branch
      %49 = sbr.rel (0) target = $region53
    $region52: #{one_to_one_forward.1} parent=1 // pred_region
      _
    $region53: #{one_to_one_forward.1} parent=1 // pred_fallthru
      _
    // Predicated region
    $region54: #{one_to_one_forward.1} parent=1 // pred_check
      _
    $region55: #{one_to_one_forward.1} parent=1 // pred_check_branch
      %51 = sbr.rel (0) target = $region57
    $region56: #{one_to_one_forward.1} parent=1 // pred_region
      _
    $region57: #{one_to_one_forward.1} parent=1 // pred_fallthru
      _
    // Predicated region
    $region58: #{one_to_one_forward.1} parent=1 // pred_check
      _
    $region59: #{one_to_one_forward.1} parent=1 // pred_check_branch
      %53 = sbr.rel (0) target = $region61
    $region60: #{one_to_one_forward.1} parent=1 // pred_region
      _
    $region61: #{one_to_one_forward.1} parent=1 // pred_fallthru
      _
    // Predicated region
    $region62: #{one_to_one_forward.1} parent=1 // pred_check
      _
    $region63: #{one_to_one_forward.1} parent=1 // pred_check_branch
      %55 = sbr.rel (0) target = $region65
    $region64: #{one_to_one_forward.1} parent=1 // pred_region
      _
    $region65: #{one_to_one_forward.1} parent=1 // pred_fallthru
      _
    // Predicated region
    $region66: #{one_to_one_forward.1} parent=1 // pred_check
      _
    $region67: #{one_to_one_forward.1} parent=1 // pred_check_branch
      %57 = sbr.rel (0) target = $region69
    $region68: #{one_to_one_forward.1} parent=1 // pred_region
      _
    $region69: #{one_to_one_forward.1} parent=1 // pred_fallthru
      _
    // Predicated region
    $region70: #{one_to_one_forward.1} parent=1 // pred_check
      _
    $region71: #{one_to_one_forward.1} parent=1 // pred_check_branch
      %59 = sbr.rel (0) target = $region73
    $region72: #{one_to_one_forward.1} parent=1 // pred_region
      _
    $region73: #{one_to_one_forward.1} parent=1 // pred_fallthru
      _
    %v61 = vld [vmem:[%s0] sm:$0xff]
    %v62 = vld [vmem:[%s0 + $0x8] sm:$0xff]
    %v63 = vld [vmem:[%s1] sm:$0x3]
    %v64 = vsub.f32 1.0, %v63
    %v65 = vmul.f32 %v64, -1e+09
    %v66 = vld [vmem:[%s2] sm:$0x1]
    %v67 = vld [vmem:[%s3] sm:$0x1]
    %vm68 = vcmask 261120
    %v69 = vsel %vm68, %v61, 0.0
    %70 = vadd.xlane.f32.xlu0 %v69
    %v71 = vpop.xlane.xlu0 %70
    %v72 = vsel %vm68, %v62, 0.0
    %73 = vadd.xlane.f32.xlu0 %v72
    %v74 = vpop.xlane.xlu0 %73
    %v75 = vrcp.pop 32.0
    %v76 = vmul.f32 %v71, %v75
    %v77 = vmul.f32 %v74, %v75
    %v78 = vsub.f32 %v61, %v76
    %v79 = vsub.f32 %v62, %v77
    %v80 = vmul.f32 %v78, %v78
    %v81 = vmul.f32 %v79, %v79
    %v82 = vsel %vm68, %v80, 0.0
    %83 = vadd.xlane.f32.xlu0 %v82
    %v84 = vpop.xlane.xlu0 %83
    %v85 = vsel %vm68, %v81, 0.0
    %86 = vadd.xlane.f32.xlu0 %v85
    %v87 = vpop.xlane.xlu0 %86
    %v88 = vmul.f32 %v84, %v75
    %v89 = vmul.f32 %v87, %v75
    %v90 = vadd.f32 %v88, 1e-12
    %v91 = vadd.f32 %v89, 1e-12
    %v92 = vrsqrt.pop %v90
    %v93 = vrsqrt.pop %v91
    %v94 = vmul.f32 %v78, %v92
    %v95 = vmul.f32 %v79, %v93
    %v97 = vlaneseq
    %v98 = vshrl.u32 %v97, 7
    %v99 = vsub.s32 0, %v98
    %v100 = vrot.slane %v66, %v99
    %v102 = vmul.f32 %v94, %v100
    %v103 = vmul.f32 %v95, %v100
    %v105 = vlaneseq
    %v106 = vshrl.u32 %v105, 7
    %v107 = vsub.s32 0, %v106
    %v108 = vrot.slane %v67, %v107
    %v110 = vadd.f32 %v102, %v108
    %v111 = vadd.f32 %v103, %v108
    %v112 = vld [vmem:[%s4] sm:$0xff]
    %v113 = vld [vmem:[%s4 + $0x8] sm:$0xff]
    %v114 = vld [vmem:[%s4 + $0x10] sm:$0xff]
    %v115 = vld [vmem:[%s4 + $0x18] sm:$0xff]
    %v116 = vld [vmem:[%s5] sm:$0x1]
    %v117 = vld [vmem:[%s6] sm:$0xff]
    %v118 = vld [vmem:[%s6 + $0x8] sm:$0xff]
    %v119 = vld [vmem:[%s6 + $0x10] sm:$0xff]
    %v120 = vld [vmem:[%s6 + $0x18] sm:$0xff]
    %v121 = vld [vmem:[%s7] sm:$0x1]
    %v122 = vld [vmem:[%s8] sm:$0x1]
    %v123 = vld [vmem:[%s9] sm:$0x1]
    %v124 = vld [vmem:[%s10] sm:$0xff]
    %v125 = vld [vmem:[%s10 + $0x8] sm:$0xff]
    %v126 = vld [vmem:[%s10 + $0x10] sm:$0xff]
    %v127 = vld [vmem:[%s10 + $0x18] sm:$0xff]
    %v128 = vld [vmem:[%s11] sm:$0x1]
    %v129 = vld [vmem:[%s12] sm:$0xff]
    %v130 = vld [vmem:[%s12 + $0x8] sm:$0xff]
    %v131 = vld [vmem:[%s12 + $0x10] sm:$0xff]
    %v132 = vld [vmem:[%s12 + $0x18] sm:$0xff]
    %v133 = vld [vmem:[%s12 + $0x20] sm:$0xff]
    %v134 = vld [vmem:[%s12 + $0x28] sm:$0xff]
    %v135 = vld [vmem:[%s12 + $0x30] sm:$0xff]
    %v136 = vld [vmem:[%s12 + $0x38] sm:$0xff]
    %v137 = vld [vmem:[%s13] sm:$0x1]
    %v138 = vld [vmem:[%s14] sm:$0x1]
    %v139 = vld [vmem:[%s15] sm:$0x1]
    %v140 = vpack.c.bf16 %v111, %v110
    %v141 = vpack.c.bf16 %v113, %v112
    %v142 = vpack.c.bf16 %v115, %v114
    %v144 = vlaneseq
    %v145 = vshrl.u32 %v144, 7
    %v146 = vsub.s32 0, %v145
    %v147 = vrot.slane %v116, %v146
    %v150 = vsel %vm68, %v140, 0
    %152 = vmatprep.subr.bf16.mxu0 0
    %153 = vmatpush1.bf16.msra.mxu0 0
    %154 = vmatprep.subr.bf16.mxu0 0
    %155 = vmatpush1.bf16.msra.mxu0 0
    %156 = vmatprep.subr.bf16.mxu0 0
    %157 = vmatpush1.bf16.msra.mxu0 0
    %158 = vmatprep.subr.bf16.mxu0 0
    %159 = vmatpush1.bf16.msra.mxu0 0
    %160 = vmatprep.subr.bf16.mxu0 0
    %161 = vmatpush1.bf16.msra.mxu0 0
    %162 = vmatprep.subr.bf16.mxu0 0
    %163 = vmatpush1.bf16.msra.mxu0 0
    %164 = vmatprep.subr.bf16.mxu0 0
    %165 = vmatpush1.bf16.msra.mxu0 %v142
    %166 = vmatprep.subr.bf16.mxu0 0
    %167 = vmatpush1.bf16.msra.mxu0 %v141
    %168 = vmatprep.subr.bf16.mxu0 0
    %169 = vmatpush2.bf16.msra.mxu0 0
    %170 = vmatprep.subr.bf16.mxu0 0
    %171 = vmatpush2.bf16.msra.mxu0 0
    %172 = vmatprep.subr.bf16.mxu0 0
    %173 = vmatpush2.bf16.msra.mxu0 0
    %174 = vmatprep.subr.bf16.mxu0 0
    %175 = vmatpush2.bf16.msra.mxu0 0
    %176 = vmatprep.subr.bf16.mxu0 0
    %177 = vmatpush2.bf16.msra.mxu0 0
    %178 = vmatprep.subr.bf16.mxu0 0
    %179 = vmatpush2.bf16.msra.mxu0 0
    %180 = vmatprep.subr.bf16.mxu0 0
    %181 = vmatpush2.bf16.msra.mxu0 0
    %182 = vmatprep.subr.bf16.mxu0 0
    %183 = vmatpush2.bf16.msra.mxu0 0
    %184 = vmatprep.mubr.bf16.mxu0 0
    %185 = vmatmul.mubr.bf16.gmra.mxu0 %v150
    %v186 = vpop.f32.mrf.mxu0
    %v187 = vadd.f32 %v147, %v186
    %v188 = vpop.f32.mrf.mxu0
    %v189 = vpop.f32.mrf.mxu0
    %v190 = vadd.f32 %v147, %v189
    %v191 = vpop.f32.mrf.mxu0
    %192 = vdwg.mxu0
    %194 = vrot.lane.b32.xlu0 %v187, 96
    %v195 = vpop.permute.xlu0 %194
    %vm196 = vcmask 64512
    %v197 = vsel %vm196, %v187, 0
    %v199 = vsel %vm196, %v195, 0
    %201 = vmatprep.subr.mxu0 0.0
    %202 = vmatpush1.xpose.msra.mxu0 0.0
    %203 = vmatprep.subr.mxu0 0.0
    %204 = vmatpush1.xpose.msra.mxu0 0.0
    %205 = vmatprep.subr.mxu0 0.0
    %206 = vmatpush1.xpose.msra.mxu0 0.0
    %207 = vmatprep.subr.mxu0 0.0
    %208 = vmatpush1.xpose.msra.mxu0 0.0
    %209 = vmatprep.subr.mxu0 0.0
    %210 = vmatpush1.xpose.msra.mxu0 0.0
    %211 = vmatprep.subr.mxu0 0.0
    %212 = vmatpush1.xpose.msra.mxu0 0.0
    %213 = vmatprep.subr.mxu0 0.0
    %214 = vmatpush1.xpose.msra.mxu0 0.0
    %215 = vmatprep.subr.mxu0 0.0
    %216 = vmatpush1.xpose.msra.mxu0 0.0
    %217 = vmatprep.subr.mxu0 0.0
    %218 = vmatpush1.xpose.msra.mxu0 0.0
    %219 = vmatprep.subr.mxu0 0.0
    %220 = vmatpush1.xpose.msra.mxu0 0.0
    %221 = vmatprep.subr.mxu0 0.0
    %222 = vmatpush1.xpose.msra.mxu0 0.0
    %223 = vmatprep.subr.mxu0 0.0
    %224 = vmatpush1.xpose.msra.mxu0 0.0
    %225 = vmatprep.subr.mxu0 0.0
    %226 = vmatpush1.xpose.msra.mxu0 0.0
    %227 = vmatprep.subr.mxu0 0.0
    %228 = vmatpush1.xpose.msra.mxu0 0.0
    %229 = vmatprep.subr.mxu0 0.0
    %230 = vmatpush1.xpose.msra.mxu0 0.0
    %231 = vmatprep.subr.mxu0 0.0
    %232 = vmatpush1.xpose.msra.mxu0 %v199
    %233 = vmatprep.subr.mxu0 0.0
    %234 = vmatpush2.xpose.msra.mxu0 0.0
    %235 = vmatprep.subr.mxu0 0.0
    %236 = vmatpush2.xpose.msra.mxu0 0.0
    %237 = vmatprep.subr.mxu0 0.0
    %238 = vmatpush2.xpose.msra.mxu0 0.0
    %239 = vmatprep.subr.mxu0 0.0
    %240 = vmatpush2.xpose.msra.mxu0 0.0
    %241 = vmatprep.subr.mxu0 0.0
    %242 = vmatpush2.xpose.msra.mxu0 0.0
    %243 = vmatprep.subr.mxu0 0.0
    %244 = vmatpush2.xpose.msra.mxu0 0.0
    %245 = vmatprep.subr.mxu0 0.0
    %246 = vmatpush2.xpose.msra.mxu0 0.0
    %247 = vmatprep.subr.mxu0 0.0
    %248 = vmatpush2.xpose.msra.mxu0 0.0
    %249 = vmatprep.subr.mxu0 0.0
    %250 = vmatpush2.xpose.msra.mxu0 0.0
    %251 = vmatprep.subr.mxu0 0.0
    %252 = vmatpush2.xpose.msra.mxu0 0.0
    %253 = vmatprep.subr.mxu0 0.0
    %254 = vmatpush2.xpose.msra.mxu0 0.0
    %255 = vmatprep.subr.mxu0 0.0
    %256 = vmatpush2.xpose.msra.mxu0 0.0
    %257 = vmatprep.subr.mxu0 0.0
    %258 = vmatpush2.xpose.msra.mxu0 0.0
    %259 = vmatprep.subr.mxu0 0.0
    %260 = vmatpush2.xpose.msra.mxu0 0.0
    %261 = vmatprep.subr.mxu0 0.0
    %262 = vmatpush2.xpose.msra.mxu0 0.0
    %263 = vmatprep.subr.mxu0 0.0
    %264 = vmatpush2.xpose.msra.mxu0 0.0
    %265 = vmatprep.mubr.f32.mxu0 0.0
    %266 = vmatmul.mubr.f32.gmra.mxu0 %v197
    %v267 = vpop.f32.mrf.mxu0
    %v268 = vadd.f32 0.0, %v267
    %v269 = vpop.f32.mrf.mxu0
    %270 = vdwg.mxu0
    %v271 = vmul.f32 %v268, 0.35355338
    %v272 = vlaneseq
    %v273 = vshrl.u32 %v272, 7
    %v274 = vsub.s32 0, %v273
    %v275 = vrot.slane %v65, %v274
    %v276 = vadd.f32 %v271, %v275
    %v277 = vsel %vm196, %v276, -inf
    %278 = vmax.xlane.f32.xlu0 %v277
    %v279 = vpop.xlane.xlu0 %278
    %v280 = vsub.f32 %v276, %v279
    %v281 = vmul.f32 %v280, 1.442695
    %v282 = vpow.pop %v281
    %v283 = vsel %vm196, %v282, 0.0
    %284 = vadd.xlane.f32.xlu0 %v283
    %v285 = vpop.xlane.xlu0 %284
    %v286 = vrcp.pop %v285
    %v287 = vmul.f32 %v282, %v286
    %288 = vrot.lane.b32.xlu0 %v187, 64
    %v289 = vpop.permute.xlu0 %288
    %v292 = vsel %vm196, %v287, 0
    %294 = vmatprep.subr.mxu0 0.0
    %295 = vmatpush1.msra.mxu0 0.0
    %296 = vmatprep.subr.mxu0 0.0
    %297 = vmatpush1.msra.mxu0 0.0
    %298 = vmatprep.subr.mxu0 0.0
    %299 = vmatpush1.msra.mxu0 0.0
    %300 = vmatprep.subr.mxu0 0.0
    %301 = vmatpush1.msra.mxu0 0.0
    %302 = vmatprep.subr.mxu0 0.0
    %303 = vmatpush1.msra.mxu0 0.0
    %304 = vmatprep.subr.mxu0 0.0
    %305 = vmatpush1.msra.mxu0 0.0
    %306 = vmatprep.subr.mxu0 0.0
    %307 = vmatpush1.msra.mxu0 0.0
    %308 = vmatprep.subr.mxu0 0.0
    %309 = vmatpush1.msra.mxu0 0.0
    %310 = vmatprep.subr.mxu0 0.0
    %311 = vmatpush1.msra.mxu0 0.0
    %312 = vmatprep.subr.mxu0 0.0
    %313 = vmatpush1.msra.mxu0 0.0
    %314 = vmatprep.subr.mxu0 0.0
    %315 = vmatpush1.msra.mxu0 0.0
    %316 = vmatprep.subr.mxu0 0.0
    %317 = vmatpush1.msra.mxu0 0.0
    %318 = vmatprep.subr.mxu0 0.0
    %319 = vmatpush1.msra.mxu0 0.0
    %320 = vmatprep.subr.mxu0 0.0
    %321 = vmatpush1.msra.mxu0 0.0
    %322 = vmatprep.subr.mxu0 0.0
    %323 = vmatpush1.msra.mxu0 0.0
    %324 = vmatprep.subr.mxu0 0.0
    %325 = vmatpush1.msra.mxu0 %v289
    %326 = vmatprep.subr.mxu0 0.0
    %327 = vmatpush2.msra.mxu0 0.0
    %328 = vmatprep.subr.mxu0 0.0
    %329 = vmatpush2.msra.mxu0 0.0
    %330 = vmatprep.subr.mxu0 0.0
    %331 = vmatpush2.msra.mxu0 0.0
    %332 = vmatprep.subr.mxu0 0.0
    %333 = vmatpush2.msra.mxu0 0.0
    %334 = vmatprep.subr.mxu0 0.0
    %335 = vmatpush2.msra.mxu0 0.0
    %336 = vmatprep.subr.mxu0 0.0
    %337 = vmatpush2.msra.mxu0 0.0
    %338 = vmatprep.subr.mxu0 0.0
    %339 = vmatpush2.msra.mxu0 0.0
    %340 = vmatprep.subr.mxu0 0.0
    %341 = vmatpush2.msra.mxu0 0.0
    %342 = vmatprep.subr.mxu0 0.0
    %343 = vmatpush2.msra.mxu0 0.0
    %344 = vmatprep.subr.mxu0 0.0
    %345 = vmatpush2.msra.mxu0 0.0
    %346 = vmatprep.subr.mxu0 0.0
    %347 = vmatpush2.msra.mxu0 0.0
    %348 = vmatprep.subr.mxu0 0.0
    %349 = vmatpush2.msra.mxu0 0.0
    %350 = vmatprep.subr.mxu0 0.0
    %351 = vmatpush2.msra.mxu0 0.0
    %352 = vmatprep.subr.mxu0 0.0
    %353 = vmatpush2.msra.mxu0 0.0
    %354 = vmatprep.subr.mxu0 0.0
    %355 = vmatpush2.msra.mxu0 0.0
    %356 = vmatprep.subr.mxu0 0.0
    %357 = vmatpush2.msra.mxu0 0.0
    %358 = vmatprep.mubr.f32.mxu0 0.0
    %359 = vmatmul.mubr.f32.gmra.mxu0 %v292
    %v360 = vpop.f32.mrf.mxu0
    %v361 = vadd.f32 0.0, %v360
    %v362 = vpop.f32.mrf.mxu0
    %363 = vdwg.mxu0
    %v364 = vpack.c.bf16 %v361, %v361
    %v365 = vpack.c.bf16 %v117, %v117
    %366 = vrot.lane.b32.xlu0 %v187, 120
    %v367 = vpop.permute.xlu0 %366
    %368 = vrot.lane.b32.xlu0 %v187, 88
    %v369 = vpop.permute.xlu0 %368
    %v370 = vsel %vm196, %v367, 0
    %v372 = vsel %vm196, %v369, 0
    %374 = vmatprep.subr.mxu0 0.0
    %375 = vmatpush1.xpose.msra.mxu0 0.0
    %376 = vmatprep.subr.mxu0 0.0
    %377 = vmatpush1.xpose.msra.mxu0 0.0
    %378 = vmatprep.subr.mxu0 0.0
    %379 = vmatpush1.xpose.msra.mxu0 0.0
    %380 = vmatprep.subr.mxu0 0.0
    %381 = vmatpush1.xpose.msra.mxu0 0.0
    %382 = vmatprep.subr.mxu0 0.0
    %383 = vmatpush1.xpose.msra.mxu0 0.0
    %384 = vmatprep.subr.mxu0 0.0
    %385 = vmatpush1.xpose.msra.mxu0 0.0
    %386 = vmatprep.subr.mxu0 0.0
    %387 = vmatpush1.xpose.msra.mxu0 0.0
    %388 = vmatprep.subr.mxu0 0.0
    %389 = vmatpush1.xpose.msra.mxu0 0.0
    %390 = vmatprep.subr.mxu0 0.0
    %391 = vmatpush1.xpose.msra.mxu0 0.0
    %392 = vmatprep.subr.mxu0 0.0
    %393 = vmatpush1.xpose.msra.mxu0 0.0
    %394 = vmatprep.subr.mxu0 0.0
    %395 = vmatpush1.xpose.msra.mxu0 0.0
    %396 = vmatprep.subr.mxu0 0.0
    %397 = vmatpush1.xpose.msra.mxu0 0.0
    %398 = vmatprep.subr.mxu0 0.0
    %399 = vmatpush1.xpose.msra.mxu0 0.0
    %400 = vmatprep.subr.mxu0 0.0
    %401 = vmatpush1.xpose.msra.mxu0 0.0
    %402 = vmatprep.subr.mxu0 0.0
    %403 = vmatpush1.xpose.msra.mxu0 0.0
    %404 = vmatprep.subr.mxu0 0.0
    %405 = vmatpush1.xpose.msra.mxu0 %v372
    %406 = vmatprep.subr.mxu0 0.0
    %407 = vmatpush2.xpose.msra.mxu0 0.0
    %408 = vmatprep.subr.mxu0 0.0
    %409 = vmatpush2.xpose.msra.mxu0 0.0
    %410 = vmatprep.subr.mxu0 0.0
    %411 = vmatpush2.xpose.msra.mxu0 0.0
    %412 = vmatprep.subr.mxu0 0.0
    %413 = vmatpush2.xpose.msra.mxu0 0.0
    %414 = vmatprep.subr.mxu0 0.0
    %415 = vmatpush2.xpose.msra.mxu0 0.0
    %416 = vmatprep.subr.mxu0 0.0
    %417 = vmatpush2.xpose.msra.mxu0 0.0
    %418 = vmatprep.subr.mxu0 0.0
    %419 = vmatpush2.xpose.msra.mxu0 0.0
    %420 = vmatprep.subr.mxu0 0.0
    %421 = vmatpush2.xpose.msra.mxu0 0.0
    %422 = vmatprep.subr.mxu0 0.0
    %423 = vmatpush2.xpose.msra.mxu0 0.0
    %424 = vmatprep.subr.mxu0 0.0
    %425 = vmatpush2.xpose.msra.mxu0 0.0
    %426 = vmatprep.subr.mxu0 0.0
    %427 = vmatpush2.xpose.msra.mxu0 0.0
    %428 = vmatprep.subr.mxu0 0.0
    %429 = vmatpush2.xpose.msra.mxu0 0.0
    %430 = vmatprep.subr.mxu0 0.0
    %431 = vmatpush2.xpose.msra.mxu0 0.0
    %432 = vmatprep.subr.mxu0 0.0
    %433 = vmatpush2.xpose.msra.mxu0 0.0
    %434 = vmatprep.subr.mxu0 0.0
    %435 = vmatpush2.xpose.msra.mxu0 0.0
    %436 = vmatprep.subr.mxu0 0.0
    %437 = vmatpush2.xpose.msra.mxu0 0.0
    %438 = vmatprep.mubr.f32.mxu0 0.0
    %439 = vmatmul.mubr.f32.gmra.mxu0 %v370
    %v440 = vpop.f32.mrf.mxu0
    %v441 = vadd.f32 0.0, %v440
    %v442 = vpop.f32.mrf.mxu0
    %443 = vdwg.mxu0
    %v444 = vmul.f32 %v441, 0.35355338
    %v445 = vadd.f32 %v444, %v275
    %v446 = vsel %vm196, %v445, -inf
    %447 = vmax.xlane.f32.xlu0 %v446
    %v448 = vpop.xlane.xlu0 %447
    %v449 = vsub.f32 %v445, %v448
    %v450 = vmul.f32 %v449, 1.442695
    %v451 = vpow.pop %v450
    %v452 = vsel %vm196, %v451, 0.0
    %453 = vadd.xlane.f32.xlu0 %v452
    %v454 = vpop.xlane.xlu0 %453
    %v455 = vrcp.pop %v454
    %v456 = vmul.f32 %v451, %v455
    %457 = vrot.lane.b32.xlu0 %v187, 56
    %v458 = vpop.permute.xlu0 %457
    %v461 = vsel %vm196, %v456, 0
    %463 = vmatprep.subr.mxu0 0.0
    %464 = vmatpush1.msra.mxu0 0.0
    %465 = vmatprep.subr.mxu0 0.0
    %466 = vmatpush1.msra.mxu0 0.0
    %467 = vmatprep.subr.mxu0 0.0
    %468 = vmatpush1.msra.mxu0 0.0
    %469 = vmatprep.subr.mxu0 0.0
    %470 = vmatpush1.msra.mxu0 0.0
    %471 = vmatprep.subr.mxu0 0.0
    %472 = vmatpush1.msra.mxu0 0.0
    %473 = vmatprep.subr.mxu0 0.0
    %474 = vmatpush1.msra.mxu0 0.0
    %475 = vmatprep.subr.mxu0 0.0
    %476 = vmatpush1.msra.mxu0 0.0
    %477 = vmatprep.subr.mxu0 0.0
    %478 = vmatpush1.msra.mxu0 0.0
    %479 = vmatprep.subr.mxu0 0.0
    %480 = vmatpush1.msra.mxu0 0.0
    %481 = vmatprep.subr.mxu0 0.0
    %482 = vmatpush1.msra.mxu0 0.0
    %483 = vmatprep.subr.mxu0 0.0
    %484 = vmatpush1.msra.mxu0 0.0
    %485 = vmatprep.subr.mxu0 0.0
    %486 = vmatpush1.msra.mxu0 0.0
    %487 = vmatprep.subr.mxu0 0.0
    %488 = vmatpush1.msra.mxu0 0.0
    %489 = vmatprep.subr.mxu0 0.0
    %490 = vmatpush1.msra.mxu0 0.0
    %491 = vmatprep.subr.mxu0 0.0
    %492 = vmatpush1.msra.mxu0 0.0
    %493 = vmatprep.subr.mxu0 0.0
    %494 = vmatpush1.msra.mxu0 %v458
    %495 = vmatprep.subr.mxu0 0.0
    %496 = vmatpush2.msra.mxu0 0.0
    %497 = vmatprep.subr.mxu0 0.0
    %498 = vmatpush2.msra.mxu0 0.0
    %499 = vmatprep.subr.mxu0 0.0
    %500 = vmatpush2.msra.mxu0 0.0
    %501 = vmatprep.subr.mxu0 0.0
    %502 = vmatpush2.msra.mxu0 0.0
    %503 = vmatprep.subr.mxu0 0.0
    %504 = vmatpush2.msra.mxu0 0.0
    %505 = vmatprep.subr.mxu0 0.0
    %506 = vmatpush2.msra.mxu0 0.0
    %507 = vmatprep.subr.mxu0 0.0
    %508 = vmatpush2.msra.mxu0 0.0
    %509 = vmatprep.subr.mxu0 0.0
    %510 = vmatpush2.msra.mxu0 0.0
    %511 = vmatprep.subr.mxu0 0.0
    %512 = vmatpush2.msra.mxu0 0.0
    %513 = vmatprep.subr.mxu0 0.0
    %514 = vmatpush2.msra.mxu0 0.0
    %515 = vmatprep.subr.mxu0 0.0
    %516 = vmatpush2.msra.mxu0 0.0
    %517 = vmatprep.subr.mxu0 0.0
    %518 = vmatpush2.msra.mxu0 0.0
    %519 = vmatprep.subr.mxu0 0.0
    %520 = vmatpush2.msra.mxu0 0.0
    %521 = vmatprep.subr.mxu0 0.0
    %522 = vmatpush2.msra.mxu0 0.0
    %523 = vmatprep.subr.mxu0 0.0
    %524 = vmatpush2.msra.mxu0 0.0
    %525 = vmatprep.subr.mxu0 0.0
    %526 = vmatpush2.msra.mxu0 0.0
    %527 = vmatprep.mubr.f32.mxu0 0.0
    %528 = vmatmul.mubr.f32.gmra.mxu0 %v461
    %v529 = vpop.f32.mrf.mxu0
    %v530 = vadd.f32 0.0, %v529
    %v531 = vpop.f32.mrf.mxu0
    %532 = vdwg.mxu0
    %v533 = vpack.c.bf16 %v530, %v530
    %v534 = vpack.c.bf16 %v118, %v118
    %v536 = vsel %vm196, %v533, 0
    %vm538 = vcmask 1043456
    %v540 = vsel %vm538, %v534, 0
    %542 = vmatprep.subr.bf16.mxu0 0
    %543 = vmatpush1.bf16.msra.mxu0 0
    %544 = vmatprep.subr.bf16.mxu0 0
    %545 = vmatpush1.bf16.msra.mxu0 0
    %546 = vmatprep.subr.bf16.mxu0 0
    %547 = vmatpush1.bf16.msra.mxu0 0
    %548 = vmatprep.subr.bf16.mxu0 0
    %549 = vmatpush1.bf16.msra.mxu0 0
    %550 = vmatprep.subr.bf16.mxu0 0
    %551 = vmatpush1.bf16.msra.mxu0 0
    %552 = vmatprep.subr.bf16.mxu0 0
    %553 = vmatpush1.bf16.msra.mxu0 0
    %554 = vmatprep.subr.bf16.mxu0 0
    %555 = vmatpush1.bf16.msra.mxu0 0
    %556 = vmatprep.subr.bf16.mxu0 0
    %557 = vmatpush1.bf16.msra.mxu0 %v540
    %558 = vmatprep.subr.bf16.mxu0 0
    %559 = vmatpush2.bf16.msra.mxu0 0
    %560 = vmatprep.subr.bf16.mxu0 0
    %561 = vmatpush2.bf16.msra.mxu0 0
    %562 = vmatprep.subr.bf16.mxu0 0
    %563 = vmatpush2.bf16.msra.mxu0 0
    %564 = vmatprep.subr.bf16.mxu0 0
    %565 = vmatpush2.bf16.msra.mxu0 0
    %566 = vmatprep.subr.bf16.mxu0 0
    %567 = vmatpush2.bf16.msra.mxu0 0
    %568 = vmatprep.subr.bf16.mxu0 0
    %569 = vmatpush2.bf16.msra.mxu0 0
    %570 = vmatprep.subr.bf16.mxu0 0
    %571 = vmatpush2.bf16.msra.mxu0 0
    %572 = vmatprep.subr.bf16.mxu0 0
    %573 = vmatpush2.bf16.msra.mxu0 0
    %574 = vmatprep.mubr.bf16.mxu0 0
    %575 = vmatmul.mubr.bf16.gmra.mxu0 %v536
    %v576 = vpop.f32.mrf.mxu0
    %v577 = vadd.f32 0.0, %v576
    %v578 = vpop.f32.mrf.mxu0
    %v579 = vpop.f32.mrf.mxu0
    %v580 = vpop.f32.mrf.mxu0
    %581 = vdwg.mxu0
    %v583 = vsel %vm196, %v364, 0
    %v586 = vsel %vm538, %v365, 0
    %588 = vmatprep.subr.bf16.mxu0 0
    %589 = vmatpush1.bf16.msra.mxu0 0
    %590 = vmatprep.subr.bf16.mxu0 0
    %591 = vmatpush1.bf16.msra.mxu0 0
    %592 = vmatprep.subr.bf16.mxu0 0
    %593 = vmatpush1.bf16.msra.mxu0 0
    %594 = vmatprep.subr.bf16.mxu0 0
    %595 = vmatpush1.bf16.msra.mxu0 0
    %596 = vmatprep.subr.bf16.mxu0 0
    %597 = vmatpush1.bf16.msra.mxu0 0
    %598 = vmatprep.subr.bf16.mxu0 0
    %599 = vmatpush1.bf16.msra.mxu0 0
    %600 = vmatprep.subr.bf16.mxu0 0
    %601 = vmatpush1.bf16.msra.mxu0 0
    %602 = vmatprep.subr.bf16.mxu0 0
    %603 = vmatpush1.bf16.msra.mxu0 %v586
    %604 = vmatprep.subr.bf16.mxu0 0
    %605 = vmatpush2.bf16.msra.mxu0 0
    %606 = vmatprep.subr.bf16.mxu0 0
    %607 = vmatpush2.bf16.msra.mxu0 0
    %608 = vmatprep.subr.bf16.mxu0 0
    %609 = vmatpush2.bf16.msra.mxu0 0
    %610 = vmatprep.subr.bf16.mxu0 0
    %611 = vmatpush2.bf16.msra.mxu0 0
    %612 = vmatprep.subr.bf16.mxu0 0
    %613 = vmatpush2.bf16.msra.mxu0 0
    %614 = vmatprep.subr.bf16.mxu0 0
    %615 = vmatpush2.bf16.msra.mxu0 0
    %616 = vmatprep.subr.bf16.mxu0 0
    %617 = vmatpush2.bf16.msra.mxu0 0
    %618 = vmatprep.subr.bf16.mxu0 0
    %619 = vmatpush2.bf16.msra.mxu0 0
    %620 = vmatprep.mubr.bf16.mxu0 0
    %621 = vmatmul.mubr.bf16.gmra.mxu0 %v583
    %v622 = vpop.f32.mrf.mxu0
    %v623 = vadd.f32 %v577, %v622
    %v624 = vpop.f32.mrf.mxu0
    %v625 = vpop.f32.mrf.mxu0
    %v626 = vpop.f32.mrf.mxu0
    %627 = vdwg.mxu0
    %628 = vrot.lane.b32.xlu0 %v187, 112
    %v629 = vpop.permute.xlu0 %628
    %630 = vrot.lane.b32.xlu0 %v187, 80
    %v631 = vpop.permute.xlu0 %630
    %v632 = vsel %vm196, %v629, 0
    %v634 = vsel %vm196, %v631, 0
    %636 = vmatprep.subr.mxu0 0.0
    %637 = vmatpush1.xpose.msra.mxu0 0.0
    %638 = vmatprep.subr.mxu0 0.0
    %639 = vmatpush1.xpose.msra.mxu0 0.0
    %640 = vmatprep.subr.mxu0 0.0
    %641 = vmatpush1.xpose.msra.mxu0 0.0
    %642 = vmatprep.subr.mxu0 0.0
    %643 = vmatpush1.xpose.msra.mxu0 0.0
    %644 = vmatprep.subr.mxu0 0.0
    %645 = vmatpush1.xpose.msra.mxu0 0.0
    %646 = vmatprep.subr.mxu0 0.0
    %647 = vmatpush1.xpose.msra.mxu0 0.0
    %648 = vmatprep.subr.mxu0 0.0
    %649 = vmatpush1.xpose.msra.mxu0 0.0
    %650 = vmatprep.subr.mxu0 0.0
    %651 = vmatpush1.xpose.msra.mxu0 0.0
    %652 = vmatprep.subr.mxu0 0.0
    %653 = vmatpush1.xpose.msra.mxu0 0.0
    %654 = vmatprep.subr.mxu0 0.0
    %655 = vmatpush1.xpose.msra.mxu0 0.0
    %656 = vmatprep.subr.mxu0 0.0
    %657 = vmatpush1.xpose.msra.mxu0 0.0
    %658 = vmatprep.subr.mxu0 0.0
    %659 = vmatpush1.xpose.msra.mxu0 0.0
    %660 = vmatprep.subr.mxu0 0.0
    %661 = vmatpush1.xpose.msra.mxu0 0.0
    %662 = vmatprep.subr.mxu0 0.0
    %663 = vmatpush1.xpose.msra.mxu0 0.0
    %664 = vmatprep.subr.mxu0 0.0
    %665 = vmatpush1.xpose.msra.mxu0 0.0
    %666 = vmatprep.subr.mxu0 0.0
    %667 = vmatpush1.xpose.msra.mxu0 %v634
    %668 = vmatprep.subr.mxu0 0.0
    %669 = vmatpush2.xpose.msra.mxu0 0.0
    %670 = vmatprep.subr.mxu0 0.0
    %671 = vmatpush2.xpose.msra.mxu0 0.0
    %672 = vmatprep.subr.mxu0 0.0
    %673 = vmatpush2.xpose.msra.mxu0 0.0
    %674 = vmatprep.subr.mxu0 0.0
    %675 = vmatpush2.xpose.msra.mxu0 0.0
    %676 = vmatprep.subr.mxu0 0.0
    %677 = vmatpush2.xpose.msra.mxu0 0.0
    %678 = vmatprep.subr.mxu0 0.0
    %679 = vmatpush2.xpose.msra.mxu0 0.0
    %680 = vmatprep.subr.mxu0 0.0
    %681 = vmatpush2.xpose.msra.mxu0 0.0
    %682 = vmatprep.subr.mxu0 0.0
    %683 = vmatpush2.xpose.msra.mxu0 0.0
    %684 = vmatprep.subr.mxu0 0.0
    %685 = vmatpush2.xpose.msra.mxu0 0.0
    %686 = vmatprep.subr.mxu0 0.0
    %687 = vmatpush2.xpose.msra.mxu0 0.0
    %688 = vmatprep.subr.mxu0 0.0
    %689 = vmatpush2.xpose.msra.mxu0 0.0
    %690 = vmatprep.subr.mxu0 0.0
    %691 = vmatpush2.xpose.msra.mxu0 0.0
    %692 = vmatprep.subr.mxu0 0.0
    %693 = vmatpush2.xpose.msra.mxu0 0.0
    %694 = vmatprep.subr.mxu0 0.0
    %695 = vmatpush2.xpose.msra.mxu0 0.0
    %696 = vmatprep.subr.mxu0 0.0
    %697 = vmatpush2.xpose.msra.mxu0 0.0
    %698 = vmatprep.subr.mxu0 0.0
    %699 = vmatpush2.xpose.msra.mxu0 0.0
    %700 = vmatprep.mubr.f32.mxu0 0.0
    %701 = vmatmul.mubr.f32.gmra.mxu0 %v632
    %v702 = vpop.f32.mrf.mxu0
    %v703 = vadd.f32 0.0, %v702
    %v704 = vpop.f32.mrf.mxu0
    %705 = vdwg.mxu0
    %v706 = vmul.f32 %v703, 0.35355338
    %v707 = vadd.f32 %v706, %v275
    %v708 = vsel %vm196, %v707, -inf
    %709 = vmax.xlane.f32.xlu0 %v708
    %v710 = vpop.xlane.xlu0 %709
    %v711 = vsub.f32 %v707, %v710
    %v712 = vmul.f32 %v711, 1.442695
    %v713 = vpow.pop %v712
    %v714 = vsel %vm196, %v713, 0.0
    %715 = vadd.xlane.f32.xlu0 %v714
    %v716 = vpop.xlane.xlu0 %715
    %v717 = vrcp.pop %v716
    %v718 = vmul.f32 %v713, %v717
    %719 = vrot.lane.b32.xlu0 %v187, 48
    %v720 = vpop.permute.xlu0 %719
    %v723 = vsel %vm196, %v718, 0
    %725 = vmatprep.subr.mxu0 0.0
    %726 = vmatpush1.msra.mxu0 0.0
    %727 = vmatprep.subr.mxu0 0.0
    %728 = vmatpush1.msra.mxu0 0.0
    %729 = vmatprep.subr.mxu0 0.0
    %730 = vmatpush1.msra.mxu0 0.0
    %731 = vmatprep.subr.mxu0 0.0
    %732 = vmatpush1.msra.mxu0 0.0
    %733 = vmatprep.subr.mxu0 0.0
    %734 = vmatpush1.msra.mxu0 0.0
    %735 = vmatprep.subr.mxu0 0.0
    %736 = vmatpush1.msra.mxu0 0.0
    %737 = vmatprep.subr.mxu0 0.0
    %738 = vmatpush1.msra.mxu0 0.0
    %739 = vmatprep.subr.mxu0 0.0
    %740 = vmatpush1.msra.mxu0 0.0
    %741 = vmatprep.subr.mxu0 0.0
    %742 = vmatpush1.msra.mxu0 0.0
    %743 = vmatprep.subr.mxu0 0.0
    %744 = vmatpush1.msra.mxu0 0.0
    %745 = vmatprep.subr.mxu0 0.0
    %746 = vmatpush1.msra.mxu0 0.0
    %747 = vmatprep.subr.mxu0 0.0
    %748 = vmatpush1.msra.mxu0 0.0
    %749 = vmatprep.subr.mxu0 0.0
    %750 = vmatpush1.msra.mxu0 0.0
    %751 = vmatprep.subr.mxu0 0.0
    %752 = vmatpush1.msra.mxu0 0.0
    %753 = vmatprep.subr.mxu0 0.0
    %754 = vmatpush1.msra.mxu0 0.0
    %755 = vmatprep.subr.mxu0 0.0
    %756 = vmatpush1.msra.mxu0 %v720
    %757 = vmatprep.subr.mxu0 0.0
    %758 = vmatpush2.msra.mxu0 0.0
    %759 = vmatprep.subr.mxu0 0.0
    %760 = vmatpush2.msra.mxu0 0.0
    %761 = vmatprep.subr.mxu0 0.0
    %762 = vmatpush2.msra.mxu0 0.0
    %763 = vmatprep.subr.mxu0 0.0
    %764 = vmatpush2.msra.mxu0 0.0
    %765 = vmatprep.subr.mxu0 0.0
    %766 = vmatpush2.msra.mxu0 0.0
    %767 = vmatprep.subr.mxu0 0.0
    %768 = vmatpush2.msra.mxu0 0.0
    %769 = vmatprep.subr.mxu0 0.0
    %770 = vmatpush2.msra.mxu0 0.0
    %771 = vmatprep.subr.mxu0 0.0
    %772 = vmatpush2.msra.mxu0 0.0
    %773 = vmatprep.subr.mxu0 0.0
    %774 = vmatpush2.msra.mxu0 0.0
    %775 = vmatprep.subr.mxu0 0.0
    %776 = vmatpush2.msra.mxu0 0.0
    %777 = vmatprep.subr.mxu0 0.0
    %778 = vmatpush2.msra.mxu0 0.0
    %779 = vmatprep.subr.mxu0 0.0
    %780 = vmatpush2.msra.mxu0 0.0
    %781 = vmatprep.subr.mxu0 0.0
    %782 = vmatpush2.msra.mxu0 0.0
    %783 = vmatprep.subr.mxu0 0.0
    %784 = vmatpush2.msra.mxu0 0.0
    %785 = vmatprep.subr.mxu0 0.0
    %786 = vmatpush2.msra.mxu0 0.0
    %787 = vmatprep.subr.mxu0 0.0
    %788 = vmatpush2.msra.mxu0 0.0
    %789 = vmatprep.mubr.f32.mxu0 0.0
    %790 = vmatmul.mubr.f32.gmra.mxu0 %v723
    %v791 = vpop.f32.mrf.mxu0
    %v792 = vadd.f32 0.0, %v791
    %v793 = vpop.f32.mrf.mxu0
    %794 = vdwg.mxu0
    %v795 = vpack.c.bf16 %v792, %v792
    %v796 = vpack.c.bf16 %v119, %v119
    %v798 = vsel %vm196, %v795, 0
    %v801 = vsel %vm538, %v796, 0
    %803 = vmatprep.subr.bf16.mxu0 0
    %804 = vmatpush1.bf16.msra.mxu0 0
    %805 = vmatprep.subr.bf16.mxu0 0
    %806 = vmatpush1.bf16.msra.mxu0 0
    %807 = vmatprep.subr.bf16.mxu0 0
    %808 = vmatpush1.bf16.msra.mxu0 0
    %809 = vmatprep.subr.bf16.mxu0 0
    %810 = vmatpush1.bf16.msra.mxu0 0
    %811 = vmatprep.subr.bf16.mxu0 0
    %812 = vmatpush1.bf16.msra.mxu0 0
    %813 = vmatprep.subr.bf16.mxu0 0
    %814 = vmatpush1.bf16.msra.mxu0 0
    %815 = vmatprep.subr.bf16.mxu0 0
    %816 = vmatpush1.bf16.msra.mxu0 0
    %817 = vmatprep.subr.bf16.mxu0 0
    %818 = vmatpush1.bf16.msra.mxu0 %v801
    %819 = vmatprep.subr.bf16.mxu0 0
    %820 = vmatpush2.bf16.msra.mxu0 0
    %821 = vmatprep.subr.bf16.mxu0 0
    %822 = vmatpush2.bf16.msra.mxu0 0
    %823 = vmatprep.subr.bf16.mxu0 0
    %824 = vmatpush2.bf16.msra.mxu0 0
    %825 = vmatprep.subr.bf16.mxu0 0
    %826 = vmatpush2.bf16.msra.mxu0 0
    %827 = vmatprep.subr.bf16.mxu0 0
    %828 = vmatpush2.bf16.msra.mxu0 0
    %829 = vmatprep.subr.bf16.mxu0 0
    %830 = vmatpush2.bf16.msra.mxu0 0
    %831 = vmatprep.subr.bf16.mxu0 0
    %832 = vmatpush2.bf16.msra.mxu0 0
    %833 = vmatprep.subr.bf16.mxu0 0
    %834 = vmatpush2.bf16.msra.mxu0 0
    %835 = vmatprep.mubr.bf16.mxu0 0
    %836 = vmatmul.mubr.bf16.gmra.mxu0 %v798
    %v837 = vpop.f32.mrf.mxu0
    %v838 = vadd.f32 0.0, %v837
    %v839 = vpop.f32.mrf.mxu0
    %v840 = vpop.f32.mrf.mxu0
    %v841 = vpop.f32.mrf.mxu0
    %842 = vdwg.mxu0
    %v843 = vadd.f32 %v623, %v838
    %844 = vrot.lane.b32.xlu0 %v187, 104
    %v845 = vpop.permute.xlu0 %844
    %846 = vrot.lane.b32.xlu0 %v187, 72
    %v847 = vpop.permute.xlu0 %846
    %v848 = vsel %vm196, %v845, 0
    %v850 = vsel %vm196, %v847, 0
    %852 = vmatprep.subr.mxu0 0.0
    %853 = vmatpush1.xpose.msra.mxu0 0.0
    %854 = vmatprep.subr.mxu0 0.0
    %855 = vmatpush1.xpose.msra.mxu0 0.0
    %856 = vmatprep.subr.mxu0 0.0
    %857 = vmatpush1.xpose.msra.mxu0 0.0
    %858 = vmatprep.subr.mxu0 0.0
    %859 = vmatpush1.xpose.msra.mxu0 0.0
    %860 = vmatprep.subr.mxu0 0.0
    %861 = vmatpush1.xpose.msra.mxu0 0.0
    %862 = vmatprep.subr.mxu0 0.0
    %863 = vmatpush1.xpose.msra.mxu0 0.0
    %864 = vmatprep.subr.mxu0 0.0
    %865 = vmatpush1.xpose.msra.mxu0 0.0
    %866 = vmatprep.subr.mxu0 0.0
    %867 = vmatpush1.xpose.msra.mxu0 0.0
    %868 = vmatprep.subr.mxu0 0.0
    %869 = vmatpush1.xpose.msra.mxu0 0.0
    %870 = vmatprep.subr.mxu0 0.0
    %871 = vmatpush1.xpose.msra.mxu0 0.0
    %872 = vmatprep.subr.mxu0 0.0
    %873 = vmatpush1.xpose.msra.mxu0 0.0
    %874 = vmatprep.subr.mxu0 0.0
    %875 = vmatpush1.xpose.msra.mxu0 0.0
    %876 = vmatprep.subr.mxu0 0.0
    %877 = vmatpush1.xpose.msra.mxu0 0.0
    %878 = vmatprep.subr.mxu0 0.0
    %879 = vmatpush1.xpose.msra.mxu0 0.0
    %880 = vmatprep.subr.mxu0 0.0
    %881 = vmatpush1.xpose.msra.mxu0 0.0
    %882 = vmatprep.subr.mxu0 0.0
    %883 = vmatpush1.xpose.msra.mxu0 %v850
    %884 = vmatprep.subr.mxu0 0.0
    %885 = vmatpush2.xpose.msra.mxu0 0.0
    %886 = vmatprep.subr.mxu0 0.0
    %887 = vmatpush2.xpose.msra.mxu0 0.0
    %888 = vmatprep.subr.mxu0 0.0
    %889 = vmatpush2.xpose.msra.mxu0 0.0
    %890 = vmatprep.subr.mxu0 0.0
    %891 = vmatpush2.xpose.msra.mxu0 0.0
    %892 = vmatprep.subr.mxu0 0.0
    %893 = vmatpush2.xpose.msra.mxu0 0.0
    %894 = vmatprep.subr.mxu0 0.0
    %895 = vmatpush2.xpose.msra.mxu0 0.0
    %896 = vmatprep.subr.mxu0 0.0
    %897 = vmatpush2.xpose.msra.mxu0 0.0
    %898 = vmatprep.subr.mxu0 0.0
    %899 = vmatpush2.xpose.msra.mxu0 0.0
    %900 = vmatprep.subr.mxu0 0.0
    %901 = vmatpush2.xpose.msra.mxu0 0.0
    %902 = vmatprep.subr.mxu0 0.0
    %903 = vmatpush2.xpose.msra.mxu0 0.0
    %904 = vmatprep.subr.mxu0 0.0
    %905 = vmatpush2.xpose.msra.mxu0 0.0
    %906 = vmatprep.subr.mxu0 0.0
    %907 = vmatpush2.xpose.msra.mxu0 0.0
    %908 = vmatprep.subr.mxu0 0.0
    %909 = vmatpush2.xpose.msra.mxu0 0.0
    %910 = vmatprep.subr.mxu0 0.0
    %911 = vmatpush2.xpose.msra.mxu0 0.0
    %912 = vmatprep.subr.mxu0 0.0
    %913 = vmatpush2.xpose.msra.mxu0 0.0
    %914 = vmatprep.subr.mxu0 0.0
    %915 = vmatpush2.xpose.msra.mxu0 0.0
    %916 = vmatprep.mubr.f32.mxu0 0.0
    %917 = vmatmul.mubr.f32.gmra.mxu0 %v848
    %v918 = vpop.f32.mrf.mxu0
    %v919 = vadd.f32 0.0, %v918
    %v920 = vpop.f32.mrf.mxu0
    %921 = vdwg.mxu0
    %v922 = vmul.f32 %v919, 0.35355338
    %v923 = vadd.f32 %v922, %v275
    %v924 = vsel %vm196, %v923, -inf
    %925 = vmax.xlane.f32.xlu0 %v924
    %v926 = vpop.xlane.xlu0 %925
    %v927 = vsub.f32 %v923, %v926
    %v928 = vmul.f32 %v927, 1.442695
    %v929 = vpow.pop %v928
    %v930 = vsel %vm196, %v929, 0.0
    %931 = vadd.xlane.f32.xlu0 %v930
    %v932 = vpop.xlane.xlu0 %931
    %v933 = vrcp.pop %v932
    %v934 = vmul.f32 %v929, %v933
    %935 = vrot.lane.b32.xlu0 %v187, 40
    %v936 = vpop.permute.xlu0 %935
    %v939 = vsel %vm196, %v934, 0
    %941 = vmatprep.subr.mxu0 0.0
    %942 = vmatpush1.msra.mxu0 0.0
    %943 = vmatprep.subr.mxu0 0.0
    %944 = vmatpush1.msra.mxu0 0.0
    %945 = vmatprep.subr.mxu0 0.0
    %946 = vmatpush1.msra.mxu0 0.0
    %947 = vmatprep.subr.mxu0 0.0
    %948 = vmatpush1.msra.mxu0 0.0
    %949 = vmatprep.subr.mxu0 0.0
    %950 = vmatpush1.msra.mxu0 0.0
    %951 = vmatprep.subr.mxu0 0.0
    %952 = vmatpush1.msra.mxu0 0.0
    %953 = vmatprep.subr.mxu0 0.0
    %954 = vmatpush1.msra.mxu0 0.0
    %955 = vmatprep.subr.mxu0 0.0
    %956 = vmatpush1.msra.mxu0 0.0
    %957 = vmatprep.subr.mxu0 0.0
    %958 = vmatpush1.msra.mxu0 0.0
    %959 = vmatprep.subr.mxu0 0.0
    %960 = vmatpush1.msra.mxu0 0.0
    %961 = vmatprep.subr.mxu0 0.0
    %962 = vmatpush1.msra.mxu0 0.0
    %963 = vmatprep.subr.mxu0 0.0
    %964 = vmatpush1.msra.mxu0 0.0
    %965 = vmatprep.subr.mxu0 0.0
    %966 = vmatpush1.msra.mxu0 0.0
    %967 = vmatprep.subr.mxu0 0.0
    %968 = vmatpush1.msra.mxu0 0.0
    %969 = vmatprep.subr.mxu0 0.0
    %970 = vmatpush1.msra.mxu0 0.0
    %971 = vmatprep.subr.mxu0 0.0
    %972 = vmatpush1.msra.mxu0 %v936
    %973 = vmatprep.subr.mxu0 0.0
    %974 = vmatpush2.msra.mxu0 0.0
    %975 = vmatprep.subr.mxu0 0.0
    %976 = vmatpush2.msra.mxu0 0.0
    %977 = vmatprep.subr.mxu0 0.0
    %978 = vmatpush2.msra.mxu0 0.0
    %979 = vmatprep.subr.mxu0 0.0
    %980 = vmatpush2.msra.mxu0 0.0
    %981 = vmatprep.subr.mxu0 0.0
    %982 = vmatpush2.msra.mxu0 0.0
    %983 = vmatprep.subr.mxu0 0.0
    %984 = vmatpush2.msra.mxu0 0.0
    %985 = vmatprep.subr.mxu0 0.0
    %986 = vmatpush2.msra.mxu0 0.0
    %987 = vmatprep.subr.mxu0 0.0
    %988 = vmatpush2.msra.mxu0 0.0
    %989 = vmatprep.subr.mxu0 0.0
    %990 = vmatpush2.msra.mxu0 0.0
    %991 = vmatprep.subr.mxu0 0.0
    %992 = vmatpush2.msra.mxu0 0.0
    %993 = vmatprep.subr.mxu0 0.0
    %994 = vmatpush2.msra.mxu0 0.0
    %995 = vmatprep.subr.mxu0 0.0
    %996 = vmatpush2.msra.mxu0 0.0
    %997 = vmatprep.subr.mxu0 0.0
    %998 = vmatpush2.msra.mxu0 0.0
    %999 = vmatprep.subr.mxu0 0.0
    %1000 = vmatpush2.msra.mxu0 0.0
    %1001 = vmatprep.subr.mxu0 0.0
    %1002 = vmatpush2.msra.mxu0 0.0
    %1003 = vmatprep.subr.mxu0 0.0
    %1004 = vmatpush2.msra.mxu0 0.0
    %1005 = vmatprep.mubr.f32.mxu0 0.0
    %1006 = vmatmul.mubr.f32.gmra.mxu0 %v939
    %v1007 = vpop.f32.mrf.mxu0
    %v1008 = vadd.f32 0.0, %v1007
    %v1009 = vpop.f32.mrf.mxu0
    %1010 = vdwg.mxu0
    %v1011 = vpack.c.bf16 %v1008, %v1008
    %v1012 = vpack.c.bf16 %v120, %v120
    %v1014 = vsel %vm196, %v1011, 0
    %v1017 = vsel %vm538, %v1012, 0
    %1019 = vmatprep.subr.bf16.mxu0 0
    %1020 = vmatpush1.bf16.msra.mxu0 0
    %1021 = vmatprep.subr.bf16.mxu0 0
    %1022 = vmatpush1.bf16.msra.mxu0 0
    %1023 = vmatprep.subr.bf16.mxu0 0
    %1024 = vmatpush1.bf16.msra.mxu0 0
    %1025 = vmatprep.subr.bf16.mxu0 0
    %1026 = vmatpush1.bf16.msra.mxu0 0
    %1027 = vmatprep.subr.bf16.mxu0 0
    %1028 = vmatpush1.bf16.msra.mxu0 0
    %1029 = vmatprep.subr.bf16.mxu0 0
    %1030 = vmatpush1.bf16.msra.mxu0 0
    %1031 = vmatprep.subr.bf16.mxu0 0
    %1032 = vmatpush1.bf16.msra.mxu0 0
    %1033 = vmatprep.subr.bf16.mxu0 0
    %1034 = vmatpush1.bf16.msra.mxu0 %v1017
    %1035 = vmatprep.subr.bf16.mxu0 0
    %1036 = vmatpush2.bf16.msra.mxu0 0
    %1037 = vmatprep.subr.bf16.mxu0 0
    %1038 = vmatpush2.bf16.msra.mxu0 0
    %1039 = vmatprep.subr.bf16.mxu0 0
    %1040 = vmatpush2.bf16.msra.mxu0 0
    %1041 = vmatprep.subr.bf16.mxu0 0
    %1042 = vmatpush2.bf16.msra.mxu0 0
    %1043 = vmatprep.subr.bf16.mxu0 0
    %1044 = vmatpush2.bf16.msra.mxu0 0
    %1045 = vmatprep.subr.bf16.mxu0 0
    %1046 = vmatpush2.bf16.msra.mxu0 0
    %1047 = vmatprep.subr.bf16.mxu0 0
    %1048 = vmatpush2.bf16.msra.mxu0 0
    %1049 = vmatprep.subr.bf16.mxu0 0
    %1050 = vmatpush2.bf16.msra.mxu0 0
    %1051 = vmatprep.mubr.bf16.mxu0 0
    %1052 = vmatmul.mubr.bf16.gmra.mxu0 %v1014
    %v1053 = vpop.f32.mrf.mxu0
    %v1054 = vadd.f32 0.0, %v1053
    %v1055 = vpop.f32.mrf.mxu0
    %v1056 = vpop.f32.mrf.mxu0
    %v1057 = vpop.f32.mrf.mxu0
    %1058 = vdwg.mxu0
    %v1059 = vadd.f32 %v843, %v1054
    %1061 = vrot.lane.b32.xlu0 %v190, 96
    %v1062 = vpop.permute.xlu0 %1061
    %v1063 = vsel %vm196, %v190, 0
    %v1065 = vsel %vm196, %v1062, 0
    %1067 = vmatprep.subr.mxu0 0.0
    %1068 = vmatpush1.xpose.msra.mxu0 0.0
    %1069 = vmatprep.subr.mxu0 0.0
    %1070 = vmatpush1.xpose.msra.mxu0 0.0
    %1071 = vmatprep.subr.mxu0 0.0
    %1072 = vmatpush1.xpose.msra.mxu0 0.0
    %1073 = vmatprep.subr.mxu0 0.0
    %1074 = vmatpush1.xpose.msra.mxu0 0.0
    %1075 = vmatprep.subr.mxu0 0.0
    %1076 = vmatpush1.xpose.msra.mxu0 0.0
    %1077 = vmatprep.subr.mxu0 0.0
    %1078 = vmatpush1.xpose.msra.mxu0 0.0
    %1079 = vmatprep.subr.mxu0 0.0
    %1080 = vmatpush1.xpose.msra.mxu0 0.0
    %1081 = vmatprep.subr.mxu0 0.0
    %1082 = vmatpush1.xpose.msra.mxu0 0.0
    %1083 = vmatprep.subr.mxu0 0.0
    %1084 = vmatpush1.xpose.msra.mxu0 0.0
    %1085 = vmatprep.subr.mxu0 0.0
    %1086 = vmatpush1.xpose.msra.mxu0 0.0
    %1087 = vmatprep.subr.mxu0 0.0
    %1088 = vmatpush1.xpose.msra.mxu0 0.0
    %1089 = vmatprep.subr.mxu0 0.0
    %1090 = vmatpush1.xpose.msra.mxu0 0.0
    %1091 = vmatprep.subr.mxu0 0.0
    %1092 = vmatpush1.xpose.msra.mxu0 0.0
    %1093 = vmatprep.subr.mxu0 0.0
    %1094 = vmatpush1.xpose.msra.mxu0 0.0
    %1095 = vmatprep.subr.mxu0 0.0
    %1096 = vmatpush1.xpose.msra.mxu0 0.0
    %1097 = vmatprep.subr.mxu0 0.0
    %1098 = vmatpush1.xpose.msra.mxu0 %v1065
    %1099 = vmatprep.subr.mxu0 0.0
    %1100 = vmatpush2.xpose.msra.mxu0 0.0
    %1101 = vmatprep.subr.mxu0 0.0
    %1102 = vmatpush2.xpose.msra.mxu0 0.0
    %1103 = vmatprep.subr.mxu0 0.0
    %1104 = vmatpush2.xpose.msra.mxu0 0.0
    %1105 = vmatprep.subr.mxu0 0.0
    %1106 = vmatpush2.xpose.msra.mxu0 0.0
    %1107 = vmatprep.subr.mxu0 0.0
    %1108 = vmatpush2.xpose.msra.mxu0 0.0
    %1109 = vmatprep.subr.mxu0 0.0
    %1110 = vmatpush2.xpose.msra.mxu0 0.0
    %1111 = vmatprep.subr.mxu0 0.0
    %1112 = vmatpush2.xpose.msra.mxu0 0.0
    %1113 = vmatprep.subr.mxu0 0.0
    %1114 = vmatpush2.xpose.msra.mxu0 0.0
    %1115 = vmatprep.subr.mxu0 0.0
    %1116 = vmatpush2.xpose.msra.mxu0 0.0
    %1117 = vmatprep.subr.mxu0 0.0
    %1118 = vmatpush2.xpose.msra.mxu0 0.0
    %1119 = vmatprep.subr.mxu0 0.0
    %1120 = vmatpush2.xpose.msra.mxu0 0.0
    %1121 = vmatprep.subr.mxu0 0.0
    %1122 = vmatpush2.xpose.msra.mxu0 0.0
    %1123 = vmatprep.subr.mxu0 0.0
    %1124 = vmatpush2.xpose.msra.mxu0 0.0
    %1125 = vmatprep.subr.mxu0 0.0
    %1126 = vmatpush2.xpose.msra.mxu0 0.0
    %1127 = vmatprep.subr.mxu0 0.0
    %1128 = vmatpush2.xpose.msra.mxu0 0.0
    %1129 = vmatprep.subr.mxu0 0.0
    %1130 = vmatpush2.xpose.msra.mxu0 0.0
    %1131 = vmatprep.mubr.f32.mxu0 0.0
    %1132 = vmatmul.mubr.f32.gmra.mxu0 %v1063
    %v1133 = vpop.f32.mrf.mxu0
    %v1134 = vadd.f32 0.0, %v1133
    %v1135 = vpop.f32.mrf.mxu0
    %1136 = vdwg.mxu0
    %v1137 = vmul.f32 %v1134, 0.35355338
    %v1138 = vlaneseq
    %v1139 = vshrl.u32 %v1138, 7
    %v1140 = vsub.s32 1, %v1139
    %v1141 = vrot.slane %v65, %v1140
    %v1142 = vadd.f32 %v1137, %v1141
    %v1143 = vsel %vm196, %v1142, -inf
    %1144 = vmax.xlane.f32.xlu0 %v1143
    %v1145 = vpop.xlane.xlu0 %1144
    %v1146 = vsub.f32 %v1142, %v1145
    %v1147 = vmul.f32 %v1146, 1.442695
    %v1148 = vpow.pop %v1147
    %v1149 = vsel %vm196, %v1148, 0.0
    %1150 = vadd.xlane.f32.xlu0 %v1149
    %v1151 = vpop.xlane.xlu0 %1150
    %v1152 = vrcp.pop %v1151
    %v1153 = vmul.f32 %v1148, %v1152
    %1154 = vrot.lane.b32.xlu0 %v190, 64
    %v1155 = vpop.permute.xlu0 %1154
    %v1158 = vsel %vm196, %v1153, 0
    %1160 = vmatprep.subr.mxu0 0.0
    %1161 = vmatpush1.msra.mxu0 0.0
    %1162 = vmatprep.subr.mxu0 0.0
    %1163 = vmatpush1.msra.mxu0 0.0
    %1164 = vmatprep.subr.mxu0 0.0
    %1165 = vmatpush1.msra.mxu0 0.0
    %1166 = vmatprep.subr.mxu0 0.0
    %1167 = vmatpush1.msra.mxu0 0.0
    %1168 = vmatprep.subr.mxu0 0.0
    %1169 = vmatpush1.msra.mxu0 0.0
    %1170 = vmatprep.subr.mxu0 0.0
    %1171 = vmatpush1.msra.mxu0 0.0
    %1172 = vmatprep.subr.mxu0 0.0
    %1173 = vmatpush1.msra.mxu0 0.0
    %1174 = vmatprep.subr.mxu0 0.0
    %1175 = vmatpush1.msra.mxu0 0.0
    %1176 = vmatprep.subr.mxu0 0.0
    %1177 = vmatpush1.msra.mxu0 0.0
    %1178 = vmatprep.subr.mxu0 0.0
    %1179 = vmatpush1.msra.mxu0 0.0
    %1180 = vmatprep.subr.mxu0 0.0
    %1181 = vmatpush1.msra.mxu0 0.0
    %1182 = vmatprep.subr.mxu0 0.0
    %1183 = vmatpush1.msra.mxu0 0.0
    %1184 = vmatprep.subr.mxu0 0.0
    %1185 = vmatpush1.msra.mxu0 0.0
    %1186 = vmatprep.subr.mxu0 0.0
    %1187 = vmatpush1.msra.mxu0 0.0
    %1188 = vmatprep.subr.mxu0 0.0
    %1189 = vmatpush1.msra.mxu0 0.0
    %1190 = vmatprep.subr.mxu0 0.0
    %1191 = vmatpush1.msra.mxu0 %v1155
    %1192 = vmatprep.subr.mxu0 0.0
    %1193 = vmatpush2.msra.mxu0 0.0
    %1194 = vmatprep.subr.mxu0 0.0
    %1195 = vmatpush2.msra.mxu0 0.0
    %1196 = vmatprep.subr.mxu0 0.0
    %1197 = vmatpush2.msra.mxu0 0.0
    %1198 = vmatprep.subr.mxu0 0.0
    %1199 = vmatpush2.msra.mxu0 0.0
    %1200 = vmatprep.subr.mxu0 0.0
    %1201 = vmatpush2.msra.mxu0 0.0
    %1202 = vmatprep.subr.mxu0 0.0
    %1203 = vmatpush2.msra.mxu0 0.0
    %1204 = vmatprep.subr.mxu0 0.0
    %1205 = vmatpush2.msra.mxu0 0.0
    %1206 = vmatprep.subr.mxu0 0.0
    %1207 = vmatpush2.msra.mxu0 0.0
    %1208 = vmatprep.subr.mxu0 0.0
    %1209 = vmatpush2.msra.mxu0 0.0
    %1210 = vmatprep.subr.mxu0 0.0
    %1211 = vmatpush2.msra.mxu0 0.0
    %1212 = vmatprep.subr.mxu0 0.0
    %1213 = vmatpush2.msra.mxu0 0.0
    %1214 = vmatprep.subr.mxu0 0.0
    %1215 = vmatpush2.msra.mxu0 0.0
    %1216 = vmatprep.subr.mxu0 0.0
    %1217 = vmatpush2.msra.mxu0 0.0
    %1218 = vmatprep.subr.mxu0 0.0
    %1219 = vmatpush2.msra.mxu0 0.0
    %1220 = vmatprep.subr.mxu0 0.0
    %1221 = vmatpush2.msra.mxu0 0.0
    %1222 = vmatprep.subr.mxu0 0.0
    %1223 = vmatpush2.msra.mxu0 0.0
    %1224 = vmatprep.mubr.f32.mxu0 0.0
    %1225 = vmatmul.mubr.f32.gmra.mxu0 %v1158
    %v1226 = vpop.f32.mrf.mxu0
    %v1227 = vadd.f32 0.0, %v1226
    %v1228 = vpop.f32.mrf.mxu0
    %1229 = vdwg.mxu0
    %v1230 = vpack.c.bf16 %v1227, %v1227
    %1231 = vrot.lane.b32.xlu0 %v190, 120
    %v1232 = vpop.permute.xlu0 %1231
    %1233 = vrot.lane.b32.xlu0 %v190, 88
    %v1234 = vpop.permute.xlu0 %1233
    %v1235 = vsel %vm196, %v1232, 0
    %v1237 = vsel %vm196, %v1234, 0
    %1239 = vmatprep.subr.mxu0 0.0
    %1240 = vmatpush1.xpose.msra.mxu0 0.0
    %1241 = vmatprep.subr.mxu0 0.0
    %1242 = vmatpush1.xpose.msra.mxu0 0.0
    %1243 = vmatprep.subr.mxu0 0.0
    %1244 = vmatpush1.xpose.msra.mxu0 0.0
    %1245 = vmatprep.subr.mxu0 0.0
    %1246 = vmatpush1.xpose.msra.mxu0 0.0
    %1247 = vmatprep.subr.mxu0 0.0
    %1248 = vmatpush1.xpose.msra.mxu0 0.0
    %1249 = vmatprep.subr.mxu0 0.0
    %1250 = vmatpush1.xpose.msra.mxu0 0.0
    %1251 = vmatprep.subr.mxu0 0.0
    %1252 = vmatpush1.xpose.msra.mxu0 0.0
    %1253 = vmatprep.subr.mxu0 0.0
    %1254 = vmatpush1.xpose.msra.mxu0 0.0
    %1255 = vmatprep.subr.mxu0 0.0
    %1256 = vmatpush1.xpose.msra.mxu0 0.0
    %1257 = vmatprep.subr.mxu0 0.0
    %1258 = vmatpush1.xpose.msra.mxu0 0.0
    %1259 = vmatprep.subr.mxu0 0.0
    %1260 = vmatpush1.xpose.msra.mxu0 0.0
    %1261 = vmatprep.subr.mxu0 0.0
    %1262 = vmatpush1.xpose.msra.mxu0 0.0
    %1263 = vmatprep.subr.mxu0 0.0
    %1264 = vmatpush1.xpose.msra.mxu0 0.0
    %1265 = vmatprep.subr.mxu0 0.0
    %1266 = vmatpush1.xpose.msra.mxu0 0.0
    %1267 = vmatprep.subr.mxu0 0.0
    %1268 = vmatpush1.xpose.msra.mxu0 0.0
    %1269 = vmatprep.subr.mxu0 0.0
    %1270 = vmatpush1.xpose.msra.mxu0 %v1237
    %1271 = vmatprep.subr.mxu0 0.0
    %1272 = vmatpush2.xpose.msra.mxu0 0.0
    %1273 = vmatprep.subr.mxu0 0.0
    %1274 = vmatpush2.xpose.msra.mxu0 0.0
    %1275 = vmatprep.subr.mxu0 0.0
    %1276 = vmatpush2.xpose.msra.mxu0 0.0
    %1277 = vmatprep.subr.mxu0 0.0
    %1278 = vmatpush2.xpose.msra.mxu0 0.0
    %1279 = vmatprep.subr.mxu0 0.0
    %1280 = vmatpush2.xpose.msra.mxu0 0.0
    %1281 = vmatprep.subr.mxu0 0.0
    %1282 = vmatpush2.xpose.msra.mxu0 0.0
    %1283 = vmatprep.subr.mxu0 0.0
    %1284 = vmatpush2.xpose.msra.mxu0 0.0
    %1285 = vmatprep.subr.mxu0 0.0
    %1286 = vmatpush2.xpose.msra.mxu0 0.0
    %1287 = vmatprep.subr.mxu0 0.0
    %1288 = vmatpush2.xpose.msra.mxu0 0.0
    %1289 = vmatprep.subr.mxu0 0.0
    %1290 = vmatpush2.xpose.msra.mxu0 0.0
    %1291 = vmatprep.subr.mxu0 0.0
    %1292 = vmatpush2.xpose.msra.mxu0 0.0
    %1293 = vmatprep.subr.mxu0 0.0
    %1294 = vmatpush2.xpose.msra.mxu0 0.0
    %1295 = vmatprep.subr.mxu0 0.0
    %1296 = vmatpush2.xpose.msra.mxu0 0.0
    %1297 = vmatprep.subr.mxu0 0.0
    %1298 = vmatpush2.xpose.msra.mxu0 0.0
    %1299 = vmatprep.subr.mxu0 0.0
    %1300 = vmatpush2.xpose.msra.mxu0 0.0
    %1301 = vmatprep.subr.mxu0 0.0
    %1302 = vmatpush2.xpose.msra.mxu0 0.0
    %1303 = vmatprep.mubr.f32.mxu0 0.0
    %1304 = vmatmul.mubr.f32.gmra.mxu0 %v1235
    %v1305 = vpop.f32.mrf.mxu0
    %v1306 = vadd.f32 0.0, %v1305
    %v1307 = vpop.f32.mrf.mxu0
    %1308 = vdwg.mxu0
    %v1309 = vmul.f32 %v1306, 0.35355338
    %v1310 = vadd.f32 %v1309, %v1141
    %v1311 = vsel %vm196, %v1310, -inf
    %1312 = vmax.xlane.f32.xlu0 %v1311
    %v1313 = vpop.xlane.xlu0 %1312
    %v1314 = vsub.f32 %v1310, %v1313
    %v1315 = vmul.f32 %v1314, 1.442695
    %v1316 = vpow.pop %v1315
    %v1317 = vsel %vm196, %v1316, 0.0
    %1318 = vadd.xlane.f32.xlu0 %v1317
    %v1319 = vpop.xlane.xlu0 %1318
    %v1320 = vrcp.pop %v1319
    %v1321 = vmul.f32 %v1316, %v1320
    %1322 = vrot.lane.b32.xlu0 %v190, 56
    %v1323 = vpop.permute.xlu0 %1322
    %v1326 = vsel %vm196, %v1321, 0
    %1328 = vmatprep.subr.mxu0 0.0
    %1329 = vmatpush1.msra.mxu0 0.0
    %1330 = vmatprep.subr.mxu0 0.0
    %1331 = vmatpush1.msra.mxu0 0.0
    %1332 = vmatprep.subr.mxu0 0.0
    %1333 = vmatpush1.msra.mxu0 0.0
    %1334 = vmatprep.subr.mxu0 0.0
    %1335 = vmatpush1.msra.mxu0 0.0
    %1336 = vmatprep.subr.mxu0 0.0
    %1337 = vmatpush1.msra.mxu0 0.0
    %1338 = vmatprep.subr.mxu0 0.0
    %1339 = vmatpush1.msra.mxu0 0.0
    %1340 = vmatprep.subr.mxu0 0.0
    %1341 = vmatpush1.msra.mxu0 0.0
    %1342 = vmatprep.subr.mxu0 0.0
    %1343 = vmatpush1.msra.mxu0 0.0
    %1344 = vmatprep.subr.mxu0 0.0
    %1345 = vmatpush1.msra.mxu0 0.0
    %1346 = vmatprep.subr.mxu0 0.0
    %1347 = vmatpush1.msra.mxu0 0.0
    %1348 = vmatprep.subr.mxu0 0.0
    %1349 = vmatpush1.msra.mxu0 0.0
    %1350 = vmatprep.subr.mxu0 0.0
    %1351 = vmatpush1.msra.mxu0 0.0
    %1352 = vmatprep.subr.mxu0 0.0
    %1353 = vmatpush1.msra.mxu0 0.0
    %1354 = vmatprep.subr.mxu0 0.0
    %1355 = vmatpush1.msra.mxu0 0.0
    %1356 = vmatprep.subr.mxu0 0.0
    %1357 = vmatpush1.msra.mxu0 0.0
    %1358 = vmatprep.subr.mxu0 0.0
    %1359 = vmatpush1.msra.mxu0 %v1323
    %1360 = vmatprep.subr.mxu0 0.0
    %1361 = vmatpush2.msra.mxu0 0.0
    %1362 = vmatprep.subr.mxu0 0.0
    %1363 = vmatpush2.msra.mxu0 0.0
    %1364 = vmatprep.subr.mxu0 0.0
    %1365 = vmatpush2.msra.mxu0 0.0
    %1366 = vmatprep.subr.mxu0 0.0
    %1367 = vmatpush2.msra.mxu0 0.0
    %1368 = vmatprep.subr.mxu0 0.0
    %1369 = vmatpush2.msra.mxu0 0.0
    %1370 = vmatprep.subr.mxu0 0.0
    %1371 = vmatpush2.msra.mxu0 0.0
    %1372 = vmatprep.subr.mxu0 0.0
    %1373 = vmatpush2.msra.mxu0 0.0
    %1374 = vmatprep.subr.mxu0 0.0
    %1375 = vmatpush2.msra.mxu0 0.0
    %1376 = vmatprep.subr.mxu0 0.0
    %1377 = vmatpush2.msra.mxu0 0.0
    %1378 = vmatprep.subr.mxu0 0.0
    %1379 = vmatpush2.msra.mxu0 0.0
    %1380 = vmatprep.subr.mxu0 0.0
    %1381 = vmatpush2.msra.mxu0 0.0
    %1382 = vmatprep.subr.mxu0 0.0
    %1383 = vmatpush2.msra.mxu0 0.0
    %1384 = vmatprep.subr.mxu0 0.0
    %1385 = vmatpush2.msra.mxu0 0.0
    %1386 = vmatprep.subr.mxu0 0.0
    %1387 = vmatpush2.msra.mxu0 0.0
    %1388 = vmatprep.subr.mxu0 0.0
    %1389 = vmatpush2.msra.mxu0 0.0
    %1390 = vmatprep.subr.mxu0 0.0
    %1391 = vmatpush2.msra.mxu0 0.0
    %1392 = vmatprep.mubr.f32.mxu0 0.0
    %1393 = vmatmul.mubr.f32.gmra.mxu0 %v1326
    %v1394 = vpop.f32.mrf.mxu0
    %v1395 = vadd.f32 0.0, %v1394
    %v1396 = vpop.f32.mrf.mxu0
    %1397 = vdwg.mxu0
    %v1398 = vpack.c.bf16 %v1395, %v1395
    %v1400 = vsel %vm196, %v1398, 0
    %1402 = vmatprep.subr.bf16.mxu0 0
    %1403 = vmatpush1.bf16.msra.mxu0 0
    %1404 = vmatprep.subr.bf16.mxu0 0
    %1405 = vmatpush1.bf16.msra.mxu0 0
    %1406 = vmatprep.subr.bf16.mxu0 0
    %1407 = vmatpush1.bf16.msra.mxu0 0
    %1408 = vmatprep.subr.bf16.mxu0 0
    %1409 = vmatpush1.bf16.msra.mxu0 0
    %1410 = vmatprep.subr.bf16.mxu0 0
    %1411 = vmatpush1.bf16.msra.mxu0 0
    %1412 = vmatprep.subr.bf16.mxu0 0
    %1413 = vmatpush1.bf16.msra.mxu0 0
    %1414 = vmatprep.subr.bf16.mxu0 0
    %1415 = vmatpush1.bf16.msra.mxu0 0
    %1416 = vmatprep.subr.bf16.mxu0 0
    %1417 = vmatpush1.bf16.msra.mxu0 %v540
    %1418 = vmatprep.subr.bf16.mxu0 0
    %1419 = vmatpush2.bf16.msra.mxu0 0
    %1420 = vmatprep.subr.bf16.mxu0 0
    %1421 = vmatpush2.bf16.msra.mxu0 0
    %1422 = vmatprep.subr.bf16.mxu0 0
    %1423 = vmatpush2.bf16.msra.mxu0 0
    %1424 = vmatprep.subr.bf16.mxu0 0
    %1425 = vmatpush2.bf16.msra.mxu0 0
    %1426 = vmatprep.subr.bf16.mxu0 0
    %1427 = vmatpush2.bf16.msra.mxu0 0
    %1428 = vmatprep.subr.bf16.mxu0 0
    %1429 = vmatpush2.bf16.msra.mxu0 0
    %1430 = vmatprep.subr.bf16.mxu0 0
    %1431 = vmatpush2.bf16.msra.mxu0 0
    %1432 = vmatprep.subr.bf16.mxu0 0
    %1433 = vmatpush2.bf16.msra.mxu0 0
    %1434 = vmatprep.mubr.bf16.mxu0 0
    %1435 = vmatmul.mubr.bf16.gmra.mxu0 %v1400
    %v1436 = vpop.f32.mrf.mxu0
    %v1437 = vadd.f32 0.0, %v1436
    %v1438 = vpop.f32.mrf.mxu0
    %v1439 = vpop.f32.mrf.mxu0
    %v1440 = vpop.f32.mrf.mxu0
    %1441 = vdwg.mxu0
    %v1443 = vsel %vm196, %v1230, 0
    %1445 = vmatprep.subr.bf16.mxu0 0
    %1446 = vmatpush1.bf16.msra.mxu0 0
    %1447 = vmatprep.subr.bf16.mxu0 0
    %1448 = vmatpush1.bf16.msra.mxu0 0
    %1449 = vmatprep.subr.bf16.mxu0 0
    %1450 = vmatpush1.bf16.msra.mxu0 0
    %1451 = vmatprep.subr.bf16.mxu0 0
    %1452 = vmatpush1.bf16.msra.mxu0 0
    %1453 = vmatprep.subr.bf16.mxu0 0
    %1454 = vmatpush1.bf16.msra.mxu0 0
    %1455 = vmatprep.subr.bf16.mxu0 0
    %1456 = vmatpush1.bf16.msra.mxu0 0
    %1457 = vmatprep.subr.bf16.mxu0 0
    %1458 = vmatpush1.bf16.msra.mxu0 0
    %1459 = vmatprep.subr.bf16.mxu0 0
    %1460 = vmatpush1.bf16.msra.mxu0 %v586
    %1461 = vmatprep.subr.bf16.mxu0 0
    %1462 = vmatpush2.bf16.msra.mxu0 0
    %1463 = vmatprep.subr.bf16.mxu0 0
    %1464 = vmatpush2.bf16.msra.mxu0 0
    %1465 = vmatprep.subr.bf16.mxu0 0
    %1466 = vmatpush2.bf16.msra.mxu0 0
    %1467 = vmatprep.subr.bf16.mxu0 0
    %1468 = vmatpush2.bf16.msra.mxu0 0
    %1469 = vmatprep.subr.bf16.mxu0 0
    %1470 = vmatpush2.bf16.msra.mxu0 0
    %1471 = vmatprep.subr.bf16.mxu0 0
    %1472 = vmatpush2.bf16.msra.mxu0 0
    %1473 = vmatprep.subr.bf16.mxu0 0
    %1474 = vmatpush2.bf16.msra.mxu0 0
    %1475 = vmatprep.subr.bf16.mxu0 0
    %1476 = vmatpush2.bf16.msra.mxu0 0
    %1477 = vmatprep.mubr.bf16.mxu0 0
    %1478 = vmatmul.mubr.bf16.gmra.mxu0 %v1443
    %v1479 = vpop.f32.mrf.mxu0
    %v1480 = vadd.f32 %v1437, %v1479
    %v1481 = vpop.f32.mrf.mxu0
    %v1482 = vpop.f32.mrf.mxu0
    %v1483 = vpop.f32.mrf.mxu0
    %1484 = vdwg.mxu0
    %1485 = vrot.lane.b32.xlu0 %v190, 112
    %v1486 = vpop.permute.xlu0 %1485
    %1487 = vrot.lane.b32.xlu0 %v190, 80
    %v1488 = vpop.permute.xlu0 %1487
    %v1489 = vsel %vm196, %v1486, 0
    %v1491 = vsel %vm196, %v1488, 0
    %1493 = vmatprep.subr.mxu0 0.0
    %1494 = vmatpush1.xpose.msra.mxu0 0.0
    %1495 = vmatprep.subr.mxu0 0.0
    %1496 = vmatpush1.xpose.msra.mxu0 0.0
    %1497 = vmatprep.subr.mxu0 0.0
    %1498 = vmatpush1.xpose.msra.mxu0 0.0
    %1499 = vmatprep.subr.mxu0 0.0
    %1500 = vmatpush1.xpose.msra.mxu0 0.0
    %1501 = vmatprep.subr.mxu0 0.0
    %1502 = vmatpush1.xpose.msra.mxu0 0.0
    %1503 = vmatprep.subr.mxu0 0.0
    %1504 = vmatpush1.xpose.msra.mxu0 0.0
    %1505 = vmatprep.subr.mxu0 0.0
    %1506 = vmatpush1.xpose.msra.mxu0 0.0
    %1507 = vmatprep.subr.mxu0 0.0
    %1508 = vmatpush1.xpose.msra.mxu0 0.0
    %1509 = vmatprep.subr.mxu0 0.0
    %1510 = vmatpush1.xpose.msra.mxu0 0.0
    %1511 = vmatprep.subr.mxu0 0.0
    %1512 = vmatpush1.xpose.msra.mxu0 0.0
    %1513 = vmatprep.subr.mxu0 0.0
    %1514 = vmatpush1.xpose.msra.mxu0 0.0
    %1515 = vmatprep.subr.mxu0 0.0
    %1516 = vmatpush1.xpose.msra.mxu0 0.0
    %1517 = vmatprep.subr.mxu0 0.0
    %1518 = vmatpush1.xpose.msra.mxu0 0.0
    %1519 = vmatprep.subr.mxu0 0.0
    %1520 = vmatpush1.xpose.msra.mxu0 0.0
    %1521 = vmatprep.subr.mxu0 0.0
    %1522 = vmatpush1.xpose.msra.mxu0 0.0
    %1523 = vmatprep.subr.mxu0 0.0
    %1524 = vmatpush1.xpose.msra.mxu0 %v1491
    %1525 = vmatprep.subr.mxu0 0.0
    %1526 = vmatpush2.xpose.msra.mxu0 0.0
    %1527 = vmatprep.subr.mxu0 0.0
    %1528 = vmatpush2.xpose.msra.mxu0 0.0
    %1529 = vmatprep.subr.mxu0 0.0
    %1530 = vmatpush2.xpose.msra.mxu0 0.0
    %1531 = vmatprep.subr.mxu0 0.0
    %1532 = vmatpush2.xpose.msra.mxu0 0.0
    %1533 = vmatprep.subr.mxu0 0.0
    %1534 = vmatpush2.xpose.msra.mxu0 0.0
    %1535 = vmatprep.subr.mxu0 0.0
    %1536 = vmatpush2.xpose.msra.mxu0 0.0
    %1537 = vmatprep.subr.mxu0 0.0
    %1538 = vmatpush2.xpose.msra.mxu0 0.0
    %1539 = vmatprep.subr.mxu0 0.0
    %1540 = vmatpush2.xpose.msra.mxu0 0.0
    %1541 = vmatprep.subr.mxu0 0.0
    %1542 = vmatpush2.xpose.msra.mxu0 0.0
    %1543 = vmatprep.subr.mxu0 0.0
    %1544 = vmatpush2.xpose.msra.mxu0 0.0
    %1545 = vmatprep.subr.mxu0 0.0
    %1546 = vmatpush2.xpose.msra.mxu0 0.0
    %1547 = vmatprep.subr.mxu0 0.0
    %1548 = vmatpush2.xpose.msra.mxu0 0.0
    %1549 = vmatprep.subr.mxu0 0.0
    %1550 = vmatpush2.xpose.msra.mxu0 0.0
    %1551 = vmatprep.subr.mxu0 0.0
    %1552 = vmatpush2.xpose.msra.mxu0 0.0
    %1553 = vmatprep.subr.mxu0 0.0
    %1554 = vmatpush2.xpose.msra.mxu0 0.0
    %1555 = vmatprep.subr.mxu0 0.0
    %1556 = vmatpush2.xpose.msra.mxu0 0.0
    %1557 = vmatprep.mubr.f32.mxu0 0.0
    %1558 = vmatmul.mubr.f32.gmra.mxu0 %v1489
    %v1559 = vpop.f32.mrf.mxu0
    %v1560 = vadd.f32 0.0, %v1559
    %v1561 = vpop.f32.mrf.mxu0
    %1562 = vdwg.mxu0
    %v1563 = vmul.f32 %v1560, 0.35355338
    %v1564 = vadd.f32 %v1563, %v1141
    %v1565 = vsel %vm196, %v1564, -inf
    %1566 = vmax.xlane.f32.xlu0 %v1565
    %v1567 = vpop.xlane.xlu0 %1566
    %v1568 = vsub.f32 %v1564, %v1567
    %v1569 = vmul.f32 %v1568, 1.442695
    %v1570 = vpow.pop %v1569
    %v1571 = vsel %vm196, %v1570, 0.0
    %1572 = vadd.xlane.f32.xlu0 %v1571
    %v1573 = vpop.xlane.xlu0 %1572
    %v1574 = vrcp.pop %v1573
    %v1575 = vmul.f32 %v1570, %v1574
    %1576 = vrot.lane.b32.xlu0 %v190, 48
    %v1577 = vpop.permute.xlu0 %1576
    %v1580 = vsel %vm196, %v1575, 0
    %1582 = vmatprep.subr.mxu0 0.0
    %1583 = vmatpush1.msra.mxu0 0.0
    %1584 = vmatprep.subr.mxu0 0.0
    %1585 = vmatpush1.msra.mxu0 0.0
    %1586 = vmatprep.subr.mxu0 0.0
    %1587 = vmatpush1.msra.mxu0 0.0
    %1588 = vmatprep.subr.mxu0 0.0
    %1589 = vmatpush1.msra.mxu0 0.0
    %1590 = vmatprep.subr.mxu0 0.0
    %1591 = vmatpush1.msra.mxu0 0.0
    %1592 = vmatprep.subr.mxu0 0.0
    %1593 = vmatpush1.msra.mxu0 0.0
    %1594 = vmatprep.subr.mxu0 0.0
    %1595 = vmatpush1.msra.mxu0 0.0
    %1596 = vmatprep.subr.mxu0 0.0
    %1597 = vmatpush1.msra.mxu0 0.0
    %1598 = vmatprep.subr.mxu0 0.0
    %1599 = vmatpush1.msra.mxu0 0.0
    %1600 = vmatprep.subr.mxu0 0.0
    %1601 = vmatpush1.msra.mxu0 0.0
    %1602 = vmatprep.subr.mxu0 0.0
    %1603 = vmatpush1.msra.mxu0 0.0
    %1604 = vmatprep.subr.mxu0 0.0
    %1605 = vmatpush1.msra.mxu0 0.0
    %1606 = vmatprep.subr.mxu0 0.0
    %1607 = vmatpush1.msra.mxu0 0.0
    %1608 = vmatprep.subr.mxu0 0.0
    %1609 = vmatpush1.msra.mxu0 0.0
    %1610 = vmatprep.subr.mxu0 0.0
    %1611 = vmatpush1.msra.mxu0 0.0
    %1612 = vmatprep.subr.mxu0 0.0
    %1613 = vmatpush1.msra.mxu0 %v1577
    %1614 = vmatprep.subr.mxu0 0.0
    %1615 = vmatpush2.msra.mxu0 0.0
    %1616 = vmatprep.subr.mxu0 0.0
    %1617 = vmatpush2.msra.mxu0 0.0
    %1618 = vmatprep.subr.mxu0 0.0
    %1619 = vmatpush2.msra.mxu0 0.0
    %1620 = vmatprep.subr.mxu0 0.0
    %1621 = vmatpush2.msra.mxu0 0.0
    %1622 = vmatprep.subr.mxu0 0.0
    %1623 = vmatpush2.msra.mxu0 0.0
    %1624 = vmatprep.subr.mxu0 0.0
    %1625 = vmatpush2.msra.mxu0 0.0
    %1626 = vmatprep.subr.mxu0 0.0
    %1627 = vmatpush2.msra.mxu0 0.0
    %1628 = vmatprep.subr.mxu0 0.0
    %1629 = vmatpush2.msra.mxu0 0.0
    %1630 = vmatprep.subr.mxu0 0.0
    %1631 = vmatpush2.msra.mxu0 0.0
    %1632 = vmatprep.subr.mxu0 0.0
    %1633 = vmatpush2.msra.mxu0 0.0
    %1634 = vmatprep.subr.mxu0 0.0
    %1635 = vmatpush2.msra.mxu0 0.0
    %1636 = vmatprep.subr.mxu0 0.0
    %1637 = vmatpush2.msra.mxu0 0.0
    %1638 = vmatprep.subr.mxu0 0.0
    %1639 = vmatpush2.msra.mxu0 0.0
    %1640 = vmatprep.subr.mxu0 0.0
    %1641 = vmatpush2.msra.mxu0 0.0
    %1642 = vmatprep.subr.mxu0 0.0
    %1643 = vmatpush2.msra.mxu0 0.0
    %1644 = vmatprep.subr.mxu0 0.0
    %1645 = vmatpush2.msra.mxu0 0.0
    %1646 = vmatprep.mubr.f32.mxu0 0.0
    %1647 = vmatmul.mubr.f32.gmra.mxu0 %v1580
    %v1648 = vpop.f32.mrf.mxu0
    %v1649 = vadd.f32 0.0, %v1648
    %v1650 = vpop.f32.mrf.mxu0
    %1651 = vdwg.mxu0
    %v1652 = vpack.c.bf16 %v1649, %v1649
    %v1654 = vsel %vm196, %v1652, 0
    %1656 = vmatprep.subr.bf16.mxu0 0
    %1657 = vmatpush1.bf16.msra.mxu0 0
    %1658 = vmatprep.subr.bf16.mxu0 0
    %1659 = vmatpush1.bf16.msra.mxu0 0
    %1660 = vmatprep.subr.bf16.mxu0 0
    %1661 = vmatpush1.bf16.msra.mxu0 0
    %1662 = vmatprep.subr.bf16.mxu0 0
    %1663 = vmatpush1.bf16.msra.mxu0 0
    %1664 = vmatprep.subr.bf16.mxu0 0
    %1665 = vmatpush1.bf16.msra.mxu0 0
    %1666 = vmatprep.subr.bf16.mxu0 0
    %1667 = vmatpush1.bf16.msra.mxu0 0
    %1668 = vmatprep.subr.bf16.mxu0 0
    %1669 = vmatpush1.bf16.msra.mxu0 0
    %1670 = vmatprep.subr.bf16.mxu0 0
    %1671 = vmatpush1.bf16.msra.mxu0 %v801
    %1672 = vmatprep.subr.bf16.mxu0 0
    %1673 = vmatpush2.bf16.msra.mxu0 0
    %1674 = vmatprep.subr.bf16.mxu0 0
    %1675 = vmatpush2.bf16.msra.mxu0 0
    %1676 = vmatprep.subr.bf16.mxu0 0
    %1677 = vmatpush2.bf16.msra.mxu0 0
    %1678 = vmatprep.subr.bf16.mxu0 0
    %1679 = vmatpush2.bf16.msra.mxu0 0
    %1680 = vmatprep.subr.bf16.mxu0 0
    %1681 = vmatpush2.bf16.msra.mxu0 0
    %1682 = vmatprep.subr.bf16.mxu0 0
    %1683 = vmatpush2.bf16.msra.mxu0 0
    %1684 = vmatprep.subr.bf16.mxu0 0
    %1685 = vmatpush2.bf16.msra.mxu0 0
    %1686 = vmatprep.subr.bf16.mxu0 0
    %1687 = vmatpush2.bf16.msra.mxu0 0
    %1688 = vmatprep.mubr.bf16.mxu0 0
    %1689 = vmatmul.mubr.bf16.gmra.mxu0 %v1654
    %v1690 = vpop.f32.mrf.mxu0
    %v1691 = vadd.f32 0.0, %v1690
    %v1692 = vpop.f32.mrf.mxu0
    %v1693 = vpop.f32.mrf.mxu0
    %v1694 = vpop.f32.mrf.mxu0
    %1695 = vdwg.mxu0
    %v1696 = vadd.f32 %v1480, %v1691
    %1697 = vrot.lane.b32.xlu0 %v190, 104
    %v1698 = vpop.permute.xlu0 %1697
    %1699 = vrot.lane.b32.xlu0 %v190, 72
    %v1700 = vpop.permute.xlu0 %1699
    %v1701 = vsel %vm196, %v1698, 0
    %v1703 = vsel %vm196, %v1700, 0
    %1705 = vmatprep.subr.mxu0 0.0
    %1706 = vmatpush1.xpose.msra.mxu0 0.0
    %1707 = vmatprep.subr.mxu0 0.0
    %1708 = vmatpush1.xpose.msra.mxu0 0.0
    %1709 = vmatprep.subr.mxu0 0.0
    %1710 = vmatpush1.xpose.msra.mxu0 0.0
    %1711 = vmatprep.subr.mxu0 0.0
    %1712 = vmatpush1.xpose.msra.mxu0 0.0
    %1713 = vmatprep.subr.mxu0 0.0
    %1714 = vmatpush1.xpose.msra.mxu0 0.0
    %1715 = vmatprep.subr.mxu0 0.0
    %1716 = vmatpush1.xpose.msra.mxu0 0.0
    %1717 = vmatprep.subr.mxu0 0.0
    %1718 = vmatpush1.xpose.msra.mxu0 0.0
    %1719 = vmatprep.subr.mxu0 0.0
    %1720 = vmatpush1.xpose.msra.mxu0 0.0
    %1721 = vmatprep.subr.mxu0 0.0
    %1722 = vmatpush1.xpose.msra.mxu0 0.0
    %1723 = vmatprep.subr.mxu0 0.0
    %1724 = vmatpush1.xpose.msra.mxu0 0.0
    %1725 = vmatprep.subr.mxu0 0.0
    %1726 = vmatpush1.xpose.msra.mxu0 0.0
    %1727 = vmatprep.subr.mxu0 0.0
    %1728 = vmatpush1.xpose.msra.mxu0 0.0
    %1729 = vmatprep.subr.mxu0 0.0
    %1730 = vmatpush1.xpose.msra.mxu0 0.0
    %1731 = vmatprep.subr.mxu0 0.0
    %1732 = vmatpush1.xpose.msra.mxu0 0.0
    %1733 = vmatprep.subr.mxu0 0.0
    %1734 = vmatpush1.xpose.msra.mxu0 0.0
    %1735 = vmatprep.subr.mxu0 0.0
    %1736 = vmatpush1.xpose.msra.mxu0 %v1703
    %1737 = vmatprep.subr.mxu0 0.0
    %1738 = vmatpush2.xpose.msra.mxu0 0.0
    %1739 = vmatprep.subr.mxu0 0.0
    %1740 = vmatpush2.xpose.msra.mxu0 0.0
    %1741 = vmatprep.subr.mxu0 0.0
    %1742 = vmatpush2.xpose.msra.mxu0 0.0
    %1743 = vmatprep.subr.mxu0 0.0
    %1744 = vmatpush2.xpose.msra.mxu0 0.0
    %1745 = vmatprep.subr.mxu0 0.0
    %1746 = vmatpush2.xpose.msra.mxu0 0.0
    %1747 = vmatprep.subr.mxu0 0.0
    %1748 = vmatpush2.xpose.msra.mxu0 0.0
    %1749 = vmatprep.subr.mxu0 0.0
    %1750 = vmatpush2.xpose.msra.mxu0 0.0
    %1751 = vmatprep.subr.mxu0 0.0
    %1752 = vmatpush2.xpose.msra.mxu0 0.0
    %1753 = vmatprep.subr.mxu0 0.0
    %1754 = vmatpush2.xpose.msra.mxu0 0.0
    %1755 = vmatprep.subr.mxu0 0.0
    %1756 = vmatpush2.xpose.msra.mxu0 0.0
    %1757 = vmatprep.subr.mxu0 0.0
    %1758 = vmatpush2.xpose.msra.mxu0 0.0
    %1759 = vmatprep.subr.mxu0 0.0
    %1760 = vmatpush2.xpose.msra.mxu0 0.0
    %1761 = vmatprep.subr.mxu0 0.0
    %1762 = vmatpush2.xpose.msra.mxu0 0.0
    %1763 = vmatprep.subr.mxu0 0.0
    %1764 = vmatpush2.xpose.msra.mxu0 0.0
    %1765 = vmatprep.subr.mxu0 0.0
    %1766 = vmatpush2.xpose.msra.mxu0 0.0
    %1767 = vmatprep.subr.mxu0 0.0
    %1768 = vmatpush2.xpose.msra.mxu0 0.0
    %1769 = vmatprep.mubr.f32.mxu0 0.0
    %1770 = vmatmul.mubr.f32.gmra.mxu0 %v1701
    %v1771 = vpop.f32.mrf.mxu0
    %v1772 = vadd.f32 0.0, %v1771
    %v1773 = vpop.f32.mrf.mxu0
    %1774 = vdwg.mxu0
    %v1775 = vmul.f32 %v1772, 0.35355338
    %v1776 = vadd.f32 %v1775, %v1141
    %v1777 = vsel %vm196, %v1776, -inf
    %1778 = vmax.xlane.f32.xlu0 %v1777
    %v1779 = vpop.xlane.xlu0 %1778
    %v1780 = vsub.f32 %v1776, %v1779
    %v1781 = vmul.f32 %v1780, 1.442695
    %v1782 = vpow.pop %v1781
    %v1783 = vsel %vm196, %v1782, 0.0
    %1784 = vadd.xlane.f32.xlu0 %v1783
    %v1785 = vpop.xlane.xlu0 %1784
    %v1786 = vrcp.pop %v1785
    %v1787 = vmul.f32 %v1782, %v1786
    %1788 = vrot.lane.b32.xlu0 %v190, 40
    %v1789 = vpop.permute.xlu0 %1788
    %v1792 = vsel %vm196, %v1787, 0
    %1794 = vmatprep.subr.mxu0 0.0
    %1795 = vmatpush1.msra.mxu0 0.0
    %1796 = vmatprep.subr.mxu0 0.0
    %1797 = vmatpush1.msra.mxu0 0.0
    %1798 = vmatprep.subr.mxu0 0.0
    %1799 = vmatpush1.msra.mxu0 0.0
    %1800 = vmatprep.subr.mxu0 0.0
    %1801 = vmatpush1.msra.mxu0 0.0
    %1802 = vmatprep.subr.mxu0 0.0
    %1803 = vmatpush1.msra.mxu0 0.0
    %1804 = vmatprep.subr.mxu0 0.0
    %1805 = vmatpush1.msra.mxu0 0.0
    %1806 = vmatprep.subr.mxu0 0.0
    %1807 = vmatpush1.msra.mxu0 0.0
    %1808 = vmatprep.subr.mxu0 0.0
    %1809 = vmatpush1.msra.mxu0 0.0
    %1810 = vmatprep.subr.mxu0 0.0
    %1811 = vmatpush1.msra.mxu0 0.0
    %1812 = vmatprep.subr.mxu0 0.0
    %1813 = vmatpush1.msra.mxu0 0.0
    %1814 = vmatprep.subr.mxu0 0.0
    %1815 = vmatpush1.msra.mxu0 0.0
    %1816 = vmatprep.subr.mxu0 0.0
    %1817 = vmatpush1.msra.mxu0 0.0
    %1818 = vmatprep.subr.mxu0 0.0
    %1819 = vmatpush1.msra.mxu0 0.0
    %1820 = vmatprep.subr.mxu0 0.0
    %1821 = vmatpush1.msra.mxu0 0.0
    %1822 = vmatprep.subr.mxu0 0.0
    %1823 = vmatpush1.msra.mxu0 0.0
    %1824 = vmatprep.subr.mxu0 0.0
    %1825 = vmatpush1.msra.mxu0 %v1789
    %1826 = vmatprep.subr.mxu0 0.0
    %1827 = vmatpush2.msra.mxu0 0.0
    %1828 = vmatprep.subr.mxu0 0.0
    %1829 = vmatpush2.msra.mxu0 0.0
    %1830 = vmatprep.subr.mxu0 0.0
    %1831 = vmatpush2.msra.mxu0 0.0
    %1832 = vmatprep.subr.mxu0 0.0
    %1833 = vmatpush2.msra.mxu0 0.0
    %1834 = vmatprep.subr.mxu0 0.0
    %1835 = vmatpush2.msra.mxu0 0.0
    %1836 = vmatprep.subr.mxu0 0.0
    %1837 = vmatpush2.msra.mxu0 0.0
    %1838 = vmatprep.subr.mxu0 0.0
    %1839 = vmatpush2.msra.mxu0 0.0
    %1840 = vmatprep.subr.mxu0 0.0
    %1841 = vmatpush2.msra.mxu0 0.0
    %1842 = vmatprep.subr.mxu0 0.0
    %1843 = vmatpush2.msra.mxu0 0.0
    %1844 = vmatprep.subr.mxu0 0.0
    %1845 = vmatpush2.msra.mxu0 0.0
    %1846 = vmatprep.subr.mxu0 0.0
    %1847 = vmatpush2.msra.mxu0 0.0
    %1848 = vmatprep.subr.mxu0 0.0
    %1849 = vmatpush2.msra.mxu0 0.0
    %1850 = vmatprep.subr.mxu0 0.0
    %1851 = vmatpush2.msra.mxu0 0.0
    %1852 = vmatprep.subr.mxu0 0.0
    %1853 = vmatpush2.msra.mxu0 0.0
    %1854 = vmatprep.subr.mxu0 0.0
    %1855 = vmatpush2.msra.mxu0 0.0
    %1856 = vmatprep.subr.mxu0 0.0
    %1857 = vmatpush2.msra.mxu0 0.0
    %1858 = vmatprep.mubr.f32.mxu0 0.0
    %1859 = vmatmul.mubr.f32.gmra.mxu0 %v1792
    %v1860 = vpop.f32.mrf.mxu0
    %v1861 = vadd.f32 0.0, %v1860
    %v1862 = vpop.f32.mrf.mxu0
    %1863 = vdwg.mxu0
    %v1864 = vpack.c.bf16 %v1861, %v1861
    %v1866 = vsel %vm196, %v1864, 0
    %1868 = vmatprep.subr.bf16.mxu0 0
    %1869 = vmatpush1.bf16.msra.mxu0 0
    %1870 = vmatprep.subr.bf16.mxu0 0
    %1871 = vmatpush1.bf16.msra.mxu0 0
    %1872 = vmatprep.subr.bf16.mxu0 0
    %1873 = vmatpush1.bf16.msra.mxu0 0
    %1874 = vmatprep.subr.bf16.mxu0 0
    %1875 = vmatpush1.bf16.msra.mxu0 0
    %1876 = vmatprep.subr.bf16.mxu0 0
    %1877 = vmatpush1.bf16.msra.mxu0 0
    %1878 = vmatprep.subr.bf16.mxu0 0
    %1879 = vmatpush1.bf16.msra.mxu0 0
    %1880 = vmatprep.subr.bf16.mxu0 0
    %1881 = vmatpush1.bf16.msra.mxu0 0
    %1882 = vmatprep.subr.bf16.mxu0 0
    %1883 = vmatpush1.bf16.msra.mxu0 %v1017
    %1884 = vmatprep.subr.bf16.mxu0 0
    %1885 = vmatpush2.bf16.msra.mxu0 0
    %1886 = vmatprep.subr.bf16.mxu0 0
    %1887 = vmatpush2.bf16.msra.mxu0 0
    %1888 = vmatprep.subr.bf16.mxu0 0
    %1889 = vmatpush2.bf16.msra.mxu0 0
    %1890 = vmatprep.subr.bf16.mxu0 0
    %1891 = vmatpush2.bf16.msra.mxu0 0
    %1892 = vmatprep.subr.bf16.mxu0 0
    %1893 = vmatpush2.bf16.msra.mxu0 0
    %1894 = vmatprep.subr.bf16.mxu0 0
    %1895 = vmatpush2.bf16.msra.mxu0 0
    %1896 = vmatprep.subr.bf16.mxu0 0
    %1897 = vmatpush2.bf16.msra.mxu0 0
    %1898 = vmatprep.subr.bf16.mxu0 0
    %1899 = vmatpush2.bf16.msra.mxu0 0
    %1900 = vmatprep.mubr.bf16.mxu0 0
    %1901 = vmatmul.mubr.bf16.gmra.mxu0 %v1866
    %v1902 = vpop.f32.mrf.mxu0
    %v1903 = vadd.f32 0.0, %v1902
    %v1904 = vpop.f32.mrf.mxu0
    %v1905 = vpop.f32.mrf.mxu0
    %v1906 = vpop.f32.mrf.mxu0
    %1907 = vdwg.mxu0
    %v1908 = vadd.f32 %v1696, %v1903
    %v1910 = vlaneseq
    %v1911 = vshrl.u32 %v1910, 7
    %v1912 = vsub.s32 0, %v1911
    %v1913 = vrot.slane %v121, %v1912
    %v1915 = vadd.f32 %v1059, %v1913
    %v1916 = vadd.f32 %v1908, %v1913
    %v1917 = vadd.f32 %v110, %v1915
    %v1918 = vadd.f32 %v111, %v1916
    %v1919 = vsel %vm68, %v1917, 0.0
    %1920 = vadd.xlane.f32.xlu0 %v1919
    %v1921 = vpop.xlane.xlu0 %1920
    %v1922 = vsel %vm68, %v1918, 0.0
    %1923 = vadd.xlane.f32.xlu0 %v1922
    %v1924 = vpop.xlane.xlu0 %1923
    %v1925 = vmul.f32 %v1921, %v75
    %v1926 = vmul.f32 %v1924, %v75
    %v1927 = vsub.f32 %v1917, %v1925
    %v1928 = vsub.f32 %v1918, %v1926
    %v1929 = vmul.f32 %v1927, %v1927
    %v1930 = vmul.f32 %v1928, %v1928
    %v1931 = vsel %vm68, %v1929, 0.0
    %1932 = vadd.xlane.f32.xlu0 %v1931
    %v1933 = vpop.xlane.xlu0 %1932
    %v1934 = vsel %vm68, %v1930, 0.0
    %1935 = vadd.xlane.f32.xlu0 %v1934
    %v1936 = vpop.xlane.xlu0 %1935
    %v1937 = vmul.f32 %v1933, %v75
    %v1938 = vmul.f32 %v1936, %v75
    %v1939 = vadd.f32 %v1937, 1e-12
    %v1940 = vadd.f32 %v1938, 1e-12
    %v1941 = vrsqrt.pop %v1939
    %v1942 = vrsqrt.pop %v1940
    %v1943 = vmul.f32 %v1927, %v1941
    %v1944 = vmul.f32 %v1928, %v1942
    %v1946 = vlaneseq
    %v1947 = vshrl.u32 %v1946, 7
    %v1948 = vsub.s32 0, %v1947
    %v1949 = vrot.slane %v122, %v1948
    %v1951 = vmul.f32 %v1943, %v1949
    %v1952 = vmul.f32 %v1944, %v1949
    %v1954 = vlaneseq
    %v1955 = vshrl.u32 %v1954, 7
    %v1956 = vsub.s32 0, %v1955
    %v1957 = vrot.slane %v123, %v1956
    %v1959 = vadd.f32 %v1951, %v1957
    %v1960 = vadd.f32 %v1952, %v1957
    %v1961 = vpack.c.bf16 %v1960, %v1959
    %v1962 = vpack.c.bf16 %v125, %v124
    %v1963 = vpack.c.bf16 %v127, %v126
    %v1965 = vlaneseq
    %v1966 = vshrl.u32 %v1965, 7
    %v1967 = vsub.s32 0, %v1966
    %v1968 = vrot.slane %v128, %v1967
    %v1971 = vsel %vm68, %v1961, 0
    %1973 = vmatprep.subr.bf16.mxu0 0
    %1974 = vmatpush1.bf16.msra.mxu0 0
    %1975 = vmatprep.subr.bf16.mxu0 0
    %1976 = vmatpush1.bf16.msra.mxu0 0
    %1977 = vmatprep.subr.bf16.mxu0 0
    %1978 = vmatpush1.bf16.msra.mxu0 0
    %1979 = vmatprep.subr.bf16.mxu0 0
    %1980 = vmatpush1.bf16.msra.mxu0 0
    %1981 = vmatprep.subr.bf16.mxu0 0
    %1982 = vmatpush1.bf16.msra.mxu0 0
    %1983 = vmatprep.subr.bf16.mxu0 0
    %1984 = vmatpush1.bf16.msra.mxu0 0
    %1985 = vmatprep.subr.bf16.mxu0 0
    %1986 = vmatpush1.bf16.msra.mxu0 %v1963
    %1987 = vmatprep.subr.bf16.mxu0 0
    %1988 = vmatpush1.bf16.msra.mxu0 %v1962
    %1989 = vmatprep.subr.bf16.mxu0 0
    %1990 = vmatpush2.bf16.msra.mxu0 0
    %1991 = vmatprep.subr.bf16.mxu0 0
    %1992 = vmatpush2.bf16.msra.mxu0 0
    %1993 = vmatprep.subr.bf16.mxu0 0
    %1994 = vmatpush2.bf16.msra.mxu0 0
    %1995 = vmatprep.subr.bf16.mxu0 0
    %1996 = vmatpush2.bf16.msra.mxu0 0
    %1997 = vmatprep.subr.bf16.mxu0 0
    %1998 = vmatpush2.bf16.msra.mxu0 0
    %1999 = vmatprep.subr.bf16.mxu0 0
    %2000 = vmatpush2.bf16.msra.mxu0 0
    %2001 = vmatprep.subr.bf16.mxu0 0
    %2002 = vmatpush2.bf16.msra.mxu0 0
    %2003 = vmatprep.subr.bf16.mxu0 0
    %2004 = vmatpush2.bf16.msra.mxu0 0
    %2005 = vmatprep.mubr.bf16.mxu0 0
    %2006 = vmatmul.mubr.bf16.gmra.mxu0 %v1971
    %v2007 = vpop.f32.mrf.mxu0
    %v2008 = vadd.f32 %v1968, %v2007
    %v2009 = vpop.f32.mrf.mxu0
    %v2010 = vpop.f32.mrf.mxu0
    %v2011 = vadd.f32 %v1968, %v2010
    %v2012 = vpop.f32.mrf.mxu0
    %2013 = vdwg.mxu0
    %v2014 = vmul.f32 %v2008, %v2008
    %v2015 = vmul.f32 %v2011, %v2011
    %v2016 = vmul.f32 %v2008, %v2014
    %v2017 = vmul.f32 %v2011, %v2015
    %v2018 = vmul.f32 %v2016, 0.044715
    %v2019 = vmul.f32 %v2017, 0.044715
    %v2020 = vadd.f32 %v2008, %v2018
    %v2021 = vadd.f32 %v2011, %v2019
    %v2022 = vmul.f32 %v2020, 0.7978846
    %v2023 = vmul.f32 %v2021, 0.7978846
    %v2024 = vtanh.pop %v2022
    %v2025 = vtanh.pop %v2023
    %v2026 = vadd.f32 %v2024, 1.0
    %v2027 = vadd.f32 %v2025, 1.0
    %v2028 = vmul.f32 %v2026, 0.5
    %v2029 = vmul.f32 %v2027, 0.5
    %v2030 = vmul.f32 %v2008, %v2028
    %v2031 = vmul.f32 %v2011, %v2029
    %v2032 = vpack.c.bf16 %v2031, %v2030
    %v2033 = vpack.c.bf16 %v130, %v129
    %v2034 = vpack.c.bf16 %v132, %v131
    %v2035 = vpack.c.bf16 %v134, %v133
    %v2036 = vpack.c.bf16 %v136, %v135
    %v2038 = vlaneseq
    %v2039 = vshrl.u32 %v2038, 7
    %v2040 = vsub.s32 0, %v2039
    %v2041 = vrot.slane %v137, %v2040
    %vm2043 = vcmask 523264
    %v2045 = vsel %vm2043, %v2032, 0
    %2047 = vmatprep.subr.bf16.mxu0 0
    %2048 = vmatpush1.bf16.msra.mxu0 0
    %2049 = vmatprep.subr.bf16.mxu0 0
    %2050 = vmatpush1.bf16.msra.mxu0 0
    %2051 = vmatprep.subr.bf16.mxu0 0
    %2052 = vmatpush1.bf16.msra.mxu0 0
    %2053 = vmatprep.subr.bf16.mxu0 0
    %2054 = vmatpush1.bf16.msra.mxu0 0
    %2055 = vmatprep.subr.bf16.mxu0 0
    %2056 = vmatpush1.bf16.msra.mxu0 %v2036
    %2057 = vmatprep.subr.bf16.mxu0 0
    %2058 = vmatpush1.bf16.msra.mxu0 %v2035
    %2059 = vmatprep.subr.bf16.mxu0 0
    %2060 = vmatpush1.bf16.msra.mxu0 %v2034
    %2061 = vmatprep.subr.bf16.mxu0 0
    %2062 = vmatpush1.bf16.msra.mxu0 %v2033
    %2063 = vmatprep.subr.bf16.mxu0 0
    %2064 = vmatpush2.bf16.msra.mxu0 0
    %2065 = vmatprep.subr.bf16.mxu0 0
    %2066 = vmatpush2.bf16.msra.mxu0 0
    %2067 = vmatprep.subr.bf16.mxu0 0
    %2068 = vmatpush2.bf16.msra.mxu0 0
    %2069 = vmatprep.subr.bf16.mxu0 0
    %2070 = vmatpush2.bf16.msra.mxu0 0
    %2071 = vmatprep.subr.bf16.mxu0 0
    %2072 = vmatpush2.bf16.msra.mxu0 0
    %2073 = vmatprep.subr.bf16.mxu0 0
    %2074 = vmatpush2.bf16.msra.mxu0 0
    %2075 = vmatprep.subr.bf16.mxu0 0
    %2076 = vmatpush2.bf16.msra.mxu0 0
    %2077 = vmatprep.subr.bf16.mxu0 0
    %2078 = vmatpush2.bf16.msra.mxu0 0
    %2079 = vmatprep.mubr.bf16.mxu0 0
    %2080 = vmatmul.mubr.bf16.gmra.mxu0 %v2045
    %v2081 = vpop.f32.mrf.mxu0
    %v2082 = vadd.f32 %v2041, %v2081
    %v2083 = vpop.f32.mrf.mxu0
    %v2084 = vpop.f32.mrf.mxu0
    %v2085 = vadd.f32 %v2041, %v2084
    %v2086 = vpop.f32.mrf.mxu0
    %2087 = vdwg.mxu0
    %v2088 = vadd.f32 %v1959, %v2082
    %v2089 = vadd.f32 %v1960, %v2085
    %v2090 = vsel %vm68, %v2088, 0.0
    %2091 = vadd.xlane.f32.xlu0 %v2090
    %v2092 = vpop.xlane.xlu0 %2091
    %v2093 = vsel %vm68, %v2089, 0.0
    %2094 = vadd.xlane.f32.xlu0 %v2093
    %v2095 = vpop.xlane.xlu0 %2094
    %v2096 = vmul.f32 %v2092, %v75
    %v2097 = vmul.f32 %v2095, %v75
    %v2098 = vsub.f32 %v2088, %v2096
    %v2099 = vsub.f32 %v2089, %v2097
    %v2100 = vmul.f32 %v2098, %v2098
    %v2101 = vmul.f32 %v2099, %v2099
    %v2102 = vsel %vm68, %v2100, 0.0
    %2103 = vadd.xlane.f32.xlu0 %v2102
    %v2104 = vpop.xlane.xlu0 %2103
    %v2105 = vsel %vm68, %v2101, 0.0
    %2106 = vadd.xlane.f32.xlu0 %v2105
    %v2107 = vpop.xlane.xlu0 %2106
    %v2108 = vmul.f32 %v2104, %v75
    %v2109 = vmul.f32 %v2107, %v75
    %v2110 = vadd.f32 %v2108, 1e-12
    %v2111 = vadd.f32 %v2109, 1e-12
    %v2112 = vrsqrt.pop %v2110
    %v2113 = vrsqrt.pop %v2111
    %v2114 = vmul.f32 %v2098, %v2112
    %v2115 = vmul.f32 %v2099, %v2113
    %v2117 = vlaneseq
    %v2118 = vshrl.u32 %v2117, 7
    %v2119 = vsub.s32 0, %v2118
    %v2120 = vrot.slane %v138, %v2119
    %v2122 = vmul.f32 %v2114, %v2120
    %v2123 = vmul.f32 %v2115, %v2120
    %v2125 = vlaneseq
    %v2126 = vshrl.u32 %v2125, 7
    %v2127 = vsub.s32 0, %v2126
    %v2128 = vrot.slane %v139, %v2127
    %v2130 = vadd.f32 %v2122, %v2128
    %v2131 = vadd.f32 %v2123, %v2128
    %s2132 = scalar_lea.vmem %s4, 32
    %v2133 = vld [vmem:[%s2132] sm:$0xff]
    %v2134 = vld [vmem:[%s2132 + $0x8] sm:$0xff]
    %v2135 = vld [vmem:[%s2132 + $0x10] sm:$0xff]
    %v2136 = vld [vmem:[%s2132 + $0x18] sm:$0xff]
    %s2137 = scalar_lea.vmem %s5, 1
    %v2138 = vld [vmem:[%s2137] sm:$0x1]
    %s2139 = scalar_lea.vmem %s6, 32
    %v2140 = vld [vmem:[%s2139] sm:$0xff]
    %v2141 = vld [vmem:[%s2139 + $0x8] sm:$0xff]
    %v2142 = vld [vmem:[%s2139 + $0x10] sm:$0xff]
    %v2143 = vld [vmem:[%s2139 + $0x18] sm:$0xff]
    %s2144 = scalar_lea.vmem %s7, 1
    %v2145 = vld [vmem:[%s2144] sm:$0x1]
    %s2146 = scalar_lea.vmem %s8, 1
    %v2147 = vld [vmem:[%s2146] sm:$0x1]
    %s2148 = scalar_lea.vmem %s9, 1
    %v2149 = vld [vmem:[%s2148] sm:$0x1]
    %s2150 = scalar_lea.vmem %s10, 32
    %v2151 = vld [vmem:[%s2150] sm:$0xff]
    %v2152 = vld [vmem:[%s2150 + $0x8] sm:$0xff]
    %v2153 = vld [vmem:[%s2150 + $0x10] sm:$0xff]
    %v2154 = vld [vmem:[%s2150 + $0x18] sm:$0xff]
    %s2155 = scalar_lea.vmem %s11, 1
    %v2156 = vld [vmem:[%s2155] sm:$0x1]
    %s2157 = scalar_lea.vmem %s12, 64
    %v2158 = vld [vmem:[%s2157] sm:$0xff]
    %v2159 = vld [vmem:[%s2157 + $0x8] sm:$0xff]
    %v2160 = vld [vmem:[%s2157 + $0x10] sm:$0xff]
    %v2161 = vld [vmem:[%s2157 + $0x18] sm:$0xff]
    %v2162 = vld [vmem:[%s2157 + $0x20] sm:$0xff]
    %v2163 = vld [vmem:[%s2157 + $0x28] sm:$0xff]
    %v2164 = vld [vmem:[%s2157 + $0x30] sm:$0xff]
    %v2165 = vld [vmem:[%s2157 + $0x38] sm:$0xff]
    %s2166 = scalar_lea.vmem %s13, 1
    %v2167 = vld [vmem:[%s2166] sm:$0x1]
    %s2168 = scalar_lea.vmem %s14, 1
    %v2169 = vld [vmem:[%s2168] sm:$0x1]
    %s2170 = scalar_lea.vmem %s15, 1
    %v2171 = vld [vmem:[%s2170] sm:$0x1]
    %v2172 = vpack.c.bf16 %v2131, %v2130
    %v2173 = vpack.c.bf16 %v2134, %v2133
    %v2174 = vpack.c.bf16 %v2136, %v2135
    %v2176 = vlaneseq
    %v2177 = vshrl.u32 %v2176, 7
    %v2178 = vsub.s32 0, %v2177
    %v2179 = vrot.slane %v2138, %v2178
    %v2182 = vsel %vm68, %v2172, 0
    %2184 = vmatprep.subr.bf16.mxu0 0
    %2185 = vmatpush1.bf16.msra.mxu0 0
    %2186 = vmatprep.subr.bf16.mxu0 0
    %2187 = vmatpush1.bf16.msra.mxu0 0
    %2188 = vmatprep.subr.bf16.mxu0 0
    %2189 = vmatpush1.bf16.msra.mxu0 0
    %2190 = vmatprep.subr.bf16.mxu0 0
    %2191 = vmatpush1.bf16.msra.mxu0 0
    %2192 = vmatprep.subr.bf16.mxu0 0
    %2193 = vmatpush1.bf16.msra.mxu0 0
    %2194 = vmatprep.subr.bf16.mxu0 0
    %2195 = vmatpush1.bf16.msra.mxu0 0
    %2196 = vmatprep.subr.bf16.mxu0 0
    %2197 = vmatpush1.bf16.msra.mxu0 %v2174
    %2198 = vmatprep.subr.bf16.mxu0 0
    %2199 = vmatpush1.bf16.msra.mxu0 %v2173
    %2200 = vmatprep.subr.bf16.mxu0 0
    %2201 = vmatpush2.bf16.msra.mxu0 0
    %2202 = vmatprep.subr.bf16.mxu0 0
    %2203 = vmatpush2.bf16.msra.mxu0 0
    %2204 = vmatprep.subr.bf16.mxu0 0
    %2205 = vmatpush2.bf16.msra.mxu0 0
    %2206 = vmatprep.subr.bf16.mxu0 0
    %2207 = vmatpush2.bf16.msra.mxu0 0
    %2208 = vmatprep.subr.bf16.mxu0 0
    %2209 = vmatpush2.bf16.msra.mxu0 0
    %2210 = vmatprep.subr.bf16.mxu0 0
    %2211 = vmatpush2.bf16.msra.mxu0 0
    %2212 = vmatprep.subr.bf16.mxu0 0
    %2213 = vmatpush2.bf16.msra.mxu0 0
    %2214 = vmatprep.subr.bf16.mxu0 0
    %2215 = vmatpush2.bf16.msra.mxu0 0
    %2216 = vmatprep.mubr.bf16.mxu0 0
    %2217 = vmatmul.mubr.bf16.gmra.mxu0 %v2182
    %v2218 = vpop.f32.mrf.mxu0
    %v2219 = vadd.f32 %v2179, %v2218
    %v2220 = vpop.f32.mrf.mxu0
    %v2221 = vpop.f32.mrf.mxu0
    %v2222 = vadd.f32 %v2179, %v2221
    %v2223 = vpop.f32.mrf.mxu0
    %2224 = vdwg.mxu0
    %2226 = vrot.lane.b32.xlu0 %v2219, 96
    %v2227 = vpop.permute.xlu0 %2226
    %v2228 = vsel %vm196, %v2219, 0
    %v2230 = vsel %vm196, %v2227, 0
    %2232 = vmatprep.subr.mxu0 0.0
    %2233 = vmatpush1.xpose.msra.mxu0 0.0
    %2234 = vmatprep.subr.mxu0 0.0
    %2235 = vmatpush1.xpose.msra.mxu0 0.0
    %2236 = vmatprep.subr.mxu0 0.0
    %2237 = vmatpush1.xpose.msra.mxu0 0.0
    %2238 = vmatprep.subr.mxu0 0.0
    %2239 = vmatpush1.xpose.msra.mxu0 0.0
    %2240 = vmatprep.subr.mxu0 0.0
    %2241 = vmatpush1.xpose.msra.mxu0 0.0
    %2242 = vmatprep.subr.mxu0 0.0
    %2243 = vmatpush1.xpose.msra.mxu0 0.0
    %2244 = vmatprep.subr.mxu0 0.0
    %2245 = vmatpush1.xpose.msra.mxu0 0.0
    %2246 = vmatprep.subr.mxu0 0.0
    %2247 = vmatpush1.xpose.msra.mxu0 0.0
    %2248 = vmatprep.subr.mxu0 0.0
    %2249 = vmatpush1.xpose.msra.mxu0 0.0
    %2250 = vmatprep.subr.mxu0 0.0
    %2251 = vmatpush1.xpose.msra.mxu0 0.0
    %2252 = vmatprep.subr.mxu0 0.0
    %2253 = vmatpush1.xpose.msra.mxu0 0.0
    %2254 = vmatprep.subr.mxu0 0.0
    %2255 = vmatpush1.xpose.msra.mxu0 0.0
    %2256 = vmatprep.subr.mxu0 0.0
    %2257 = vmatpush1.xpose.msra.mxu0 0.0
    %2258 = vmatprep.subr.mxu0 0.0
    %2259 = vmatpush1.xpose.msra.mxu0 0.0
    %2260 = vmatprep.subr.mxu0 0.0
    %2261 = vmatpush1.xpose.msra.mxu0 0.0
    %2262 = vmatprep.subr.mxu0 0.0
    %2263 = vmatpush1.xpose.msra.mxu0 %v2230
    %2264 = vmatprep.subr.mxu0 0.0
    %2265 = vmatpush2.xpose.msra.mxu0 0.0
    %2266 = vmatprep.subr.mxu0 0.0
    %2267 = vmatpush2.xpose.msra.mxu0 0.0
    %2268 = vmatprep.subr.mxu0 0.0
    %2269 = vmatpush2.xpose.msra.mxu0 0.0
    %2270 = vmatprep.subr.mxu0 0.0
    %2271 = vmatpush2.xpose.msra.mxu0 0.0
    %2272 = vmatprep.subr.mxu0 0.0
    %2273 = vmatpush2.xpose.msra.mxu0 0.0
    %2274 = vmatprep.subr.mxu0 0.0
    %2275 = vmatpush2.xpose.msra.mxu0 0.0
    %2276 = vmatprep.subr.mxu0 0.0
    %2277 = vmatpush2.xpose.msra.mxu0 0.0
    %2278 = vmatprep.subr.mxu0 0.0
    %2279 = vmatpush2.xpose.msra.mxu0 0.0
    %2280 = vmatprep.subr.mxu0 0.0
    %2281 = vmatpush2.xpose.msra.mxu0 0.0
    %2282 = vmatprep.subr.mxu0 0.0
    %2283 = vmatpush2.xpose.msra.mxu0 0.0
    %2284 = vmatprep.subr.mxu0 0.0
    %2285 = vmatpush2.xpose.msra.mxu0 0.0
    %2286 = vmatprep.subr.mxu0 0.0
    %2287 = vmatpush2.xpose.msra.mxu0 0.0
    %2288 = vmatprep.subr.mxu0 0.0
    %2289 = vmatpush2.xpose.msra.mxu0 0.0
    %2290 = vmatprep.subr.mxu0 0.0
    %2291 = vmatpush2.xpose.msra.mxu0 0.0
    %2292 = vmatprep.subr.mxu0 0.0
    %2293 = vmatpush2.xpose.msra.mxu0 0.0
    %2294 = vmatprep.subr.mxu0 0.0
    %2295 = vmatpush2.xpose.msra.mxu0 0.0
    %2296 = vmatprep.mubr.f32.mxu0 0.0
    %2297 = vmatmul.mubr.f32.gmra.mxu0 %v2228
    %v2298 = vpop.f32.mrf.mxu0
    %v2299 = vadd.f32 0.0, %v2298
    %v2300 = vpop.f32.mrf.mxu0
    %2301 = vdwg.mxu0
    %v2302 = vmul.f32 %v2299, 0.35355338
    %v2303 = vadd.f32 %v2302, %v275
    %v2304 = vsel %vm196, %v2303, -inf
    %2305 = vmax.xlane.f32.xlu0 %v2304
    %v2306 = vpop.xlane.xlu0 %2305
    %v2307 = vsub.f32 %v2303, %v2306
    %v2308 = vmul.f32 %v2307, 1.442695
    %v2309 = vpow.pop %v2308
    %v2310 = vsel %vm196, %v2309, 0.0
    %2311 = vadd.xlane.f32.xlu0 %v2310
    %v2312 = vpop.xlane.xlu0 %2311
    %v2313 = vrcp.pop %v2312
    %v2314 = vmul.f32 %v2309, %v2313
    %2315 = vrot.lane.b32.xlu0 %v2219, 64
    %v2316 = vpop.permute.xlu0 %2315
    %v2319 = vsel %vm196, %v2314, 0
    %2321 = vmatprep.subr.mxu0 0.0
    %2322 = vmatpush1.msra.mxu0 0.0
    %2323 = vmatprep.subr.mxu0 0.0
    %2324 = vmatpush1.msra.mxu0 0.0
    %2325 = vmatprep.subr.mxu0 0.0
    %2326 = vmatpush1.msra.mxu0 0.0
    %2327 = vmatprep.subr.mxu0 0.0
    %2328 = vmatpush1.msra.mxu0 0.0
    %2329 = vmatprep.subr.mxu0 0.0
    %2330 = vmatpush1.msra.mxu0 0.0
    %2331 = vmatprep.subr.mxu0 0.0
    %2332 = vmatpush1.msra.mxu0 0.0
    %2333 = vmatprep.subr.mxu0 0.0
    %2334 = vmatpush1.msra.mxu0 0.0
    %2335 = vmatprep.subr.mxu0 0.0
    %2336 = vmatpush1.msra.mxu0 0.0
    %2337 = vmatprep.subr.mxu0 0.0
    %2338 = vmatpush1.msra.mxu0 0.0
    %2339 = vmatprep.subr.mxu0 0.0
    %2340 = vmatpush1.msra.mxu0 0.0
    %2341 = vmatprep.subr.mxu0 0.0
    %2342 = vmatpush1.msra.mxu0 0.0
    %2343 = vmatprep.subr.mxu0 0.0
    %2344 = vmatpush1.msra.mxu0 0.0
    %2345 = vmatprep.subr.mxu0 0.0
    %2346 = vmatpush1.msra.mxu0 0.0
    %2347 = vmatprep.subr.mxu0 0.0
    %2348 = vmatpush1.msra.mxu0 0.0
    %2349 = vmatprep.subr.mxu0 0.0
    %2350 = vmatpush1.msra.mxu0 0.0
    %2351 = vmatprep.subr.mxu0 0.0
    %2352 = vmatpush1.msra.mxu0 %v2316
    %2353 = vmatprep.subr.mxu0 0.0
    %2354 = vmatpush2.msra.mxu0 0.0
    %2355 = vmatprep.subr.mxu0 0.0
    %2356 = vmatpush2.msra.mxu0 0.0
    %2357 = vmatprep.subr.mxu0 0.0
    %2358 = vmatpush2.msra.mxu0 0.0
    %2359 = vmatprep.subr.mxu0 0.0
    %2360 = vmatpush2.msra.mxu0 0.0
    %2361 = vmatprep.subr.mxu0 0.0
    %2362 = vmatpush2.msra.mxu0 0.0
    %2363 = vmatprep.subr.mxu0 0.0
    %2364 = vmatpush2.msra.mxu0 0.0
    %2365 = vmatprep.subr.mxu0 0.0
    %2366 = vmatpush2.msra.mxu0 0.0
    %2367 = vmatprep.subr.mxu0 0.0
    %2368 = vmatpush2.msra.mxu0 0.0
    %2369 = vmatprep.subr.mxu0 0.0
    %2370 = vmatpush2.msra.mxu0 0.0
    %2371 = vmatprep.subr.mxu0 0.0
    %2372 = vmatpush2.msra.mxu0 0.0
    %2373 = vmatprep.subr.mxu0 0.0
    %2374 = vmatpush2.msra.mxu0 0.0
    %2375 = vmatprep.subr.mxu0 0.0
    %2376 = vmatpush2.msra.mxu0 0.0
    %2377 = vmatprep.subr.mxu0 0.0
    %2378 = vmatpush2.msra.mxu0 0.0
    %2379 = vmatprep.subr.mxu0 0.0
    %2380 = vmatpush2.msra.mxu0 0.0
    %2381 = vmatprep.subr.mxu0 0.0
    %2382 = vmatpush2.msra.mxu0 0.0
    %2383 = vmatprep.subr.mxu0 0.0
    %2384 = vmatpush2.msra.mxu0 0.0
    %2385 = vmatprep.mubr.f32.mxu0 0.0
    %2386 = vmatmul.mubr.f32.gmra.mxu0 %v2319
    %v2387 = vpop.f32.mrf.mxu0
    %v2388 = vadd.f32 0.0, %v2387
    %v2389 = vpop.f32.mrf.mxu0
    %2390 = vdwg.mxu0
    %v2391 = vpack.c.bf16 %v2388, %v2388
    %v2392 = vpack.c.bf16 %v2140, %v2140
    %2393 = vrot.lane.b32.xlu0 %v2219, 120
    %v2394 = vpop.permute.xlu0 %2393
    %2395 = vrot.lane.b32.xlu0 %v2219, 88
    %v2396 = vpop.permute.xlu0 %2395
    %v2397 = vsel %vm196, %v2394, 0
    %v2399 = vsel %vm196, %v2396, 0
    %2401 = vmatprep.subr.mxu0 0.0
    %2402 = vmatpush1.xpose.msra.mxu0 0.0
    %2403 = vmatprep.subr.mxu0 0.0
    %2404 = vmatpush1.xpose.msra.mxu0 0.0
    %2405 = vmatprep.subr.mxu0 0.0
    %2406 = vmatpush1.xpose.msra.mxu0 0.0
    %2407 = vmatprep.subr.mxu0 0.0
    %2408 = vmatpush1.xpose.msra.mxu0 0.0
    %2409 = vmatprep.subr.mxu0 0.0
    %2410 = vmatpush1.xpose.msra.mxu0 0.0
    %2411 = vmatprep.subr.mxu0 0.0
    %2412 = vmatpush1.xpose.msra.mxu0 0.0
    %2413 = vmatprep.subr.mxu0 0.0
    %2414 = vmatpush1.xpose.msra.mxu0 0.0
    %2415 = vmatprep.subr.mxu0 0.0
    %2416 = vmatpush1.xpose.msra.mxu0 0.0
    %2417 = vmatprep.subr.mxu0 0.0
    %2418 = vmatpush1.xpose.msra.mxu0 0.0
    %2419 = vmatprep.subr.mxu0 0.0
    %2420 = vmatpush1.xpose.msra.mxu0 0.0
    %2421 = vmatprep.subr.mxu0 0.0
    %2422 = vmatpush1.xpose.msra.mxu0 0.0
    %2423 = vmatprep.subr.mxu0 0.0
    %2424 = vmatpush1.xpose.msra.mxu0 0.0
    %2425 = vmatprep.subr.mxu0 0.0
    %2426 = vmatpush1.xpose.msra.mxu0 0.0
    %2427 = vmatprep.subr.mxu0 0.0
    %2428 = vmatpush1.xpose.msra.mxu0 0.0
    %2429 = vmatprep.subr.mxu0 0.0
    %2430 = vmatpush1.xpose.msra.mxu0 0.0
    %2431 = vmatprep.subr.mxu0 0.0
    %2432 = vmatpush1.xpose.msra.mxu0 %v2399
    %2433 = vmatprep.subr.mxu0 0.0
    %2434 = vmatpush2.xpose.msra.mxu0 0.0
    %2435 = vmatprep.subr.mxu0 0.0
    %2436 = vmatpush2.xpose.msra.mxu0 0.0
    %2437 = vmatprep.subr.mxu0 0.0
    %2438 = vmatpush2.xpose.msra.mxu0 0.0
    %2439 = vmatprep.subr.mxu0 0.0
    %2440 = vmatpush2.xpose.msra.mxu0 0.0
    %2441 = vmatprep.subr.mxu0 0.0
    %2442 = vmatpush2.xpose.msra.mxu0 0.0
    %2443 = vmatprep.subr.mxu0 0.0
    %2444 = vmatpush2.xpose.msra.mxu0 0.0
    %2445 = vmatprep.subr.mxu0 0.0
    %2446 = vmatpush2.xpose.msra.mxu0 0.0
    %2447 = vmatprep.subr.mxu0 0.0
    %2448 = vmatpush2.xpose.msra.mxu0 0.0
    %2449 = vmatprep.subr.mxu0 0.0
    %2450 = vmatpush2.xpose.msra.mxu0 0.0
    %2451 = vmatprep.subr.mxu0 0.0
    %2452 = vmatpush2.xpose.msra.mxu0 0.0
    %2453 = vmatprep.subr.mxu0 0.0
    %2454 = vmatpush2.xpose.msra.mxu0 0.0
    %2455 = vmatprep.subr.mxu0 0.0
    %2456 = vmatpush2.xpose.msra.mxu0 0.0
    %2457 = vmatprep.subr.mxu0 0.0
    %2458 = vmatpush2.xpose.msra.mxu0 0.0
    %2459 = vmatprep.subr.mxu0 0.0
    %2460 = vmatpush2.xpose.msra.mxu0 0.0
    %2461 = vmatprep.subr.mxu0 0.0
    %2462 = vmatpush2.xpose.msra.mxu0 0.0
    %2463 = vmatprep.subr.mxu0 0.0
    %2464 = vmatpush2.xpose.msra.mxu0 0.0
    %2465 = vmatprep.mubr.f32.mxu0 0.0
    %2466 = vmatmul.mubr.f32.gmra.mxu0 %v2397
    %v2467 = vpop.f32.mrf.mxu0
    %v2468 = vadd.f32 0.0, %v2467
    %v2469 = vpop.f32.mrf.mxu0
    %2470 = vdwg.mxu0
    %v2471 = vmul.f32 %v2468, 0.35355338
    %v2472 = vadd.f32 %v2471, %v275
    %v2473 = vsel %vm196, %v2472, -inf
    %2474 = vmax.xlane.f32.xlu0 %v2473
    %v2475 = vpop.xlane.xlu0 %2474
    %v2476 = vsub.f32 %v2472, %v2475
    %v2477 = vmul.f32 %v2476, 1.442695
    %v2478 = vpow.pop %v2477
    %v2479 = vsel %vm196, %v2478, 0.0
    %2480 = vadd.xlane.f32.xlu0 %v2479
    %v2481 = vpop.xlane.xlu0 %2480
    %v2482 = vrcp.pop %v2481
    %v2483 = vmul.f32 %v2478, %v2482
    %2484 = vrot.lane.b32.xlu0 %v2219, 56
    %v2485 = vpop.permute.xlu0 %2484
    %v2488 = vsel %vm196, %v2483, 0
    %2490 = vmatprep.subr.mxu0 0.0
    %2491 = vmatpush1.msra.mxu0 0.0
    %2492 = vmatprep.subr.mxu0 0.0
    %2493 = vmatpush1.msra.mxu0 0.0
    %2494 = vmatprep.subr.mxu0 0.0
    %2495 = vmatpush1.msra.mxu0 0.0
    %2496 = vmatprep.subr.mxu0 0.0
    %2497 = vmatpush1.msra.mxu0 0.0
    %2498 = vmatprep.subr.mxu0 0.0
    %2499 = vmatpush1.msra.mxu0 0.0
    %2500 = vmatprep.subr.mxu0 0.0
    %2501 = vmatpush1.msra.mxu0 0.0
    %2502 = vmatprep.subr.mxu0 0.0
    %2503 = vmatpush1.msra.mxu0 0.0
    %2504 = vmatprep.subr.mxu0 0.0
    %2505 = vmatpush1.msra.mxu0 0.0
    %2506 = vmatprep.subr.mxu0 0.0
    %2507 = vmatpush1.msra.mxu0 0.0
    %2508 = vmatprep.subr.mxu0 0.0
    %2509 = vmatpush1.msra.mxu0 0.0
    %2510 = vmatprep.subr.mxu0 0.0
    %2511 = vmatpush1.msra.mxu0 0.0
    %2512 = vmatprep.subr.mxu0 0.0
    %2513 = vmatpush1.msra.mxu0 0.0
    %2514 = vmatprep.subr.mxu0 0.0
    %2515 = vmatpush1.msra.mxu0 0.0
    %2516 = vmatprep.subr.mxu0 0.0
    %2517 = vmatpush1.msra.mxu0 0.0
    %2518 = vmatprep.subr.mxu0 0.0
    %2519 = vmatpush1.msra.mxu0 0.0
    %2520 = vmatprep.subr.mxu0 0.0
    %2521 = vmatpush1.msra.mxu0 %v2485
    %2522 = vmatprep.subr.mxu0 0.0
    %2523 = vmatpush2.msra.mxu0 0.0
    %2524 = vmatprep.subr.mxu0 0.0
    %2525 = vmatpush2.msra.mxu0 0.0
    %2526 = vmatprep.subr.mxu0 0.0
    %2527 = vmatpush2.msra.mxu0 0.0
    %2528 = vmatprep.subr.mxu0 0.0
    %2529 = vmatpush2.msra.mxu0 0.0
    %2530 = vmatprep.subr.mxu0 0.0
    %2531 = vmatpush2.msra.mxu0 0.0
    %2532 = vmatprep.subr.mxu0 0.0
    %2533 = vmatpush2.msra.mxu0 0.0
    %2534 = vmatprep.subr.mxu0 0.0
    %2535 = vmatpush2.msra.mxu0 0.0
    %2536 = vmatprep.subr.mxu0 0.0
    %2537 = vmatpush2.msra.mxu0 0.0
    %2538 = vmatprep.subr.mxu0 0.0
    %2539 = vmatpush2.msra.mxu0 0.0
    %2540 = vmatprep.subr.mxu0 0.0
    %2541 = vmatpush2.msra.mxu0 0.0
    %2542 = vmatprep.subr.mxu0 0.0
    %2543 = vmatpush2.msra.mxu0 0.0
    %2544 = vmatprep.subr.mxu0 0.0
    %2545 = vmatpush2.msra.mxu0 0.0
    %2546 = vmatprep.subr.mxu0 0.0
    %2547 = vmatpush2.msra.mxu0 0.0
    %2548 = vmatprep.subr.mxu0 0.0
    %2549 = vmatpush2.msra.mxu0 0.0
    %2550 = vmatprep.subr.mxu0 0.0
    %2551 = vmatpush2.msra.mxu0 0.0
    %2552 = vmatprep.subr.mxu0 0.0
    %2553 = vmatpush2.msra.mxu0 0.0
    %2554 = vmatprep.mubr.f32.mxu0 0.0
    %2555 = vmatmul.mubr.f32.gmra.mxu0 %v2488
    %v2556 = vpop.f32.mrf.mxu0
    %v2557 = vadd.f32 0.0, %v2556
    %v2558 = vpop.f32.mrf.mxu0
    %2559 = vdwg.mxu0
    %v2560 = vpack.c.bf16 %v2557, %v2557
    %v2561 = vpack.c.bf16 %v2141, %v2141
    %v2563 = vsel %vm196, %v2560, 0
    %v2566 = vsel %vm538, %v2561, 0
    %2568 = vmatprep.subr.bf16.mxu0 0
    %2569 = vmatpush1.bf16.msra.mxu0 0
    %2570 = vmatprep.subr.bf16.mxu0 0
    %2571 = vmatpush1.bf16.msra.mxu0 0
    %2572 = vmatprep.subr.bf16.mxu0 0
    %2573 = vmatpush1.bf16.msra.mxu0 0
    %2574 = vmatprep.subr.bf16.mxu0 0
    %2575 = vmatpush1.bf16.msra.mxu0 0
    %2576 = vmatprep.subr.bf16.mxu0 0
    %2577 = vmatpush1.bf16.msra.mxu0 0
    %2578 = vmatprep.subr.bf16.mxu0 0
    %2579 = vmatpush1.bf16.msra.mxu0 0
    %2580 = vmatprep.subr.bf16.mxu0 0
    %2581 = vmatpush1.bf16.msra.mxu0 0
    %2582 = vmatprep.subr.bf16.mxu0 0
    %2583 = vmatpush1.bf16.msra.mxu0 %v2566
    %2584 = vmatprep.subr.bf16.mxu0 0
    %2585 = vmatpush2.bf16.msra.mxu0 0
    %2586 = vmatprep.subr.bf16.mxu0 0
    %2587 = vmatpush2.bf16.msra.mxu0 0
    %2588 = vmatprep.subr.bf16.mxu0 0
    %2589 = vmatpush2.bf16.msra.mxu0 0
    %2590 = vmatprep.subr.bf16.mxu0 0
    %2591 = vmatpush2.bf16.msra.mxu0 0
    %2592 = vmatprep.subr.bf16.mxu0 0
    %2593 = vmatpush2.bf16.msra.mxu0 0
    %2594 = vmatprep.subr.bf16.mxu0 0
    %2595 = vmatpush2.bf16.msra.mxu0 0
    %2596 = vmatprep.subr.bf16.mxu0 0
    %2597 = vmatpush2.bf16.msra.mxu0 0
    %2598 = vmatprep.subr.bf16.mxu0 0
    %2599 = vmatpush2.bf16.msra.mxu0 0
    %2600 = vmatprep.mubr.bf16.mxu0 0
    %2601 = vmatmul.mubr.bf16.gmra.mxu0 %v2563
    %v2602 = vpop.f32.mrf.mxu0
    %v2603 = vadd.f32 0.0, %v2602
    %v2604 = vpop.f32.mrf.mxu0
    %v2605 = vpop.f32.mrf.mxu0
    %v2606 = vpop.f32.mrf.mxu0
    %2607 = vdwg.mxu0
    %v2609 = vsel %vm196, %v2391, 0
    %v2612 = vsel %vm538, %v2392, 0
    %2614 = vmatprep.subr.bf16.mxu0 0
    %2615 = vmatpush1.bf16.msra.mxu0 0
    %2616 = vmatprep.subr.bf16.mxu0 0
    %2617 = vmatpush1.bf16.msra.mxu0 0
    %2618 = vmatprep.subr.bf16.mxu0 0
    %2619 = vmatpush1.bf16.msra.mxu0 0
    %2620 = vmatprep.subr.bf16.mxu0 0
    %2621 = vmatpush1.bf16.msra.mxu0 0
    %2622 = vmatprep.subr.bf16.mxu0 0
    %2623 = vmatpush1.bf16.msra.mxu0 0
    %2624 = vmatprep.subr.bf16.mxu0 0
    %2625 = vmatpush1.bf16.msra.mxu0 0
    %2626 = vmatprep.subr.bf16.mxu0 0
    %2627 = vmatpush1.bf16.msra.mxu0 0
    %2628 = vmatprep.subr.bf16.mxu0 0
    %2629 = vmatpush1.bf16.msra.mxu0 %v2612
    %2630 = vmatprep.subr.bf16.mxu0 0
    %2631 = vmatpush2.bf16.msra.mxu0 0
    %2632 = vmatprep.subr.bf16.mxu0 0
    %2633 = vmatpush2.bf16.msra.mxu0 0
    %2634 = vmatprep.subr.bf16.mxu0 0
    %2635 = vmatpush2.bf16.msra.mxu0 0
    %2636 = vmatprep.subr.bf16.mxu0 0
    %2637 = vmatpush2.bf16.msra.mxu0 0
    %2638 = vmatprep.subr.bf16.mxu0 0
    %2639 = vmatpush2.bf16.msra.mxu0 0
    %2640 = vmatprep.subr.bf16.mxu0 0
    %2641 = vmatpush2.bf16.msra.mxu0 0
    %2642 = vmatprep.subr.bf16.mxu0 0
    %2643 = vmatpush2.bf16.msra.mxu0 0
    %2644 = vmatprep.subr.bf16.mxu0 0
    %2645 = vmatpush2.bf16.msra.mxu0 0
    %2646 = vmatprep.mubr.bf16.mxu0 0
    %2647 = vmatmul.mubr.bf16.gmra.mxu0 %v2609
    %v2648 = vpop.f32.mrf.mxu0
    %v2649 = vadd.f32 %v2603, %v2648
    %v2650 = vpop.f32.mrf.mxu0
    %v2651 = vpop.f32.mrf.mxu0
    %v2652 = vpop.f32.mrf.mxu0
    %2653 = vdwg.mxu0
    %2654 = vrot.lane.b32.xlu0 %v2219, 112
    %v2655 = vpop.permute.xlu0 %2654
    %2656 = vrot.lane.b32.xlu0 %v2219, 80
    %v2657 = vpop.permute.xlu0 %2656
    %v2658 = vsel %vm196, %v2655, 0
    %v2660 = vsel %vm196, %v2657, 0
    %2662 = vmatprep.subr.mxu0 0.0
    %2663 = vmatpush1.xpose.msra.mxu0 0.0
    %2664 = vmatprep.subr.mxu0 0.0
    %2665 = vmatpush1.xpose.msra.mxu0 0.0
    %2666 = vmatprep.subr.mxu0 0.0
    %2667 = vmatpush1.xpose.msra.mxu0 0.0
    %2668 = vmatprep.subr.mxu0 0.0
    %2669 = vmatpush1.xpose.msra.mxu0 0.0
    %2670 = vmatprep.subr.mxu0 0.0
    %2671 = vmatpush1.xpose.msra.mxu0 0.0
    %2672 = vmatprep.subr.mxu0 0.0
    %2673 = vmatpush1.xpose.msra.mxu0 0.0
    %2674 = vmatprep.subr.mxu0 0.0
    %2675 = vmatpush1.xpose.msra.mxu0 0.0
    %2676 = vmatprep.subr.mxu0 0.0
    %2677 = vmatpush1.xpose.msra.mxu0 0.0
    %2678 = vmatprep.subr.mxu0 0.0
    %2679 = vmatpush1.xpose.msra.mxu0 0.0
    %2680 = vmatprep.subr.mxu0 0.0
    %2681 = vmatpush1.xpose.msra.mxu0 0.0
    %2682 = vmatprep.subr.mxu0 0.0
    %2683 = vmatpush1.xpose.msra.mxu0 0.0
    %2684 = vmatprep.subr.mxu0 0.0
    %2685 = vmatpush1.xpose.msra.mxu0 0.0
    %2686 = vmatprep.subr.mxu0 0.0
    %2687 = vmatpush1.xpose.msra.mxu0 0.0
    %2688 = vmatprep.subr.mxu0 0.0
    %2689 = vmatpush1.xpose.msra.mxu0 0.0
    %2690 = vmatprep.subr.mxu0 0.0
    %2691 = vmatpush1.xpose.msra.mxu0 0.0
    %2692 = vmatprep.subr.mxu0 0.0
    %2693 = vmatpush1.xpose.msra.mxu0 %v2660
    %2694 = vmatprep.subr.mxu0 0.0
    %2695 = vmatpush2.xpose.msra.mxu0 0.0
    %2696 = vmatprep.subr.mxu0 0.0
    %2697 = vmatpush2.xpose.msra.mxu0 0.0
    %2698 = vmatprep.subr.mxu0 0.0
    %2699 = vmatpush2.xpose.msra.mxu0 0.0
    %2700 = vmatprep.subr.mxu0 0.0
    %2701 = vmatpush2.xpose.msra.mxu0 0.0
    %2702 = vmatprep.subr.mxu0 0.0
    %2703 = vmatpush2.xpose.msra.mxu0 0.0
    %2704 = vmatprep.subr.mxu0 0.0
    %2705 = vmatpush2.xpose.msra.mxu0 0.0
    %2706 = vmatprep.subr.mxu0 0.0
    %2707 = vmatpush2.xpose.msra.mxu0 0.0
    %2708 = vmatprep.subr.mxu0 0.0
    %2709 = vmatpush2.xpose.msra.mxu0 0.0
    %2710 = vmatprep.subr.mxu0 0.0
    %2711 = vmatpush2.xpose.msra.mxu0 0.0
    %2712 = vmatprep.subr.mxu0 0.0
    %2713 = vmatpush2.xpose.msra.mxu0 0.0
    %2714 = vmatprep.subr.mxu0 0.0
    %2715 = vmatpush2.xpose.msra.mxu0 0.0
    %2716 = vmatprep.subr.mxu0 0.0
    %2717 = vmatpush2.xpose.msra.mxu0 0.0
    %2718 = vmatprep.subr.mxu0 0.0
    %2719 = vmatpush2.xpose.msra.mxu0 0.0
    %2720 = vmatprep.subr.mxu0 0.0
    %2721 = vmatpush2.xpose.msra.mxu0 0.0
    %2722 = vmatprep.subr.mxu0 0.0
    %2723 = vmatpush2.xpose.msra.mxu0 0.0
    %2724 = vmatprep.subr.mxu0 0.0
    %2725 = vmatpush2.xpose.msra.mxu0 0.0
    %2726 = vmatprep.mubr.f32.mxu0 0.0
    %2727 = vmatmul.mubr.f32.gmra.mxu0 %v2658
    %v2728 = vpop.f32.mrf.mxu0
    %v2729 = vadd.f32 0.0, %v2728
    %v2730 = vpop.f32.mrf.mxu0
    %2731 = vdwg.mxu0
    %v2732 = vmul.f32 %v2729, 0.35355338
    %v2733 = vadd.f32 %v2732, %v275
    %v2734 = vsel %vm196, %v2733, -inf
    %2735 = vmax.xlane.f32.xlu0 %v2734
    %v2736 = vpop.xlane.xlu0 %2735
    %v2737 = vsub.f32 %v2733, %v2736
    %v2738 = vmul.f32 %v2737, 1.442695
    %v2739 = vpow.pop %v2738
    %v2740 = vsel %vm196, %v2739, 0.0
    %2741 = vadd.xlane.f32.xlu0 %v2740
    %v2742 = vpop.xlane.xlu0 %2741
    %v2743 = vrcp.pop %v2742
    %v2744 = vmul.f32 %v2739, %v2743
    %2745 = vrot.lane.b32.xlu0 %v2219, 48
    %v2746 = vpop.permute.xlu0 %2745
    %v2749 = vsel %vm196, %v2744, 0
    %2751 = vmatprep.subr.mxu0 0.0
    %2752 = vmatpush1.msra.mxu0 0.0
    %2753 = vmatprep.subr.mxu0 0.0
    %2754 = vmatpush1.msra.mxu0 0.0
    %2755 = vmatprep.subr.mxu0 0.0
    %2756 = vmatpush1.msra.mxu0 0.0
    %2757 = vmatprep.subr.mxu0 0.0
    %2758 = vmatpush1.msra.mxu0 0.0
    %2759 = vmatprep.subr.mxu0 0.0
    %2760 = vmatpush1.msra.mxu0 0.0
    %2761 = vmatprep.subr.mxu0 0.0
    %2762 = vmatpush1.msra.mxu0 0.0
    %2763 = vmatprep.subr.mxu0 0.0
    %2764 = vmatpush1.msra.mxu0 0.0
    %2765 = vmatprep.subr.mxu0 0.0
    %2766 = vmatpush1.msra.mxu0 0.0
    %2767 = vmatprep.subr.mxu0 0.0
    %2768 = vmatpush1.msra.mxu0 0.0
    %2769 = vmatprep.subr.mxu0 0.0
    %2770 = vmatpush1.msra.mxu0 0.0
    %2771 = vmatprep.subr.mxu0 0.0
    %2772 = vmatpush1.msra.mxu0 0.0
    %2773 = vmatprep.subr.mxu0 0.0
    %2774 = vmatpush1.msra.mxu0 0.0
    %2775 = vmatprep.subr.mxu0 0.0
    %2776 = vmatpush1.msra.mxu0 0.0
    %2777 = vmatprep.subr.mxu0 0.0
    %2778 = vmatpush1.msra.mxu0 0.0
    %2779 = vmatprep.subr.mxu0 0.0
    %2780 = vmatpush1.msra.mxu0 0.0
    %2781 = vmatprep.subr.mxu0 0.0
    %2782 = vmatpush1.msra.mxu0 %v2746
    %2783 = vmatprep.subr.mxu0 0.0
    %2784 = vmatpush2.msra.mxu0 0.0
    %2785 = vmatprep.subr.mxu0 0.0
    %2786 = vmatpush2.msra.mxu0 0.0
    %2787 = vmatprep.subr.mxu0 0.0
    %2788 = vmatpush2.msra.mxu0 0.0
    %2789 = vmatprep.subr.mxu0 0.0
    %2790 = vmatpush2.msra.mxu0 0.0
    %2791 = vmatprep.subr.mxu0 0.0
    %2792 = vmatpush2.msra.mxu0 0.0
    %2793 = vmatprep.subr.mxu0 0.0
    %2794 = vmatpush2.msra.mxu0 0.0
    %2795 = vmatprep.subr.mxu0 0.0
    %2796 = vmatpush2.msra.mxu0 0.0
    %2797 = vmatprep.subr.mxu0 0.0
    %2798 = vmatpush2.msra.mxu0 0.0
    %2799 = vmatprep.subr.mxu0 0.0
    %2800 = vmatpush2.msra.mxu0 0.0
    %2801 = vmatprep.subr.mxu0 0.0
    %2802 = vmatpush2.msra.mxu0 0.0
    %2803 = vmatprep.subr.mxu0 0.0
    %2804 = vmatpush2.msra.mxu0 0.0
    %2805 = vmatprep.subr.mxu0 0.0
    %2806 = vmatpush2.msra.mxu0 0.0
    %2807 = vmatprep.subr.mxu0 0.0
    %2808 = vmatpush2.msra.mxu0 0.0
    %2809 = vmatprep.subr.mxu0 0.0
    %2810 = vmatpush2.msra.mxu0 0.0
    %2811 = vmatprep.subr.mxu0 0.0
    %2812 = vmatpush2.msra.mxu0 0.0
    %2813 = vmatprep.subr.mxu0 0.0
    %2814 = vmatpush2.msra.mxu0 0.0
    %2815 = vmatprep.mubr.f32.mxu0 0.0
    %2816 = vmatmul.mubr.f32.gmra.mxu0 %v2749
    %v2817 = vpop.f32.mrf.mxu0
    %v2818 = vadd.f32 0.0, %v2817
    %v2819 = vpop.f32.mrf.mxu0
    %2820 = vdwg.mxu0
    %v2821 = vpack.c.bf16 %v2818, %v2818
    %v2822 = vpack.c.bf16 %v2142, %v2142
    %v2824 = vsel %vm196, %v2821, 0
    %v2827 = vsel %vm538, %v2822, 0
    %2829 = vmatprep.subr.bf16.mxu0 0
    %2830 = vmatpush1.bf16.msra.mxu0 0
    %2831 = vmatprep.subr.bf16.mxu0 0
    %2832 = vmatpush1.bf16.msra.mxu0 0
    %2833 = vmatprep.subr.bf16.mxu0 0
    %2834 = vmatpush1.bf16.msra.mxu0 0
    %2835 = vmatprep.subr.bf16.mxu0 0
    %2836 = vmatpush1.bf16.msra.mxu0 0
    %2837 = vmatprep.subr.bf16.mxu0 0
    %2838 = vmatpush1.bf16.msra.mxu0 0
    %2839 = vmatprep.subr.bf16.mxu0 0
    %2840 = vmatpush1.bf16.msra.mxu0 0
    %2841 = vmatprep.subr.bf16.mxu0 0
    %2842 = vmatpush1.bf16.msra.mxu0 0
    %2843 = vmatprep.subr.bf16.mxu0 0
    %2844 = vmatpush1.bf16.msra.mxu0 %v2827
    %2845 = vmatprep.subr.bf16.mxu0 0
    %2846 = vmatpush2.bf16.msra.mxu0 0
    %2847 = vmatprep.subr.bf16.mxu0 0
    %2848 = vmatpush2.bf16.msra.mxu0 0
    %2849 = vmatprep.subr.bf16.mxu0 0
    %2850 = vmatpush2.bf16.msra.mxu0 0
    %2851 = vmatprep.subr.bf16.mxu0 0
    %2852 = vmatpush2.bf16.msra.mxu0 0
    %2853 = vmatprep.subr.bf16.mxu0 0
    %2854 = vmatpush2.bf16.msra.mxu0 0
    %2855 = vmatprep.subr.bf16.mxu0 0
    %2856 = vmatpush2.bf16.msra.mxu0 0
    %2857 = vmatprep.subr.bf16.mxu0 0
    %2858 = vmatpush2.bf16.msra.mxu0 0
    %2859 = vmatprep.subr.bf16.mxu0 0
    %2860 = vmatpush2.bf16.msra.mxu0 0
    %2861 = vmatprep.mubr.bf16.mxu0 0
    %2862 = vmatmul.mubr.bf16.gmra.mxu0 %v2824
    %v2863 = vpop.f32.mrf.mxu0
    %v2864 = vadd.f32 0.0, %v2863
    %v2865 = vpop.f32.mrf.mxu0
    %v2866 = vpop.f32.mrf.mxu0
    %v2867 = vpop.f32.mrf.mxu0
    %2868 = vdwg.mxu0
    %v2869 = vadd.f32 %v2649, %v2864
    %2870 = vrot.lane.b32.xlu0 %v2219, 104
    %v2871 = vpop.permute.xlu0 %2870
    %2872 = vrot.lane.b32.xlu0 %v2219, 72
    %v2873 = vpop.permute.xlu0 %2872
    %v2874 = vsel %vm196, %v2871, 0
    %v2876 = vsel %vm196, %v2873, 0
    %2878 = vmatprep.subr.mxu0 0.0
    %2879 = vmatpush1.xpose.msra.mxu0 0.0
    %2880 = vmatprep.subr.mxu0 0.0
    %2881 = vmatpush1.xpose.msra.mxu0 0.0
    %2882 = vmatprep.subr.mxu0 0.0
    %2883 = vmatpush1.xpose.msra.mxu0 0.0
    %2884 = vmatprep.subr.mxu0 0.0
    %2885 = vmatpush1.xpose.msra.mxu0 0.0
    %2886 = vmatprep.subr.mxu0 0.0
    %2887 = vmatpush1.xpose.msra.mxu0 0.0
    %2888 = vmatprep.subr.mxu0 0.0
    %2889 = vmatpush1.xpose.msra.mxu0 0.0
    %2890 = vmatprep.subr.mxu0 0.0
    %2891 = vmatpush1.xpose.msra.mxu0 0.0
    %2892 = vmatprep.subr.mxu0 0.0
    %2893 = vmatpush1.xpose.msra.mxu0 0.0
    %2894 = vmatprep.subr.mxu0 0.0
    %2895 = vmatpush1.xpose.msra.mxu0 0.0
    %2896 = vmatprep.subr.mxu0 0.0
    %2897 = vmatpush1.xpose.msra.mxu0 0.0
    %2898 = vmatprep.subr.mxu0 0.0
    %2899 = vmatpush1.xpose.msra.mxu0 0.0
    %2900 = vmatprep.subr.mxu0 0.0
    %2901 = vmatpush1.xpose.msra.mxu0 0.0
    %2902 = vmatprep.subr.mxu0 0.0
    %2903 = vmatpush1.xpose.msra.mxu0 0.0
    %2904 = vmatprep.subr.mxu0 0.0
    %2905 = vmatpush1.xpose.msra.mxu0 0.0
    %2906 = vmatprep.subr.mxu0 0.0
    %2907 = vmatpush1.xpose.msra.mxu0 0.0
    %2908 = vmatprep.subr.mxu0 0.0
    %2909 = vmatpush1.xpose.msra.mxu0 %v2876
    %2910 = vmatprep.subr.mxu0 0.0
    %2911 = vmatpush2.xpose.msra.mxu0 0.0
    %2912 = vmatprep.subr.mxu0 0.0
    %2913 = vmatpush2.xpose.msra.mxu0 0.0
    %2914 = vmatprep.subr.mxu0 0.0
    %2915 = vmatpush2.xpose.msra.mxu0 0.0
    %2916 = vmatprep.subr.mxu0 0.0
    %2917 = vmatpush2.xpose.msra.mxu0 0.0
    %2918 = vmatprep.subr.mxu0 0.0
    %2919 = vmatpush2.xpose.msra.mxu0 0.0
    %2920 = vmatprep.subr.mxu0 0.0
    %2921 = vmatpush2.xpose.msra.mxu0 0.0
    %2922 = vmatprep.subr.mxu0 0.0
    %2923 = vmatpush2.xpose.msra.mxu0 0.0
    %2924 = vmatprep.subr.mxu0 0.0
    %2925 = vmatpush2.xpose.msra.mxu0 0.0
    %2926 = vmatprep.subr.mxu0 0.0
    %2927 = vmatpush2.xpose.msra.mxu0 0.0
    %2928 = vmatprep.subr.mxu0 0.0
    %2929 = vmatpush2.xpose.msra.mxu0 0.0
    %2930 = vmatprep.subr.mxu0 0.0
    %2931 = vmatpush2.xpose.msra.mxu0 0.0
    %2932 = vmatprep.subr.mxu0 0.0
    %2933 = vmatpush2.xpose.msra.mxu0 0.0
    %2934 = vmatprep.subr.mxu0 0.0
    %2935 = vmatpush2.xpose.msra.mxu0 0.0
    %2936 = vmatprep.subr.mxu0 0.0
    %2937 = vmatpush2.xpose.msra.mxu0 0.0
    %2938 = vmatprep.subr.mxu0 0.0
    %2939 = vmatpush2.xpose.msra.mxu0 0.0
    %2940 = vmatprep.subr.mxu0 0.0
    %2941 = vmatpush2.xpose.msra.mxu0 0.0
    %2942 = vmatprep.mubr.f32.mxu0 0.0
    %2943 = vmatmul.mubr.f32.gmra.mxu0 %v2874
    %v2944 = vpop.f32.mrf.mxu0
    %v2945 = vadd.f32 0.0, %v2944
    %v2946 = vpop.f32.mrf.mxu0
    %2947 = vdwg.mxu0
    %v2948 = vmul.f32 %v2945, 0.35355338
    %v2949 = vadd.f32 %v2948, %v275
    %v2950 = vsel %vm196, %v2949, -inf
    %2951 = vmax.xlane.f32.xlu0 %v2950
    %v2952 = vpop.xlane.xlu0 %2951
    %v2953 = vsub.f32 %v2949, %v2952
    %v2954 = vmul.f32 %v2953, 1.442695
    %v2955 = vpow.pop %v2954
    %v2956 = vsel %vm196, %v2955, 0.0
    %2957 = vadd.xlane.f32.xlu0 %v2956
    %v2958 = vpop.xlane.xlu0 %2957
    %v2959 = vrcp.pop %v2958
    %v2960 = vmul.f32 %v2955, %v2959
    %2961 = vrot.lane.b32.xlu0 %v2219, 40
    %v2962 = vpop.permute.xlu0 %2961
    %v2965 = vsel %vm196, %v2960, 0
    %2967 = vmatprep.subr.mxu0 0.0
    %2968 = vmatpush1.msra.mxu0 0.0
    %2969 = vmatprep.subr.mxu0 0.0
    %2970 = vmatpush1.msra.mxu0 0.0
    %2971 = vmatprep.subr.mxu0 0.0
    %2972 = vmatpush1.msra.mxu0 0.0
    %2973 = vmatprep.subr.mxu0 0.0
    %2974 = vmatpush1.msra.mxu0 0.0
    %2975 = vmatprep.subr.mxu0 0.0
    %2976 = vmatpush1.msra.mxu0 0.0
    %2977 = vmatprep.subr.mxu0 0.0
    %2978 = vmatpush1.msra.mxu0 0.0
    %2979 = vmatprep.subr.mxu0 0.0
    %2980 = vmatpush1.msra.mxu0 0.0
    %2981 = vmatprep.subr.mxu0 0.0
    %2982 = vmatpush1.msra.mxu0 0.0
    %2983 = vmatprep.subr.mxu0 0.0
    %2984 = vmatpush1.msra.mxu0 0.0
    %2985 = vmatprep.subr.mxu0 0.0
    %2986 = vmatpush1.msra.mxu0 0.0
    %2987 = vmatprep.subr.mxu0 0.0
    %2988 = vmatpush1.msra.mxu0 0.0
    %2989 = vmatprep.subr.mxu0 0.0
    %2990 = vmatpush1.msra.mxu0 0.0
    %2991 = vmatprep.subr.mxu0 0.0
    %2992 = vmatpush1.msra.mxu0 0.0
    %2993 = vmatprep.subr.mxu0 0.0
    %2994 = vmatpush1.msra.mxu0 0.0
    %2995 = vmatprep.subr.mxu0 0.0
    %2996 = vmatpush1.msra.mxu0 0.0
    %2997 = vmatprep.subr.mxu0 0.0
    %2998 = vmatpush1.msra.mxu0 %v2962
    %2999 = vmatprep.subr.mxu0 0.0
    %3000 = vmatpush2.msra.mxu0 0.0
    %3001 = vmatprep.subr.mxu0 0.0
    %3002 = vmatpush2.msra.mxu0 0.0
    %3003 = vmatprep.subr.mxu0 0.0
    %3004 = vmatpush2.msra.mxu0 0.0
    %3005 = vmatprep.subr.mxu0 0.0
    %3006 = vmatpush2.msra.mxu0 0.0
    %3007 = vmatprep.subr.mxu0 0.0
    %3008 = vmatpush2.msra.mxu0 0.0
    %3009 = vmatprep.subr.mxu0 0.0
    %3010 = vmatpush2.msra.mxu0 0.0
    %3011 = vmatprep.subr.mxu0 0.0
    %3012 = vmatpush2.msra.mxu0 0.0
    %3013 = vmatprep.subr.mxu0 0.0
    %3014 = vmatpush2.msra.mxu0 0.0
    %3015 = vmatprep.subr.mxu0 0.0
    %3016 = vmatpush2.msra.mxu0 0.0
    %3017 = vmatprep.subr.mxu0 0.0
    %3018 = vmatpush2.msra.mxu0 0.0
    %3019 = vmatprep.subr.mxu0 0.0
    %3020 = vmatpush2.msra.mxu0 0.0
    %3021 = vmatprep.subr.mxu0 0.0
    %3022 = vmatpush2.msra.mxu0 0.0
    %3023 = vmatprep.subr.mxu0 0.0
    %3024 = vmatpush2.msra.mxu0 0.0
    %3025 = vmatprep.subr.mxu0 0.0
    %3026 = vmatpush2.msra.mxu0 0.0
    %3027 = vmatprep.subr.mxu0 0.0
    %3028 = vmatpush2.msra.mxu0 0.0
    %3029 = vmatprep.subr.mxu0 0.0
    %3030 = vmatpush2.msra.mxu0 0.0
    %3031 = vmatprep.mubr.f32.mxu0 0.0
    %3032 = vmatmul.mubr.f32.gmra.mxu0 %v2965
    %v3033 = vpop.f32.mrf.mxu0
    %v3034 = vadd.f32 0.0, %v3033
    %v3035 = vpop.f32.mrf.mxu0
    %3036 = vdwg.mxu0
    %v3037 = vpack.c.bf16 %v3034, %v3034
    %v3038 = vpack.c.bf16 %v2143, %v2143
    %v3040 = vsel %vm196, %v3037, 0
    %v3043 = vsel %vm538, %v3038, 0
    %3045 = vmatprep.subr.bf16.mxu0 0
    %3046 = vmatpush1.bf16.msra.mxu0 0
    %3047 = vmatprep.subr.bf16.mxu0 0
    %3048 = vmatpush1.bf16.msra.mxu0 0
    %3049 = vmatprep.subr.bf16.mxu0 0
    %3050 = vmatpush1.bf16.msra.mxu0 0
    %3051 = vmatprep.subr.bf16.mxu0 0
    %3052 = vmatpush1.bf16.msra.mxu0 0
    %3053 = vmatprep.subr.bf16.mxu0 0
    %3054 = vmatpush1.bf16.msra.mxu0 0
    %3055 = vmatprep.subr.bf16.mxu0 0
    %3056 = vmatpush1.bf16.msra.mxu0 0
    %3057 = vmatprep.subr.bf16.mxu0 0
    %3058 = vmatpush1.bf16.msra.mxu0 0
    %3059 = vmatprep.subr.bf16.mxu0 0
    %3060 = vmatpush1.bf16.msra.mxu0 %v3043
    %3061 = vmatprep.subr.bf16.mxu0 0
    %3062 = vmatpush2.bf16.msra.mxu0 0
    %3063 = vmatprep.subr.bf16.mxu0 0
    %3064 = vmatpush2.bf16.msra.mxu0 0
    %3065 = vmatprep.subr.bf16.mxu0 0
    %3066 = vmatpush2.bf16.msra.mxu0 0
    %3067 = vmatprep.subr.bf16.mxu0 0
    %3068 = vmatpush2.bf16.msra.mxu0 0
    %3069 = vmatprep.subr.bf16.mxu0 0
    %3070 = vmatpush2.bf16.msra.mxu0 0
    %3071 = vmatprep.subr.bf16.mxu0 0
    %3072 = vmatpush2.bf16.msra.mxu0 0
    %3073 = vmatprep.subr.bf16.mxu0 0
    %3074 = vmatpush2.bf16.msra.mxu0 0
    %3075 = vmatprep.subr.bf16.mxu0 0
    %3076 = vmatpush2.bf16.msra.mxu0 0
    %3077 = vmatprep.mubr.bf16.mxu0 0
    %3078 = vmatmul.mubr.bf16.gmra.mxu0 %v3040
    %v3079 = vpop.f32.mrf.mxu0
    %v3080 = vadd.f32 0.0, %v3079
    %v3081 = vpop.f32.mrf.mxu0
    %v3082 = vpop.f32.mrf.mxu0
    %v3083 = vpop.f32.mrf.mxu0
    %3084 = vdwg.mxu0
    %v3085 = vadd.f32 %v2869, %v3080
    %3087 = vrot.lane.b32.xlu0 %v2222, 96
    %v3088 = vpop.permute.xlu0 %3087
    %v3089 = vsel %vm196, %v2222, 0
    %v3091 = vsel %vm196, %v3088, 0
    %3093 = vmatprep.subr.mxu0 0.0
    %3094 = vmatpush1.xpose.msra.mxu0 0.0
    %3095 = vmatprep.subr.mxu0 0.0
    %3096 = vmatpush1.xpose.msra.mxu0 0.0
    %3097 = vmatprep.subr.mxu0 0.0
    %3098 = vmatpush1.xpose.msra.mxu0 0.0
    %3099 = vmatprep.subr.mxu0 0.0
    %3100 = vmatpush1.xpose.msra.mxu0 0.0
    %3101 = vmatprep.subr.mxu0 0.0
    %3102 = vmatpush1.xpose.msra.mxu0 0.0
    %3103 = vmatprep.subr.mxu0 0.0
    %3104 = vmatpush1.xpose.msra.mxu0 0.0
    %3105 = vmatprep.subr.mxu0 0.0
    %3106 = vmatpush1.xpose.msra.mxu0 0.0
    %3107 = vmatprep.subr.mxu0 0.0
    %3108 = vmatpush1.xpose.msra.mxu0 0.0
    %3109 = vmatprep.subr.mxu0 0.0
    %3110 = vmatpush1.xpose.msra.mxu0 0.0
    %3111 = vmatprep.subr.mxu0 0.0
    %3112 = vmatpush1.xpose.msra.mxu0 0.0
    %3113 = vmatprep.subr.mxu0 0.0
    %3114 = vmatpush1.xpose.msra.mxu0 0.0
    %3115 = vmatprep.subr.mxu0 0.0
    %3116 = vmatpush1.xpose.msra.mxu0 0.0
    %3117 = vmatprep.subr.mxu0 0.0
    %3118 = vmatpush1.xpose.msra.mxu0 0.0
    %3119 = vmatprep.subr.mxu0 0.0
    %3120 = vmatpush1.xpose.msra.mxu0 0.0
    %3121 = vmatprep.subr.mxu0 0.0
    %3122 = vmatpush1.xpose.msra.mxu0 0.0
    %3123 = vmatprep.subr.mxu0 0.0
    %3124 = vmatpush1.xpose.msra.mxu0 %v3091
    %3125 = vmatprep.subr.mxu0 0.0
    %3126 = vmatpush2.xpose.msra.mxu0 0.0
    %3127 = vmatprep.subr.mxu0 0.0
    %3128 = vmatpush2.xpose.msra.mxu0 0.0
    %3129 = vmatprep.subr.mxu0 0.0
    %3130 = vmatpush2.xpose.msra.mxu0 0.0
    %3131 = vmatprep.subr.mxu0 0.0
    %3132 = vmatpush2.xpose.msra.mxu0 0.0
    %3133 = vmatprep.subr.mxu0 0.0
    %3134 = vmatpush2.xpose.msra.mxu0 0.0
    %3135 = vmatprep.subr.mxu0 0.0
    %3136 = vmatpush2.xpose.msra.mxu0 0.0
    %3137 = vmatprep.subr.mxu0 0.0
    %3138 = vmatpush2.xpose.msra.mxu0 0.0
    %3139 = vmatprep.subr.mxu0 0.0
    %3140 = vmatpush2.xpose.msra.mxu0 0.0
    %3141 = vmatprep.subr.mxu0 0.0
    %3142 = vmatpush2.xpose.msra.mxu0 0.0
    %3143 = vmatprep.subr.mxu0 0.0
    %3144 = vmatpush2.xpose.msra.mxu0 0.0
    %3145 = vmatprep.subr.mxu0 0.0
    %3146 = vmatpush2.xpose.msra.mxu0 0.0
    %3147 = vmatprep.subr.mxu0 0.0
    %3148 = vmatpush2.xpose.msra.mxu0 0.0
    %3149 = vmatprep.subr.mxu0 0.0
    %3150 = vmatpush2.xpose.msra.mxu0 0.0
    %3151 = vmatprep.subr.mxu0 0.0
    %3152 = vmatpush2.xpose.msra.mxu0 0.0
    %3153 = vmatprep.subr.mxu0 0.0
    %3154 = vmatpush2.xpose.msra.mxu0 0.0
    %3155 = vmatprep.subr.mxu0 0.0
    %3156 = vmatpush2.xpose.msra.mxu0 0.0
    %3157 = vmatprep.mubr.f32.mxu0 0.0
    %3158 = vmatmul.mubr.f32.gmra.mxu0 %v3089
    %v3159 = vpop.f32.mrf.mxu0
    %v3160 = vadd.f32 0.0, %v3159
    %v3161 = vpop.f32.mrf.mxu0
    %3162 = vdwg.mxu0
    %v3163 = vmul.f32 %v3160, 0.35355338
    %v3164 = vadd.f32 %v3163, %v1141
    %v3165 = vsel %vm196, %v3164, -inf
    %3166 = vmax.xlane.f32.xlu0 %v3165
    %v3167 = vpop.xlane.xlu0 %3166
    %v3168 = vsub.f32 %v3164, %v3167
    %v3169 = vmul.f32 %v3168, 1.442695
    %v3170 = vpow.pop %v3169
    %v3171 = vsel %vm196, %v3170, 0.0
    %3172 = vadd.xlane.f32.xlu0 %v3171
    %v3173 = vpop.xlane.xlu0 %3172
    %v3174 = vrcp.pop %v3173
    %v3175 = vmul.f32 %v3170, %v3174
    %3176 = vrot.lane.b32.xlu0 %v2222, 64
    %v3177 = vpop.permute.xlu0 %3176
    %v3180 = vsel %vm196, %v3175, 0
    %3182 = vmatprep.subr.mxu0 0.0
    %3183 = vmatpush1.msra.mxu0 0.0
    %3184 = vmatprep.subr.mxu0 0.0
    %3185 = vmatpush1.msra.mxu0 0.0
    %3186 = vmatprep.subr.mxu0 0.0
    %3187 = vmatpush1.msra.mxu0 0.0
    %3188 = vmatprep.subr.mxu0 0.0
    %3189 = vmatpush1.msra.mxu0 0.0
    %3190 = vmatprep.subr.mxu0 0.0
    %3191 = vmatpush1.msra.mxu0 0.0
    %3192 = vmatprep.subr.mxu0 0.0
    %3193 = vmatpush1.msra.mxu0 0.0
    %3194 = vmatprep.subr.mxu0 0.0
    %3195 = vmatpush1.msra.mxu0 0.0
    %3196 = vmatprep.subr.mxu0 0.0
    %3197 = vmatpush1.msra.mxu0 0.0
    %3198 = vmatprep.subr.mxu0 0.0
    %3199 = vmatpush1.msra.mxu0 0.0
    %3200 = vmatprep.subr.mxu0 0.0
    %3201 = vmatpush1.msra.mxu0 0.0
    %3202 = vmatprep.subr.mxu0 0.0
    %3203 = vmatpush1.msra.mxu0 0.0
    %3204 = vmatprep.subr.mxu0 0.0
    %3205 = vmatpush1.msra.mxu0 0.0
    %3206 = vmatprep.subr.mxu0 0.0
    %3207 = vmatpush1.msra.mxu0 0.0
    %3208 = vmatprep.subr.mxu0 0.0
    %3209 = vmatpush1.msra.mxu0 0.0
    %3210 = vmatprep.subr.mxu0 0.0
    %3211 = vmatpush1.msra.mxu0 0.0
    %3212 = vmatprep.subr.mxu0 0.0
    %3213 = vmatpush1.msra.mxu0 %v3177
    %3214 = vmatprep.subr.mxu0 0.0
    %3215 = vmatpush2.msra.mxu0 0.0
    %3216 = vmatprep.subr.mxu0 0.0
    %3217 = vmatpush2.msra.mxu0 0.0
    %3218 = vmatprep.subr.mxu0 0.0
    %3219 = vmatpush2.msra.mxu0 0.0
    %3220 = vmatprep.subr.mxu0 0.0
    %3221 = vmatpush2.msra.mxu0 0.0
    %3222 = vmatprep.subr.mxu0 0.0
    %3223 = vmatpush2.msra.mxu0 0.0
    %3224 = vmatprep.subr.mxu0 0.0
    %3225 = vmatpush2.msra.mxu0 0.0
    %3226 = vmatprep.subr.mxu0 0.0
    %3227 = vmatpush2.msra.mxu0 0.0
    %3228 = vmatprep.subr.mxu0 0.0
    %3229 = vmatpush2.msra.mxu0 0.0
    %3230 = vmatprep.subr.mxu0 0.0
    %3231 = vmatpush2.msra.mxu0 0.0
    %3232 = vmatprep.subr.mxu0 0.0
    %3233 = vmatpush2.msra.mxu0 0.0
    %3234 = vmatprep.subr.mxu0 0.0
    %3235 = vmatpush2.msra.mxu0 0.0
    %3236 = vmatprep.subr.mxu0 0.0
    %3237 = vmatpush2.msra.mxu0 0.0
    %3238 = vmatprep.subr.mxu0 0.0
    %3239 = vmatpush2.msra.mxu0 0.0
    %3240 = vmatprep.subr.mxu0 0.0
    %3241 = vmatpush2.msra.mxu0 0.0
    %3242 = vmatprep.subr.mxu0 0.0
    %3243 = vmatpush2.msra.mxu0 0.0
    %3244 = vmatprep.subr.mxu0 0.0
    %3245 = vmatpush2.msra.mxu0 0.0
    %3246 = vmatprep.mubr.f32.mxu0 0.0
    %3247 = vmatmul.mubr.f32.gmra.mxu0 %v3180
    %v3248 = vpop.f32.mrf.mxu0
    %v3249 = vadd.f32 0.0, %v3248
    %v3250 = vpop.f32.mrf.mxu0
    %3251 = vdwg.mxu0
    %v3252 = vpack.c.bf16 %v3249, %v3249
    %3253 = vrot.lane.b32.xlu0 %v2222, 120
    %v3254 = vpop.permute.xlu0 %3253
    %3255 = vrot.lane.b32.xlu0 %v2222, 88
    %v3256 = vpop.permute.xlu0 %3255
    %v3257 = vsel %vm196, %v3254, 0
    %v3259 = vsel %vm196, %v3256, 0
    %3261 = vmatprep.subr.mxu0 0.0
    %3262 = vmatpush1.xpose.msra.mxu0 0.0
    %3263 = vmatprep.subr.mxu0 0.0
    %3264 = vmatpush1.xpose.msra.mxu0 0.0
    %3265 = vmatprep.subr.mxu0 0.0
    %3266 = vmatpush1.xpose.msra.mxu0 0.0
    %3267 = vmatprep.subr.mxu0 0.0
    %3268 = vmatpush1.xpose.msra.mxu0 0.0
    %3269 = vmatprep.subr.mxu0 0.0
    %3270 = vmatpush1.xpose.msra.mxu0 0.0
    %3271 = vmatprep.subr.mxu0 0.0
    %3272 = vmatpush1.xpose.msra.mxu0 0.0
    %3273 = vmatprep.subr.mxu0 0.0
    %3274 = vmatpush1.xpose.msra.mxu0 0.0
    %3275 = vmatprep.subr.mxu0 0.0
    %3276 = vmatpush1.xpose.msra.mxu0 0.0
    %3277 = vmatprep.subr.mxu0 0.0
    %3278 = vmatpush1.xpose.msra.mxu0 0.0
    %3279 = vmatprep.subr.mxu0 0.0
    %3280 = vmatpush1.xpose.msra.mxu0 0.0
    %3281 = vmatprep.subr.mxu0 0.0
    %3282 = vmatpush1.xpose.msra.mxu0 0.0
    %3283 = vmatprep.subr.mxu0 0.0
    %3284 = vmatpush1.xpose.msra.mxu0 0.0
    %3285 = vmatprep.subr.mxu0 0.0
    %3286 = vmatpush1.xpose.msra.mxu0 0.0
    %3287 = vmatprep.subr.mxu0 0.0
    %3288 = vmatpush1.xpose.msra.mxu0 0.0
    %3289 = vmatprep.subr.mxu0 0.0
    %3290 = vmatpush1.xpose.msra.mxu0 0.0
    %3291 = vmatprep.subr.mxu0 0.0
    %3292 = vmatpush1.xpose.msra.mxu0 %v3259
    %3293 = vmatprep.subr.mxu0 0.0
    %3294 = vmatpush2.xpose.msra.mxu0 0.0
    %3295 = vmatprep.subr.mxu0 0.0
    %3296 = vmatpush2.xpose.msra.mxu0 0.0
    %3297 = vmatprep.subr.mxu0 0.0
    %3298 = vmatpush2.xpose.msra.mxu0 0.0
    %3299 = vmatprep.subr.mxu0 0.0
    %3300 = vmatpush2.xpose.msra.mxu0 0.0
    %3301 = vmatprep.subr.mxu0 0.0
    %3302 = vmatpush2.xpose.msra.mxu0 0.0
    %3303 = vmatprep.subr.mxu0 0.0
    %3304 = vmatpush2.xpose.msra.mxu0 0.0
    %3305 = vmatprep.subr.mxu0 0.0
    %3306 = vmatpush2.xpose.msra.mxu0 0.0
    %3307 = vmatprep.subr.mxu0 0.0
    %3308 = vmatpush2.xpose.msra.mxu0 0.0
    %3309 = vmatprep.subr.mxu0 0.0
    %3310 = vmatpush2.xpose.msra.mxu0 0.0
    %3311 = vmatprep.subr.mxu0 0.0
    %3312 = vmatpush2.xpose.msra.mxu0 0.0
    %3313 = vmatprep.subr.mxu0 0.0
    %3314 = vmatpush2.xpose.msra.mxu0 0.0
    %3315 = vmatprep.subr.mxu0 0.0
    %3316 = vmatpush2.xpose.msra.mxu0 0.0
    %3317 = vmatprep.subr.mxu0 0.0
    %3318 = vmatpush2.xpose.msra.mxu0 0.0
    %3319 = vmatprep.subr.mxu0 0.0
    %3320 = vmatpush2.xpose.msra.mxu0 0.0
    %3321 = vmatprep.subr.mxu0 0.0
    %3322 = vmatpush2.xpose.msra.mxu0 0.0
    %3323 = vmatprep.subr.mxu0 0.0
    %3324 = vmatpush2.xpose.msra.mxu0 0.0
    %3325 = vmatprep.mubr.f32.mxu0 0.0
    %3326 = vmatmul.mubr.f32.gmra.mxu0 %v3257
    %v3327 = vpop.f32.mrf.mxu0
    %v3328 = vadd.f32 0.0, %v3327
    %v3329 = vpop.f32.mrf.mxu0
    %3330 = vdwg.mxu0
    %v3331 = vmul.f32 %v3328, 0.35355338
    %v3332 = vadd.f32 %v3331, %v1141
    %v3333 = vsel %vm196, %v3332, -inf
    %3334 = vmax.xlane.f32.xlu0 %v3333
    %v3335 = vpop.xlane.xlu0 %3334
    %v3336 = vsub.f32 %v3332, %v3335
    %v3337 = vmul.f32 %v3336, 1.442695
    %v3338 = vpow.pop %v3337
    %v3339 = vsel %vm196, %v3338, 0.0
    %3340 = vadd.xlane.f32.xlu0 %v3339
    %v3341 = vpop.xlane.xlu0 %3340
    %v3342 = vrcp.pop %v3341
    %v3343 = vmul.f32 %v3338, %v3342
    %3344 = vrot.lane.b32.xlu0 %v2222, 56
    %v3345 = vpop.permute.xlu0 %3344
    %v3348 = vsel %vm196, %v3343, 0
    %3350 = vmatprep.subr.mxu0 0.0
    %3351 = vmatpush1.msra.mxu0 0.0
    %3352 = vmatprep.subr.mxu0 0.0
    %3353 = vmatpush1.msra.mxu0 0.0
    %3354 = vmatprep.subr.mxu0 0.0
    %3355 = vmatpush1.msra.mxu0 0.0
    %3356 = vmatprep.subr.mxu0 0.0
    %3357 = vmatpush1.msra.mxu0 0.0
    %3358 = vmatprep.subr.mxu0 0.0
    %3359 = vmatpush1.msra.mxu0 0.0
    %3360 = vmatprep.subr.mxu0 0.0
    %3361 = vmatpush1.msra.mxu0 0.0
    %3362 = vmatprep.subr.mxu0 0.0
    %3363 = vmatpush1.msra.mxu0 0.0
    %3364 = vmatprep.subr.mxu0 0.0
    %3365 = vmatpush1.msra.mxu0 0.0
    %3366 = vmatprep.subr.mxu0 0.0
    %3367 = vmatpush1.msra.mxu0 0.0
    %3368 = vmatprep.subr.mxu0 0.0
    %3369 = vmatpush1.msra.mxu0 0.0
    %3370 = vmatprep.subr.mxu0 0.0
    %3371 = vmatpush1.msra.mxu0 0.0
    %3372 = vmatprep.subr.mxu0 0.0
    %3373 = vmatpush1.msra.mxu0 0.0
    %3374 = vmatprep.subr.mxu0 0.0
    %3375 = vmatpush1.msra.mxu0 0.0
    %3376 = vmatprep.subr.mxu0 0.0
    %3377 = vmatpush1.msra.mxu0 0.0
    %3378 = vmatprep.subr.mxu0 0.0
    %3379 = vmatpush1.msra.mxu0 0.0
    %3380 = vmatprep.subr.mxu0 0.0
    %3381 = vmatpush1.msra.mxu0 %v3345
    %3382 = vmatprep.subr.mxu0 0.0
    %3383 = vmatpush2.msra.mxu0 0.0
    %3384 = vmatprep.subr.mxu0 0.0
    %3385 = vmatpush2.msra.mxu0 0.0
    %3386 = vmatprep.subr.mxu0 0.0
    %3387 = vmatpush2.msra.mxu0 0.0
    %3388 = vmatprep.subr.mxu0 0.0
    %3389 = vmatpush2.msra.mxu0 0.0
    %3390 = vmatprep.subr.mxu0 0.0
    %3391 = vmatpush2.msra.mxu0 0.0
    %3392 = vmatprep.subr.mxu0 0.0
    %3393 = vmatpush2.msra.mxu0 0.0
    %3394 = vmatprep.subr.mxu0 0.0
    %3395 = vmatpush2.msra.mxu0 0.0
    %3396 = vmatprep.subr.mxu0 0.0
    %3397 = vmatpush2.msra.mxu0 0.0
    %3398 = vmatprep.subr.mxu0 0.0
    %3399 = vmatpush2.msra.mxu0 0.0
    %3400 = vmatprep.subr.mxu0 0.0
    %3401 = vmatpush2.msra.mxu0 0.0
    %3402 = vmatprep.subr.mxu0 0.0
    %3403 = vmatpush2.msra.mxu0 0.0
    %3404 = vmatprep.subr.mxu0 0.0
    %3405 = vmatpush2.msra.mxu0 0.0
    %3406 = vmatprep.subr.mxu0 0.0
    %3407 = vmatpush2.msra.mxu0 0.0
    %3408 = vmatprep.subr.mxu0 0.0
    %3409 = vmatpush2.msra.mxu0 0.0
    %3410 = vmatprep.subr.mxu0 0.0
    %3411 = vmatpush2.msra.mxu0 0.0
    %3412 = vmatprep.subr.mxu0 0.0
    %3413 = vmatpush2.msra.mxu0 0.0
    %3414 = vmatprep.mubr.f32.mxu0 0.0
    %3415 = vmatmul.mubr.f32.gmra.mxu0 %v3348
    %v3416 = vpop.f32.mrf.mxu0
    %v3417 = vadd.f32 0.0, %v3416
    %v3418 = vpop.f32.mrf.mxu0
    %3419 = vdwg.mxu0
    %v3420 = vpack.c.bf16 %v3417, %v3417
    %v3422 = vsel %vm196, %v3420, 0
    %3424 = vmatprep.subr.bf16.mxu0 0
    %3425 = vmatpush1.bf16.msra.mxu0 0
    %3426 = vmatprep.subr.bf16.mxu0 0
    %3427 = vmatpush1.bf16.msra.mxu0 0
    %3428 = vmatprep.subr.bf16.mxu0 0
    %3429 = vmatpush1.bf16.msra.mxu0 0
    %3430 = vmatprep.subr.bf16.mxu0 0
    %3431 = vmatpush1.bf16.msra.mxu0 0
    %3432 = vmatprep.subr.bf16.mxu0 0
    %3433 = vmatpush1.bf16.msra.mxu0 0
    %3434 = vmatprep.subr.bf16.mxu0 0
    %3435 = vmatpush1.bf16.msra.mxu0 0
    %3436 = vmatprep.subr.bf16.mxu0 0
    %3437 = vmatpush1.bf16.msra.mxu0 0
    %3438 = vmatprep.subr.bf16.mxu0 0
    %3439 = vmatpush1.bf16.msra.mxu0 %v2566
    %3440 = vmatprep.subr.bf16.mxu0 0
    %3441 = vmatpush2.bf16.msra.mxu0 0
    %3442 = vmatprep.subr.bf16.mxu0 0
    %3443 = vmatpush2.bf16.msra.mxu0 0
    %3444 = vmatprep.subr.bf16.mxu0 0
    %3445 = vmatpush2.bf16.msra.mxu0 0
    %3446 = vmatprep.subr.bf16.mxu0 0
    %3447 = vmatpush2.bf16.msra.mxu0 0
    %3448 = vmatprep.subr.bf16.mxu0 0
    %3449 = vmatpush2.bf16.msra.mxu0 0
    %3450 = vmatprep.subr.bf16.mxu0 0
    %3451 = vmatpush2.bf16.msra.mxu0 0
    %3452 = vmatprep.subr.bf16.mxu0 0
    %3453 = vmatpush2.bf16.msra.mxu0 0
    %3454 = vmatprep.subr.bf16.mxu0 0
    %3455 = vmatpush2.bf16.msra.mxu0 0
    %3456 = vmatprep.mubr.bf16.mxu0 0
    %3457 = vmatmul.mubr.bf16.gmra.mxu0 %v3422
    %v3458 = vpop.f32.mrf.mxu0
    %v3459 = vadd.f32 0.0, %v3458
    %v3460 = vpop.f32.mrf.mxu0
    %v3461 = vpop.f32.mrf.mxu0
    %v3462 = vpop.f32.mrf.mxu0
    %3463 = vdwg.mxu0
    %v3465 = vsel %vm196, %v3252, 0
    %3467 = vmatprep.subr.bf16.mxu0 0
    %3468 = vmatpush1.bf16.msra.mxu0 0
    %3469 = vmatprep.subr.bf16.mxu0 0
    %3470 = vmatpush1.bf16.msra.mxu0 0
    %3471 = vmatprep.subr.bf16.mxu0 0
    %3472 = vmatpush1.bf16.msra.mxu0 0
    %3473 = vmatprep.subr.bf16.mxu0 0
    %3474 = vmatpush1.bf16.msra.mxu0 0
    %3475 = vmatprep.subr.bf16.mxu0 0
    %3476 = vmatpush1.bf16.msra.mxu0 0
    %3477 = vmatprep.subr.bf16.mxu0 0
    %3478 = vmatpush1.bf16.msra.mxu0 0
    %3479 = vmatprep.subr.bf16.mxu0 0
    %3480 = vmatpush1.bf16.msra.mxu0 0
    %3481 = vmatprep.subr.bf16.mxu0 0
    %3482 = vmatpush1.bf16.msra.mxu0 %v2612
    %3483 = vmatprep.subr.bf16.mxu0 0
    %3484 = vmatpush2.bf16.msra.mxu0 0
    %3485 = vmatprep.subr.bf16.mxu0 0
    %3486 = vmatpush2.bf16.msra.mxu0 0
    %3487 = vmatprep.subr.bf16.mxu0 0
    %3488 = vmatpush2.bf16.msra.mxu0 0
    %3489 = vmatprep.subr.bf16.mxu0 0
    %3490 = vmatpush2.bf16.msra.mxu0 0
    %3491 = vmatprep.subr.bf16.mxu0 0
    %3492 = vmatpush2.bf16.msra.mxu0 0
    %3493 = vmatprep.subr.bf16.mxu0 0
    %3494 = vmatpush2.bf16.msra.mxu0 0
    %3495 = vmatprep.subr.bf16.mxu0 0
    %3496 = vmatpush2.bf16.msra.mxu0 0
    %3497 = vmatprep.subr.bf16.mxu0 0
    %3498 = vmatpush2.bf16.msra.mxu0 0
    %3499 = vmatprep.mubr.bf16.mxu0 0
    %3500 = vmatmul.mubr.bf16.gmra.mxu0 %v3465
    %v3501 = vpop.f32.mrf.mxu0
    %v3502 = vadd.f32 %v3459, %v3501
    %v3503 = vpop.f32.mrf.mxu0
    %v3504 = vpop.f32.mrf.mxu0
    %v3505 = vpop.f32.mrf.mxu0
    %3506 = vdwg.mxu0
    %3507 = vrot.lane.b32.xlu0 %v2222, 112
    %v3508 = vpop.permute.xlu0 %3507
    %3509 = vrot.lane.b32.xlu0 %v2222, 80
    %v3510 = vpop.permute.xlu0 %3509
    %v3511 = vsel %vm196, %v3508, 0
    %v3513 = vsel %vm196, %v3510, 0
    %3515 = vmatprep.subr.mxu0 0.0
    %3516 = vmatpush1.xpose.msra.mxu0 0.0
    %3517 = vmatprep.subr.mxu0 0.0
    %3518 = vmatpush1.xpose.msra.mxu0 0.0
    %3519 = vmatprep.subr.mxu0 0.0
    %3520 = vmatpush1.xpose.msra.mxu0 0.0
    %3521 = vmatprep.subr.mxu0 0.0
    %3522 = vmatpush1.xpose.msra.mxu0 0.0
    %3523 = vmatprep.subr.mxu0 0.0
    %3524 = vmatpush1.xpose.msra.mxu0 0.0
    %3525 = vmatprep.subr.mxu0 0.0
    %3526 = vmatpush1.xpose.msra.mxu0 0.0
    %3527 = vmatprep.subr.mxu0 0.0
    %3528 = vmatpush1.xpose.msra.mxu0 0.0
    %3529 = vmatprep.subr.mxu0 0.0
    %3530 = vmatpush1.xpose.msra.mxu0 0.0
    %3531 = vmatprep.subr.mxu0 0.0
    %3532 = vmatpush1.xpose.msra.mxu0 0.0
    %3533 = vmatprep.subr.mxu0 0.0
    %3534 = vmatpush1.xpose.msra.mxu0 0.0
    %3535 = vmatprep.subr.mxu0 0.0
    %3536 = vmatpush1.xpose.msra.mxu0 0.0
    %3537 = vmatprep.subr.mxu0 0.0
    %3538 = vmatpush1.xpose.msra.mxu0 0.0
    %3539 = vmatprep.subr.mxu0 0.0
    %3540 = vmatpush1.xpose.msra.mxu0 0.0
    %3541 = vmatprep.subr.mxu0 0.0
    %3542 = vmatpush1.xpose.msra.mxu0 0.0
    %3543 = vmatprep.subr.mxu0 0.0
    %3544 = vmatpush1.xpose.msra.mxu0 0.0
    %3545 = vmatprep.subr.mxu0 0.0
    %3546 = vmatpush1.xpose.msra.mxu0 %v3513
    %3547 = vmatprep.subr.mxu0 0.0
    %3548 = vmatpush2.xpose.msra.mxu0 0.0
    %3549 = vmatprep.subr.mxu0 0.0
    %3550 = vmatpush2.xpose.msra.mxu0 0.0
    %3551 = vmatprep.subr.mxu0 0.0
    %3552 = vmatpush2.xpose.msra.mxu0 0.0
    %3553 = vmatprep.subr.mxu0 0.0
    %3554 = vmatpush2.xpose.msra.mxu0 0.0
    %3555 = vmatprep.subr.mxu0 0.0
    %3556 = vmatpush2.xpose.msra.mxu0 0.0
    %3557 = vmatprep.subr.mxu0 0.0
    %3558 = vmatpush2.xpose.msra.mxu0 0.0
    %3559 = vmatprep.subr.mxu0 0.0
    %3560 = vmatpush2.xpose.msra.mxu0 0.0
    %3561 = vmatprep.subr.mxu0 0.0
    %3562 = vmatpush2.xpose.msra.mxu0 0.0
    %3563 = vmatprep.subr.mxu0 0.0
    %3564 = vmatpush2.xpose.msra.mxu0 0.0
    %3565 = vmatprep.subr.mxu0 0.0
    %3566 = vmatpush2.xpose.msra.mxu0 0.0
    %3567 = vmatprep.subr.mxu0 0.0
    %3568 = vmatpush2.xpose.msra.mxu0 0.0
    %3569 = vmatprep.subr.mxu0 0.0
    %3570 = vmatpush2.xpose.msra.mxu0 0.0
    %3571 = vmatprep.subr.mxu0 0.0
    %3572 = vmatpush2.xpose.msra.mxu0 0.0
    %3573 = vmatprep.subr.mxu0 0.0
    %3574 = vmatpush2.xpose.msra.mxu0 0.0
    %3575 = vmatprep.subr.mxu0 0.0
    %3576 = vmatpush2.xpose.msra.mxu0 0.0
    %3577 = vmatprep.subr.mxu0 0.0
    %3578 = vmatpush2.xpose.msra.mxu0 0.0
    %3579 = vmatprep.mubr.f32.mxu0 0.0
    %3580 = vmatmul.mubr.f32.gmra.mxu0 %v3511
    %v3581 = vpop.f32.mrf.mxu0
    %v3582 = vadd.f32 0.0, %v3581
    %v3583 = vpop.f32.mrf.mxu0
    %3584 = vdwg.mxu0
    %v3585 = vmul.f32 %v3582, 0.35355338
    %v3586 = vadd.f32 %v3585, %v1141
    %v3587 = vsel %vm196, %v3586, -inf
    %3588 = vmax.xlane.f32.xlu0 %v3587
    %v3589 = vpop.xlane.xlu0 %3588
    %v3590 = vsub.f32 %v3586, %v3589
    %v3591 = vmul.f32 %v3590, 1.442695
    %v3592 = vpow.pop %v3591
    %v3593 = vsel %vm196, %v3592, 0.0
    %3594 = vadd.xlane.f32.xlu0 %v3593
    %v3595 = vpop.xlane.xlu0 %3594
    %v3596 = vrcp.pop %v3595
    %v3597 = vmul.f32 %v3592, %v3596
    %3598 = vrot.lane.b32.xlu0 %v2222, 48
    %v3599 = vpop.permute.xlu0 %3598
    %v3602 = vsel %vm196, %v3597, 0
    %3604 = vmatprep.subr.mxu0 0.0
    %3605 = vmatpush1.msra.mxu0 0.0
    %3606 = vmatprep.subr.mxu0 0.0
    %3607 = vmatpush1.msra.mxu0 0.0
    %3608 = vmatprep.subr.mxu0 0.0
    %3609 = vmatpush1.msra.mxu0 0.0
    %3610 = vmatprep.subr.mxu0 0.0
    %3611 = vmatpush1.msra.mxu0 0.0
    %3612 = vmatprep.subr.mxu0 0.0
    %3613 = vmatpush1.msra.mxu0 0.0
    %3614 = vmatprep.subr.mxu0 0.0
    %3615 = vmatpush1.msra.mxu0 0.0
    %3616 = vmatprep.subr.mxu0 0.0
    %3617 = vmatpush1.msra.mxu0 0.0
    %3618 = vmatprep.subr.mxu0 0.0
    %3619 = vmatpush1.msra.mxu0 0.0
    %3620 = vmatprep.subr.mxu0 0.0
    %3621 = vmatpush1.msra.mxu0 0.0
    %3622 = vmatprep.subr.mxu0 0.0
    %3623 = vmatpush1.msra.mxu0 0.0
    %3624 = vmatprep.subr.mxu0 0.0
    %3625 = vmatpush1.msra.mxu0 0.0
    %3626 = vmatprep.subr.mxu0 0.0
    %3627 = vmatpush1.msra.mxu0 0.0
    %3628 = vmatprep.subr.mxu0 0.0
    %3629 = vmatpush1.msra.mxu0 0.0
    %3630 = vmatprep.subr.mxu0 0.0
    %3631 = vmatpush1.msra.mxu0 0.0
    %3632 = vmatprep.subr.mxu0 0.0
    %3633 = vmatpush1.msra.mxu0 0.0
    %3634 = vmatprep.subr.mxu0 0.0
    %3635 = vmatpush1.msra.mxu0 %v3599
    %3636 = vmatprep.subr.mxu0 0.0
    %3637 = vmatpush2.msra.mxu0 0.0
    %3638 = vmatprep.subr.mxu0 0.0
    %3639 = vmatpush2.msra.mxu0 0.0
    %3640 = vmatprep.subr.mxu0 0.0
    %3641 = vmatpush2.msra.mxu0 0.0
    %3642 = vmatprep.subr.mxu0 0.0
    %3643 = vmatpush2.msra.mxu0 0.0
    %3644 = vmatprep.subr.mxu0 0.0
    %3645 = vmatpush2.msra.mxu0 0.0
    %3646 = vmatprep.subr.mxu0 0.0
    %3647 = vmatpush2.msra.mxu0 0.0
    %3648 = vmatprep.subr.mxu0 0.0
    %3649 = vmatpush2.msra.mxu0 0.0
    %3650 = vmatprep.subr.mxu0 0.0
    %3651 = vmatpush2.msra.mxu0 0.0
    %3652 = vmatprep.subr.mxu0 0.0
    %3653 = vmatpush2.msra.mxu0 0.0
    %3654 = vmatprep.subr.mxu0 0.0
    %3655 = vmatpush2.msra.mxu0 0.0
    %3656 = vmatprep.subr.mxu0 0.0
    %3657 = vmatpush2.msra.mxu0 0.0
    %3658 = vmatprep.subr.mxu0 0.0
    %3659 = vmatpush2.msra.mxu0 0.0
    %3660 = vmatprep.subr.mxu0 0.0
    %3661 = vmatpush2.msra.mxu0 0.0
    %3662 = vmatprep.subr.mxu0 0.0
    %3663 = vmatpush2.msra.mxu0 0.0
    %3664 = vmatprep.subr.mxu0 0.0
    %3665 = vmatpush2.msra.mxu0 0.0
    %3666 = vmatprep.subr.mxu0 0.0
    %3667 = vmatpush2.msra.mxu0 0.0
    %3668 = vmatprep.mubr.f32.mxu0 0.0
    %3669 = vmatmul.mubr.f32.gmra.mxu0 %v3602
    %v3670 = vpop.f32.mrf.mxu0
    %v3671 = vadd.f32 0.0, %v3670
    %v3672 = vpop.f32.mrf.mxu0
    %3673 = vdwg.mxu0
    %v3674 = vpack.c.bf16 %v3671, %v3671
    %v3676 = vsel %vm196, %v3674, 0
    %3678 = vmatprep.subr.bf16.mxu0 0
    %3679 = vmatpush1.bf16.msra.mxu0 0
    %3680 = vmatprep.subr.bf16.mxu0 0
    %3681 = vmatpush1.bf16.msra.mxu0 0
    %3682 = vmatprep.subr.bf16.mxu0 0
    %3683 = vmatpush1.bf16.msra.mxu0 0
    %3684 = vmatprep.subr.bf16.mxu0 0
    %3685 = vmatpush1.bf16.msra.mxu0 0
    %3686 = vmatprep.subr.bf16.mxu0 0
    %3687 = vmatpush1.bf16.msra.mxu0 0
    %3688 = vmatprep.subr.bf16.mxu0 0
    %3689 = vmatpush1.bf16.msra.mxu0 0
    %3690 = vmatprep.subr.bf16.mxu0 0
    %3691 = vmatpush1.bf16.msra.mxu0 0
    %3692 = vmatprep.subr.bf16.mxu0 0
    %3693 = vmatpush1.bf16.msra.mxu0 %v2827
    %3694 = vmatprep.subr.bf16.mxu0 0
    %3695 = vmatpush2.bf16.msra.mxu0 0
    %3696 = vmatprep.subr.bf16.mxu0 0
    %3697 = vmatpush2.bf16.msra.mxu0 0
    %3698 = vmatprep.subr.bf16.mxu0 0
    %3699 = vmatpush2.bf16.msra.mxu0 0
    %3700 = vmatprep.subr.bf16.mxu0 0
    %3701 = vmatpush2.bf16.msra.mxu0 0
    %3702 = vmatprep.subr.bf16.mxu0 0
    %3703 = vmatpush2.bf16.msra.mxu0 0
    %3704 = vmatprep.subr.bf16.mxu0 0
    %3705 = vmatpush2.bf16.msra.mxu0 0
    %3706 = vmatprep.subr.bf16.mxu0 0
    %3707 = vmatpush2.bf16.msra.mxu0 0
    %3708 = vmatprep.subr.bf16.mxu0 0
    %3709 = vmatpush2.bf16.msra.mxu0 0
    %3710 = vmatprep.mubr.bf16.mxu0 0
    %3711 = vmatmul.mubr.bf16.gmra.mxu0 %v3676
    %v3712 = vpop.f32.mrf.mxu0
    %v3713 = vadd.f32 0.0, %v3712
    %v3714 = vpop.f32.mrf.mxu0
    %v3715 = vpop.f32.mrf.mxu0
    %v3716 = vpop.f32.mrf.mxu0
    %3717 = vdwg.mxu0
    %v3718 = vadd.f32 %v3502, %v3713
    %3719 = vrot.lane.b32.xlu0 %v2222, 104
    %v3720 = vpop.permute.xlu0 %3719
    %3721 = vrot.lane.b32.xlu0 %v2222, 72
    %v3722 = vpop.permute.xlu0 %3721
    %v3723 = vsel %vm196, %v3720, 0
    %v3725 = vsel %vm196, %v3722, 0
    %3727 = vmatprep.subr.mxu0 0.0
    %3728 = vmatpush1.xpose.msra.mxu0 0.0
    %3729 = vmatprep.subr.mxu0 0.0
    %3730 = vmatpush1.xpose.msra.mxu0 0.0
    %3731 = vmatprep.subr.mxu0 0.0
    %3732 = vmatpush1.xpose.msra.mxu0 0.0
    %3733 = vmatprep.subr.mxu0 0.0
    %3734 = vmatpush1.xpose.msra.mxu0 0.0
    %3735 = vmatprep.subr.mxu0 0.0
    %3736 = vmatpush1.xpose.msra.mxu0 0.0
    %3737 = vmatprep.subr.mxu0 0.0
    %3738 = vmatpush1.xpose.msra.mxu0 0.0
    %3739 = vmatprep.subr.mxu0 0.0
    %3740 = vmatpush1.xpose.msra.mxu0 0.0
    %3741 = vmatprep.subr.mxu0 0.0
    %3742 = vmatpush1.xpose.msra.mxu0 0.0
    %3743 = vmatprep.subr.mxu0 0.0
    %3744 = vmatpush1.xpose.msra.mxu0 0.0
    %3745 = vmatprep.subr.mxu0 0.0
    %3746 = vmatpush1.xpose.msra.mxu0 0.0
    %3747 = vmatprep.subr.mxu0 0.0
    %3748 = vmatpush1.xpose.msra.mxu0 0.0
    %3749 = vmatprep.subr.mxu0 0.0
    %3750 = vmatpush1.xpose.msra.mxu0 0.0
    %3751 = vmatprep.subr.mxu0 0.0
    %3752 = vmatpush1.xpose.msra.mxu0 0.0
    %3753 = vmatprep.subr.mxu0 0.0
    %3754 = vmatpush1.xpose.msra.mxu0 0.0
    %3755 = vmatprep.subr.mxu0 0.0
    %3756 = vmatpush1.xpose.msra.mxu0 0.0
    %3757 = vmatprep.subr.mxu0 0.0
    %3758 = vmatpush1.xpose.msra.mxu0 %v3725
    %3759 = vmatprep.subr.mxu0 0.0
    %3760 = vmatpush2.xpose.msra.mxu0 0.0
    %3761 = vmatprep.subr.mxu0 0.0
    %3762 = vmatpush2.xpose.msra.mxu0 0.0
    %3763 = vmatprep.subr.mxu0 0.0
    %3764 = vmatpush2.xpose.msra.mxu0 0.0
    %3765 = vmatprep.subr.mxu0 0.0
    %3766 = vmatpush2.xpose.msra.mxu0 0.0
    %3767 = vmatprep.subr.mxu0 0.0
    %3768 = vmatpush2.xpose.msra.mxu0 0.0
    %3769 = vmatprep.subr.mxu0 0.0
    %3770 = vmatpush2.xpose.msra.mxu0 0.0
    %3771 = vmatprep.subr.mxu0 0.0
    %3772 = vmatpush2.xpose.msra.mxu0 0.0
    %3773 = vmatprep.subr.mxu0 0.0
    %3774 = vmatpush2.xpose.msra.mxu0 0.0
    %3775 = vmatprep.subr.mxu0 0.0
    %3776 = vmatpush2.xpose.msra.mxu0 0.0
    %3777 = vmatprep.subr.mxu0 0.0
    %3778 = vmatpush2.xpose.msra.mxu0 0.0
    %3779 = vmatprep.subr.mxu0 0.0
    %3780 = vmatpush2.xpose.msra.mxu0 0.0
    %3781 = vmatprep.subr.mxu0 0.0
    %3782 = vmatpush2.xpose.msra.mxu0 0.0
    %3783 = vmatprep.subr.mxu0 0.0
    %3784 = vmatpush2.xpose.msra.mxu0 0.0
    %3785 = vmatprep.subr.mxu0 0.0
    %3786 = vmatpush2.xpose.msra.mxu0 0.0
    %3787 = vmatprep.subr.mxu0 0.0
    %3788 = vmatpush2.xpose.msra.mxu0 0.0
    %3789 = vmatprep.subr.mxu0 0.0
    %3790 = vmatpush2.xpose.msra.mxu0 0.0
    %3791 = vmatprep.mubr.f32.mxu0 0.0
    %3792 = vmatmul.mubr.f32.gmra.mxu0 %v3723
    %v3793 = vpop.f32.mrf.mxu0
    %v3794 = vadd.f32 0.0, %v3793
    %v3795 = vpop.f32.mrf.mxu0
    %3796 = vdwg.mxu0
    %v3797 = vmul.f32 %v3794, 0.35355338
    %v3798 = vadd.f32 %v3797, %v1141
    %v3799 = vsel %vm196, %v3798, -inf
    %3800 = vmax.xlane.f32.xlu0 %v3799
    %v3801 = vpop.xlane.xlu0 %3800
    %v3802 = vsub.f32 %v3798, %v3801
    %v3803 = vmul.f32 %v3802, 1.442695
    %v3804 = vpow.pop %v3803
    %v3805 = vsel %vm196, %v3804, 0.0
    %3806 = vadd.xlane.f32.xlu0 %v3805
    %v3807 = vpop.xlane.xlu0 %3806
    %v3808 = vrcp.pop %v3807
    %v3809 = vmul.f32 %v3804, %v3808
    %3810 = vrot.lane.b32.xlu0 %v2222, 40
    %v3811 = vpop.permute.xlu0 %3810
    %v3814 = vsel %vm196, %v3809, 0
    %3816 = vmatprep.subr.mxu0 0.0
    %3817 = vmatpush1.msra.mxu0 0.0
    %3818 = vmatprep.subr.mxu0 0.0
    %3819 = vmatpush1.msra.mxu0 0.0
    %3820 = vmatprep.subr.mxu0 0.0
    %3821 = vmatpush1.msra.mxu0 0.0
    %3822 = vmatprep.subr.mxu0 0.0
    %3823 = vmatpush1.msra.mxu0 0.0
    %3824 = vmatprep.subr.mxu0 0.0
    %3825 = vmatpush1.msra.mxu0 0.0
    %3826 = vmatprep.subr.mxu0 0.0
    %3827 = vmatpush1.msra.mxu0 0.0
    %3828 = vmatprep.subr.mxu0 0.0
    %3829 = vmatpush1.msra.mxu0 0.0
    %3830 = vmatprep.subr.mxu0 0.0
    %3831 = vmatpush1.msra.mxu0 0.0
    %3832 = vmatprep.subr.mxu0 0.0
    %3833 = vmatpush1.msra.mxu0 0.0
    %3834 = vmatprep.subr.mxu0 0.0
    %3835 = vmatpush1.msra.mxu0 0.0
    %3836 = vmatprep.subr.mxu0 0.0
    %3837 = vmatpush1.msra.mxu0 0.0
    %3838 = vmatprep.subr.mxu0 0.0
    %3839 = vmatpush1.msra.mxu0 0.0
    %3840 = vmatprep.subr.mxu0 0.0
    %3841 = vmatpush1.msra.mxu0 0.0
    %3842 = vmatprep.subr.mxu0 0.0
    %3843 = vmatpush1.msra.mxu0 0.0
    %3844 = vmatprep.subr.mxu0 0.0
    %3845 = vmatpush1.msra.mxu0 0.0
    %3846 = vmatprep.subr.mxu0 0.0
    %3847 = vmatpush1.msra.mxu0 %v3811
    %3848 = vmatprep.subr.mxu0 0.0
    %3849 = vmatpush2.msra.mxu0 0.0
    %3850 = vmatprep.subr.mxu0 0.0
    %3851 = vmatpush2.msra.mxu0 0.0
    %3852 = vmatprep.subr.mxu0 0.0
    %3853 = vmatpush2.msra.mxu0 0.0
    %3854 = vmatprep.subr.mxu0 0.0
    %3855 = vmatpush2.msra.mxu0 0.0
    %3856 = vmatprep.subr.mxu0 0.0
    %3857 = vmatpush2.msra.mxu0 0.0
    %3858 = vmatprep.subr.mxu0 0.0
    %3859 = vmatpush2.msra.mxu0 0.0
    %3860 = vmatprep.subr.mxu0 0.0
    %3861 = vmatpush2.msra.mxu0 0.0
    %3862 = vmatprep.subr.mxu0 0.0
    %3863 = vmatpush2.msra.mxu0 0.0
    %3864 = vmatprep.subr.mxu0 0.0
    %3865 = vmatpush2.msra.mxu0 0.0
    %3866 = vmatprep.subr.mxu0 0.0
    %3867 = vmatpush2.msra.mxu0 0.0
    %3868 = vmatprep.subr.mxu0 0.0
    %3869 = vmatpush2.msra.mxu0 0.0
    %3870 = vmatprep.subr.mxu0 0.0
    %3871 = vmatpush2.msra.mxu0 0.0
    %3872 = vmatprep.subr.mxu0 0.0
    %3873 = vmatpush2.msra.mxu0 0.0
    %3874 = vmatprep.subr.mxu0 0.0
    %3875 = vmatpush2.msra.mxu0 0.0
    %3876 = vmatprep.subr.mxu0 0.0
    %3877 = vmatpush2.msra.mxu0 0.0
    %3878 = vmatprep.subr.mxu0 0.0
    %3879 = vmatpush2.msra.mxu0 0.0
    %3880 = vmatprep.mubr.f32.mxu0 0.0
    %3881 = vmatmul.mubr.f32.gmra.mxu0 %v3814
    %v3882 = vpop.f32.mrf.mxu0
    %v3883 = vadd.f32 0.0, %v3882
    %v3884 = vpop.f32.mrf.mxu0
    %3885 = vdwg.mxu0
    %v3886 = vpack.c.bf16 %v3883, %v3883
    %v3888 = vsel %vm196, %v3886, 0
    %3890 = vmatprep.subr.bf16.mxu0 0
    %3891 = vmatpush1.bf16.msra.mxu0 0
    %3892 = vmatprep.subr.bf16.mxu0 0
    %3893 = vmatpush1.bf16.msra.mxu0 0
    %3894 = vmatprep.subr.bf16.mxu0 0
    %3895 = vmatpush1.bf16.msra.mxu0 0
    %3896 = vmatprep.subr.bf16.mxu0 0
    %3897 = vmatpush1.bf16.msra.mxu0 0
    %3898 = vmatprep.subr.bf16.mxu0 0
    %3899 = vmatpush1.bf16.msra.mxu0 0
    %3900 = vmatprep.subr.bf16.mxu0 0
    %3901 = vmatpush1.bf16.msra.mxu0 0
    %3902 = vmatprep.subr.bf16.mxu0 0
    %3903 = vmatpush1.bf16.msra.mxu0 0
    %3904 = vmatprep.subr.bf16.mxu0 0
    %3905 = vmatpush1.bf16.msra.mxu0 %v3043
    %3906 = vmatprep.subr.bf16.mxu0 0
    %3907 = vmatpush2.bf16.msra.mxu0 0
    %3908 = vmatprep.subr.bf16.mxu0 0
    %3909 = vmatpush2.bf16.msra.mxu0 0
    %3910 = vmatprep.subr.bf16.mxu0 0
    %3911 = vmatpush2.bf16.msra.mxu0 0
    %3912 = vmatprep.subr.bf16.mxu0 0
    %3913 = vmatpush2.bf16.msra.mxu0 0
    %3914 = vmatprep.subr.bf16.mxu0 0
    %3915 = vmatpush2.bf16.msra.mxu0 0
    %3916 = vmatprep.subr.bf16.mxu0 0
    %3917 = vmatpush2.bf16.msra.mxu0 0
    %3918 = vmatprep.subr.bf16.mxu0 0
    %3919 = vmatpush2.bf16.msra.mxu0 0
    %3920 = vmatprep.subr.bf16.mxu0 0
    %3921 = vmatpush2.bf16.msra.mxu0 0
    %3922 = vmatprep.mubr.bf16.mxu0 0
    %3923 = vmatmul.mubr.bf16.gmra.mxu0 %v3888
    %v3924 = vpop.f32.mrf.mxu0
    %v3925 = vadd.f32 0.0, %v3924
    %v3926 = vpop.f32.mrf.mxu0
    %v3927 = vpop.f32.mrf.mxu0
    %v3928 = vpop.f32.mrf.mxu0
    %3929 = vdwg.mxu0
    %v3930 = vadd.f32 %v3718, %v3925
    %v3932 = vlaneseq
    %v3933 = vshrl.u32 %v3932, 7
    %v3934 = vsub.s32 0, %v3933
    %v3935 = vrot.slane %v2145, %v3934
    %v3937 = vadd.f32 %v3085, %v3935
    %v3938 = vadd.f32 %v3930, %v3935
    %v3939 = vadd.f32 %v2130, %v3937
    %v3940 = vadd.f32 %v2131, %v3938
    %v3941 = vsel %vm68, %v3939, 0.0
    %3942 = vadd.xlane.f32.xlu0 %v3941
    %v3943 = vpop.xlane.xlu0 %3942
    %v3944 = vsel %vm68, %v3940, 0.0
    %3945 = vadd.xlane.f32.xlu0 %v3944
    %v3946 = vpop.xlane.xlu0 %3945
    %v3947 = vmul.f32 %v3943, %v75
    %v3948 = vmul.f32 %v3946, %v75
    %v3949 = vsub.f32 %v3939, %v3947
    %v3950 = vsub.f32 %v3940, %v3948
    %v3951 = vmul.f32 %v3949, %v3949
    %v3952 = vmul.f32 %v3950, %v3950
    %v3953 = vsel %vm68, %v3951, 0.0
    %3954 = vadd.xlane.f32.xlu0 %v3953
    %v3955 = vpop.xlane.xlu0 %3954
    %v3956 = vsel %vm68, %v3952, 0.0
    %3957 = vadd.xlane.f32.xlu0 %v3956
    %v3958 = vpop.xlane.xlu0 %3957
    %v3959 = vmul.f32 %v3955, %v75
    %v3960 = vmul.f32 %v3958, %v75
    %v3961 = vadd.f32 %v3959, 1e-12
    %v3962 = vadd.f32 %v3960, 1e-12
    %v3963 = vrsqrt.pop %v3961
    %v3964 = vrsqrt.pop %v3962
    %v3965 = vmul.f32 %v3949, %v3963
    %v3966 = vmul.f32 %v3950, %v3964
    %v3968 = vlaneseq
    %v3969 = vshrl.u32 %v3968, 7
    %v3970 = vsub.s32 0, %v3969
    %v3971 = vrot.slane %v2147, %v3970
    %v3973 = vmul.f32 %v3965, %v3971
    %v3974 = vmul.f32 %v3966, %v3971
    %v3976 = vlaneseq
    %v3977 = vshrl.u32 %v3976, 7
    %v3978 = vsub.s32 0, %v3977
    %v3979 = vrot.slane %v2149, %v3978
    %v3981 = vadd.f32 %v3973, %v3979
    %v3982 = vadd.f32 %v3974, %v3979
    %v3983 = vpack.c.bf16 %v3982, %v3981
    %v3984 = vpack.c.bf16 %v2152, %v2151
    %v3985 = vpack.c.bf16 %v2154, %v2153
    %v3987 = vlaneseq
    %v3988 = vshrl.u32 %v3987, 7
    %v3989 = vsub.s32 0, %v3988
    %v3990 = vrot.slane %v2156, %v3989
    %v3993 = vsel %vm68, %v3983, 0
    %3995 = vmatprep.subr.bf16.mxu0 0
    %3996 = vmatpush1.bf16.msra.mxu0 0
    %3997 = vmatprep.subr.bf16.mxu0 0
    %3998 = vmatpush1.bf16.msra.mxu0 0
    %3999 = vmatprep.subr.bf16.mxu0 0
    %4000 = vmatpush1.bf16.msra.mxu0 0
    %4001 = vmatprep.subr.bf16.mxu0 0
    %4002 = vmatpush1.bf16.msra.mxu0 0
    %4003 = vmatprep.subr.bf16.mxu0 0
    %4004 = vmatpush1.bf16.msra.mxu0 0
    %4005 = vmatprep.subr.bf16.mxu0 0
    %4006 = vmatpush1.bf16.msra.mxu0 0
    %4007 = vmatprep.subr.bf16.mxu0 0
    %4008 = vmatpush1.bf16.msra.mxu0 %v3985
    %4009 = vmatprep.subr.bf16.mxu0 0
    %4010 = vmatpush1.bf16.msra.mxu0 %v3984
    %4011 = vmatprep.subr.bf16.mxu0 0
    %4012 = vmatpush2.bf16.msra.mxu0 0
    %4013 = vmatprep.subr.bf16.mxu0 0
    %4014 = vmatpush2.bf16.msra.mxu0 0
    %4015 = vmatprep.subr.bf16.mxu0 0
    %4016 = vmatpush2.bf16.msra.mxu0 0
    %4017 = vmatprep.subr.bf16.mxu0 0
    %4018 = vmatpush2.bf16.msra.mxu0 0
    %4019 = vmatprep.subr.bf16.mxu0 0
    %4020 = vmatpush2.bf16.msra.mxu0 0
    %4021 = vmatprep.subr.bf16.mxu0 0
    %4022 = vmatpush2.bf16.msra.mxu0 0
    %4023 = vmatprep.subr.bf16.mxu0 0
    %4024 = vmatpush2.bf16.msra.mxu0 0
    %4025 = vmatprep.subr.bf16.mxu0 0
    %4026 = vmatpush2.bf16.msra.mxu0 0
    %4027 = vmatprep.mubr.bf16.mxu0 0
    %4028 = vmatmul.mubr.bf16.gmra.mxu0 %v3993
    %v4029 = vpop.f32.mrf.mxu0
    %v4030 = vadd.f32 %v3990, %v4029
    %v4031 = vpop.f32.mrf.mxu0
    %v4032 = vpop.f32.mrf.mxu0
    %v4033 = vadd.f32 %v3990, %v4032
    %v4034 = vpop.f32.mrf.mxu0
    %4035 = vdwg.mxu0
    %v4036 = vmul.f32 %v4030, %v4030
    %v4037 = vmul.f32 %v4033, %v4033
    %v4038 = vmul.f32 %v4030, %v4036
    %v4039 = vmul.f32 %v4033, %v4037
    %v4040 = vmul.f32 %v4038, 0.044715
    %v4041 = vmul.f32 %v4039, 0.044715
    %v4042 = vadd.f32 %v4030, %v4040
    %v4043 = vadd.f32 %v4033, %v4041
    %v4044 = vmul.f32 %v4042, 0.7978846
    %v4045 = vmul.f32 %v4043, 0.7978846
    %v4046 = vtanh.pop %v4044
    %v4047 = vtanh.pop %v4045
    %v4048 = vadd.f32 %v4046, 1.0
    %v4049 = vadd.f32 %v4047, 1.0
    %v4050 = vmul.f32 %v4048, 0.5
    %v4051 = vmul.f32 %v4049, 0.5
    %v4052 = vmul.f32 %v4030, %v4050
    %v4053 = vmul.f32 %v4033, %v4051
    %v4054 = vpack.c.bf16 %v4053, %v4052
    %v4055 = vpack.c.bf16 %v2159, %v2158
    %v4056 = vpack.c.bf16 %v2161, %v2160
    %v4057 = vpack.c.bf16 %v2163, %v2162
    %v4058 = vpack.c.bf16 %v2165, %v2164
    %v4060 = vlaneseq
    %v4061 = vshrl.u32 %v4060, 7
    %v4062 = vsub.s32 0, %v4061
    %v4063 = vrot.slane %v2167, %v4062
    %v4066 = vsel %vm2043, %v4054, 0
    %4068 = vmatprep.subr.bf16.mxu0 0
    %4069 = vmatpush1.bf16.msra.mxu0 0
    %4070 = vmatprep.subr.bf16.mxu0 0
    %4071 = vmatpush1.bf16.msra.mxu0 0
    %4072 = vmatprep.subr.bf16.mxu0 0
    %4073 = vmatpush1.bf16.msra.mxu0 0
    %4074 = vmatprep.subr.bf16.mxu0 0
    %4075 = vmatpush1.bf16.msra.mxu0 0
    %4076 = vmatprep.subr.bf16.mxu0 0
    %4077 = vmatpush1.bf16.msra.mxu0 %v4058
    %4078 = vmatprep.subr.bf16.mxu0 0
    %4079 = vmatpush1.bf16.msra.mxu0 %v4057
    %4080 = vmatprep.subr.bf16.mxu0 0
    %4081 = vmatpush1.bf16.msra.mxu0 %v4056
    %4082 = vmatprep.subr.bf16.mxu0 0
    %4083 = vmatpush1.bf16.msra.mxu0 %v4055
    %4084 = vmatprep.subr.bf16.mxu0 0
    %4085 = vmatpush2.bf16.msra.mxu0 0
    %4086 = vmatprep.subr.bf16.mxu0 0
    %4087 = vmatpush2.bf16.msra.mxu0 0
    %4088 = vmatprep.subr.bf16.mxu0 0
    %4089 = vmatpush2.bf16.msra.mxu0 0
    %4090 = vmatprep.subr.bf16.mxu0 0
    %4091 = vmatpush2.bf16.msra.mxu0 0
    %4092 = vmatprep.subr.bf16.mxu0 0
    %4093 = vmatpush2.bf16.msra.mxu0 0
    %4094 = vmatprep.subr.bf16.mxu0 0
    %4095 = vmatpush2.bf16.msra.mxu0 0
    %4096 = vmatprep.subr.bf16.mxu0 0
    %4097 = vmatpush2.bf16.msra.mxu0 0
    %4098 = vmatprep.subr.bf16.mxu0 0
    %4099 = vmatpush2.bf16.msra.mxu0 0
    %4100 = vmatprep.mubr.bf16.mxu0 0
    %4101 = vmatmul.mubr.bf16.gmra.mxu0 %v4066
    %v4102 = vpop.f32.mrf.mxu0
    %v4103 = vadd.f32 %v4063, %v4102
    %v4104 = vpop.f32.mrf.mxu0
    %v4105 = vpop.f32.mrf.mxu0
    %v4106 = vadd.f32 %v4063, %v4105
    %v4107 = vpop.f32.mrf.mxu0
    %4108 = vdwg.mxu0
    %v4109 = vadd.f32 %v3981, %v4103
    %v4110 = vadd.f32 %v3982, %v4106
    %v4111 = vsel %vm68, %v4109, 0.0
    %4112 = vadd.xlane.f32.xlu0 %v4111
    %v4113 = vpop.xlane.xlu0 %4112
    %v4114 = vsel %vm68, %v4110, 0.0
    %4115 = vadd.xlane.f32.xlu0 %v4114
    %v4116 = vpop.xlane.xlu0 %4115
    %v4117 = vmul.f32 %v4113, %v75
    %v4118 = vmul.f32 %v4116, %v75
    %v4119 = vsub.f32 %v4109, %v4117
    %v4120 = vsub.f32 %v4110, %v4118
    %v4121 = vmul.f32 %v4119, %v4119
    %v4122 = vmul.f32 %v4120, %v4120
    %v4123 = vsel %vm68, %v4121, 0.0
    %4124 = vadd.xlane.f32.xlu0 %v4123
    %v4125 = vpop.xlane.xlu0 %4124
    %v4126 = vsel %vm68, %v4122, 0.0
    %4127 = vadd.xlane.f32.xlu0 %v4126
    %v4128 = vpop.xlane.xlu0 %4127
    %v4129 = vmul.f32 %v4125, %v75
    %v4130 = vmul.f32 %v4128, %v75
    %v4131 = vadd.f32 %v4129, 1e-12
    %v4132 = vadd.f32 %v4130, 1e-12
    %v4133 = vrsqrt.pop %v4131
    %v4134 = vrsqrt.pop %v4132
    %v4135 = vmul.f32 %v4119, %v4133
    %v4136 = vmul.f32 %v4120, %v4134
    %v4138 = vlaneseq
    %v4139 = vshrl.u32 %v4138, 7
    %v4140 = vsub.s32 0, %v4139
    %v4141 = vrot.slane %v2169, %v4140
    %v4143 = vmul.f32 %v4135, %v4141
    %v4144 = vmul.f32 %v4136, %v4141
    %v4146 = vlaneseq
    %v4147 = vshrl.u32 %v4146, 7
    %v4148 = vsub.s32 0, %v4147
    %v4149 = vrot.slane %v2171, %v4148
    %v4151 = vadd.f32 %v4143, %v4149
    %v4152 = vadd.f32 %v4144, %v4149
    %v4154 = vsel %vm196, %v63, 0
    %4156 = vmatprep.subr.mxu0 0.0
    %4157 = vmatpush1.msra.mxu0 0.0
    %4158 = vmatprep.subr.mxu0 0.0
    %4159 = vmatpush1.msra.mxu0 0.0
    %4160 = vmatprep.subr.mxu0 0.0
    %4161 = vmatpush1.msra.mxu0 0.0
    %4162 = vmatprep.subr.mxu0 0.0
    %4163 = vmatpush1.msra.mxu0 0.0
    %4164 = vmatprep.subr.mxu0 0.0
    %4165 = vmatpush1.msra.mxu0 0.0
    %4166 = vmatprep.subr.mxu0 0.0
    %4167 = vmatpush1.msra.mxu0 0.0
    %4168 = vmatprep.subr.mxu0 0.0
    %4169 = vmatpush1.msra.mxu0 0.0
    %4170 = vmatprep.subr.mxu0 0.0
    %4171 = vmatpush1.msra.mxu0 0.0
    %4172 = vmatprep.subr.mxu0 0.0
    %4173 = vmatpush1.msra.mxu0 0.0
    %4174 = vmatprep.subr.mxu0 0.0
    %4175 = vmatpush1.msra.mxu0 0.0
    %4176 = vmatprep.subr.mxu0 0.0
    %4177 = vmatpush1.msra.mxu0 0.0
    %4178 = vmatprep.subr.mxu0 0.0
    %4179 = vmatpush1.msra.mxu0 0.0
    %4180 = vmatprep.subr.mxu0 0.0
    %4181 = vmatpush1.msra.mxu0 0.0
    %4182 = vmatprep.subr.mxu0 0.0
    %4183 = vmatpush1.msra.mxu0 0.0
    %4184 = vmatprep.subr.mxu0 0.0
    %4185 = vmatpush1.msra.mxu0 0.0
    %4186 = vmatprep.subr.mxu0 0.0
    %4187 = vmatpush1.msra.mxu0 %v4151
    %4188 = vmatprep.subr.mxu0 0.0
    %4189 = vmatpush2.msra.mxu0 0.0
    %4190 = vmatprep.subr.mxu0 0.0
    %4191 = vmatpush2.msra.mxu0 0.0
    %4192 = vmatprep.subr.mxu0 0.0
    %4193 = vmatpush2.msra.mxu0 0.0
    %4194 = vmatprep.subr.mxu0 0.0
    %4195 = vmatpush2.msra.mxu0 0.0
    %4196 = vmatprep.subr.mxu0 0.0
    %4197 = vmatpush2.msra.mxu0 0.0
    %4198 = vmatprep.subr.mxu0 0.0
    %4199 = vmatpush2.msra.mxu0 0.0
    %4200 = vmatprep.subr.mxu0 0.0
    %4201 = vmatpush2.msra.mxu0 0.0
    %4202 = vmatprep.subr.mxu0 0.0
    %4203 = vmatpush2.msra.mxu0 0.0
    %4204 = vmatprep.subr.mxu0 0.0
    %4205 = vmatpush2.msra.mxu0 0.0
    %4206 = vmatprep.subr.mxu0 0.0
    %4207 = vmatpush2.msra.mxu0 0.0
    %4208 = vmatprep.subr.mxu0 0.0
    %4209 = vmatpush2.msra.mxu0 0.0
    %4210 = vmatprep.subr.mxu0 0.0
    %4211 = vmatpush2.msra.mxu0 0.0
    %4212 = vmatprep.subr.mxu0 0.0
    %4213 = vmatpush2.msra.mxu0 0.0
    %4214 = vmatprep.subr.mxu0 0.0
    %4215 = vmatpush2.msra.mxu0 0.0
    %4216 = vmatprep.subr.mxu0 0.0
    %4217 = vmatpush2.msra.mxu0 0.0
    %4218 = vmatprep.subr.mxu0 0.0
    %4219 = vmatpush2.msra.mxu0 0.0
    %4220 = vmatprep.mubr.f32.mxu0 0.0
    %4221 = vmatmul.mubr.f32.gmra.mxu0 %v4154
    %v4222 = vpop.f32.mrf.mxu0
    %v4223 = vadd.f32 0.0, %v4222
    %v4224 = vpop.f32.mrf.mxu0
    %4225 = vdwg.mxu0
    %vm4226 = vcmask 57344
    %v4227 = vsel %vm4226, %v63, 0.0
    %4228 = vadd.xlane.f32.xlu0 %v4227
    %v4229 = vpop.xlane.xlu0 %4228
    %v4230 = vmax.f32 %v4229, 1e-09
    %v4231 = vrcp.pop %v4230
    %v4232 = vmul.f32 %v4223, %v4231
    %v4233 = vrot.slane %v63, 1
    %v4234 = vsel %vm196, %v4233, 0
    %4236 = vmatprep.subr.mxu0 0.0
    %4237 = vmatpush1.msra.mxu0 0.0
    %4238 = vmatprep.subr.mxu0 0.0
    %4239 = vmatpush1.msra.mxu0 0.0
    %4240 = vmatprep.subr.mxu0 0.0
    %4241 = vmatpush1.msra.mxu0 0.0
    %4242 = vmatprep.subr.mxu0 0.0
    %4243 = vmatpush1.msra.mxu0 0.0
    %4244 = vmatprep.subr.mxu0 0.0
    %4245 = vmatpush1.msra.mxu0 0.0
    %4246 = vmatprep.subr.mxu0 0.0
    %4247 = vmatpush1.msra.mxu0 0.0
    %4248 = vmatprep.subr.mxu0 0.0
    %4249 = vmatpush1.msra.mxu0 0.0
    %4250 = vmatprep.subr.mxu0 0.0
    %4251 = vmatpush1.msra.mxu0 0.0
    %4252 = vmatprep.subr.mxu0 0.0
    %4253 = vmatpush1.msra.mxu0 0.0
    %4254 = vmatprep.subr.mxu0 0.0
    %4255 = vmatpush1.msra.mxu0 0.0
    %4256 = vmatprep.subr.mxu0 0.0
    %4257 = vmatpush1.msra.mxu0 0.0
    %4258 = vmatprep.subr.mxu0 0.0
    %4259 = vmatpush1.msra.mxu0 0.0
    %4260 = vmatprep.subr.mxu0 0.0
    %4261 = vmatpush1.msra.mxu0 0.0
    %4262 = vmatprep.subr.mxu0 0.0
    %4263 = vmatpush1.msra.mxu0 0.0
    %4264 = vmatprep.subr.mxu0 0.0
    %4265 = vmatpush1.msra.mxu0 0.0
    %4266 = vmatprep.subr.mxu0 0.0
    %4267 = vmatpush1.msra.mxu0 %v4152
    %4268 = vmatprep.subr.mxu0 0.0
    %4269 = vmatpush2.msra.mxu0 0.0
    %4270 = vmatprep.subr.mxu0 0.0
    %4271 = vmatpush2.msra.mxu0 0.0
    %4272 = vmatprep.subr.mxu0 0.0
    %4273 = vmatpush2.msra.mxu0 0.0
    %4274 = vmatprep.subr.mxu0 0.0
    %4275 = vmatpush2.msra.mxu0 0.0
    %4276 = vmatprep.subr.mxu0 0.0
    %4277 = vmatpush2.msra.mxu0 0.0
    %4278 = vmatprep.subr.mxu0 0.0
    %4279 = vmatpush2.msra.mxu0 0.0
    %4280 = vmatprep.subr.mxu0 0.0
    %4281 = vmatpush2.msra.mxu0 0.0
    %4282 = vmatprep.subr.mxu0 0.0
    %4283 = vmatpush2.msra.mxu0 0.0
    %4284 = vmatprep.subr.mxu0 0.0
    %4285 = vmatpush2.msra.mxu0 0.0
    %4286 = vmatprep.subr.mxu0 0.0
    %4287 = vmatpush2.msra.mxu0 0.0
    %4288 = vmatprep.subr.mxu0 0.0
    %4289 = vmatpush2.msra.mxu0 0.0
    %4290 = vmatprep.subr.mxu0 0.0
    %4291 = vmatpush2.msra.mxu0 0.0
    %4292 = vmatprep.subr.mxu0 0.0
    %4293 = vmatpush2.msra.mxu0 0.0
    %4294 = vmatprep.subr.mxu0 0.0
    %4295 = vmatpush2.msra.mxu0 0.0
    %4296 = vmatprep.subr.mxu0 0.0
    %4297 = vmatpush2.msra.mxu0 0.0
    %4298 = vmatprep.subr.mxu0 0.0
    %4299 = vmatpush2.msra.mxu0 0.0
    %4300 = vmatprep.mubr.f32.mxu0 0.0
    %4301 = vmatmul.mubr.f32.gmra.mxu0 %v4234
    %v4302 = vpop.f32.mrf.mxu0
    %v4303 = vadd.f32 0.0, %v4302
    %v4304 = vpop.f32.mrf.mxu0
    %4305 = vdwg.mxu0
    %vm4306 = vcmask 58369
    %v4307 = vsel %vm4306, %v63, 0.0
    %4308 = vadd.xlane.f32.xlu0 %v4307
    %v4309 = vpop.xlane.xlu0 %4308
    %v4310 = vmax.f32 %v4309, 1e-09
    %v4311 = vrcp.pop %v4310
    %v4313 = vrot.slane %v4311, 1
    %v4315 = vmul.f32 %v4303, %v4313
    %v4317 = vrot.slane %v4315, 7
    %vm4319 = vcmask 1040384
    %v4320 = vsel %vm4319, %v4232, %v4317
    %v4321 = vld [vmem:[%s16] sm:$0xff]
    %v4322 = vld [vmem:[%s16 + $0x8] sm:$0xff]
    %v4323 = vld [vmem:[%s16 + $0x10] sm:$0xff]
    %v4324 = vld [vmem:[%s16 + $0x18] sm:$0xff]
    %v4325 = vld [vmem:[%s17] sm:$0x1]
    %v4326 = vpack.c.bf16 %v4320, %v4320
    %v4327 = vpack.c.bf16 %v4322, %v4321
    %v4328 = vpack.c.bf16 %v4324, %v4323
    %v4330 = vlaneseq
    %v4331 = vshrl.u32 %v4330, 7
    %v4332 = vsub.s32 0, %v4331
    %v4333 = vrot.slane %v4325, %v4332
    %v4336 = vsel %vm68, %v4326, 0
    %4338 = vmatprep.subr.bf16.mxu0 0
    %4339 = vmatpush1.bf16.msra.mxu0 0
    %4340 = vmatprep.subr.bf16.mxu0 0
    %4341 = vmatpush1.bf16.msra.mxu0 0
    %4342 = vmatprep.subr.bf16.mxu0 0
    %4343 = vmatpush1.bf16.msra.mxu0 0
    %4344 = vmatprep.subr.bf16.mxu0 0
    %4345 = vmatpush1.bf16.msra.mxu0 0
    %4346 = vmatprep.subr.bf16.mxu0 0
    %4347 = vmatpush1.bf16.msra.mxu0 0
    %4348 = vmatprep.subr.bf16.mxu0 0
    %4349 = vmatpush1.bf16.msra.mxu0 0
    %4350 = vmatprep.subr.bf16.mxu0 0
    %4351 = vmatpush1.bf16.msra.mxu0 %v4328
    %4352 = vmatprep.subr.bf16.mxu0 0
    %4353 = vmatpush1.bf16.msra.mxu0 %v4327
    %4354 = vmatprep.subr.bf16.mxu0 0
    %4355 = vmatpush2.bf16.msra.mxu0 0
    %4356 = vmatprep.subr.bf16.mxu0 0
    %4357 = vmatpush2.bf16.msra.mxu0 0
    %4358 = vmatprep.subr.bf16.mxu0 0
    %4359 = vmatpush2.bf16.msra.mxu0 0
    %4360 = vmatprep.subr.bf16.mxu0 0
    %4361 = vmatpush2.bf16.msra.mxu0 0
    %4362 = vmatprep.subr.bf16.mxu0 0
    %4363 = vmatpush2.bf16.msra.mxu0 0
    %4364 = vmatprep.subr.bf16.mxu0 0
    %4365 = vmatpush2.bf16.msra.mxu0 0
    %4366 = vmatprep.subr.bf16.mxu0 0
    %4367 = vmatpush2.bf16.msra.mxu0 0
    %4368 = vmatprep.subr.bf16.mxu0 0
    %4369 = vmatpush2.bf16.msra.mxu0 0
    %4370 = vmatprep.mubr.bf16.mxu0 0
    %4371 = vmatmul.mubr.bf16.gmra.mxu0 %v4336
    %v4372 = vpop.f32.mrf.mxu0
    %v4373 = vadd.f32 %v4333, %v4372
    %v4374 = vpop.f32.mrf.mxu0
    %v4375 = vpop.f32.mrf.mxu0
    %v4376 = vpop.f32.mrf.mxu0
    %4377 = vdwg.mxu0
    %vm4378 = vcmask 9216
    %4379 = vst.msk [vmem:[#allocation2] sm:$0x3] %vm4378, %v4373
    // Predicated region
    $region74: #{one_to_one_forward.1} parent=1 // pred_check
      _
    $region75: #{one_to_one_forward.1} parent=1 // pred_check_branch
      %4381 = sbr.rel (0) target = $region77
    $region76: #{one_to_one_forward.1} parent=1 // pred_region
      %s4383 = ssub.s32 32, 32
      %4384 = vsyncadd [#allocation3], %s4383
      %s4386 = sshll.u32 [#allocation2], 4
      %s4387 = int_to_ptr.vmem [resolvable:$true] %s4386
      %4389 = dma.vmem_to_hbm [thread:$0]  %s4387, 32, %s18, [#allocation3]
    $region77: #{one_to_one_forward.1} parent=1 // pred_fallthru
      _
    // Predicated region
    $region78: #{one_to_one_forward.1} parent=1 // pred_check
      _
    $region79: #{one_to_one_forward.1} parent=1 // pred_check_branch
      %4391 = sbr.rel (0) target = $region81
    $region80: #{one_to_one_forward.1} parent=1 // pred_region
      %4392 = dma.done [#allocation3], 32
    $region81: #{one_to_one_forward.1} parent=1 // pred_fallthru
      _
    %4393 = vsyncpa [#allocation3], 1

</llo_original>
